<compile_context>
chip_gen: v7x
topology: tpu7x:2x2x1
jax: 0.10.0
libtpu: 0.0.40
codegen_flags: <defaults>
</compile_context>

<pallas_src>
import jax
import jax.numpy as jnp
from jax.experimental import pallas as pl
from jax.experimental.pallas import tpu as pltpu

BF16 = jnp.bfloat16
F32 = jnp.float32


def _bdot(a, b):
    """MXU matmul: bf16 operands, f32 accumulation."""
    return jnp.dot(a.astype(BF16), b.astype(BF16), preferred_element_type=F32)


def _bdot_nt(a, b):
    """a @ b.T by contracting the last dims -- no transpose materialized."""
    return jax.lax.dot_general(
        a.astype(BF16), b.astype(BF16),
        dimension_numbers=(((1,), (1,)), ((), ())),
        preferred_element_type=F32)


def make_fft_block_call(B, T, d_model, n_head, d_k, d_v, d_inner, kernel_size,
                        return_attn=False, attn_dtype=BF16,
                        single_buffer_weights=True):
    H = d_model
    k1, k2 = kernel_size
    pad1 = (k1 - 1) // 2
    pad2 = (k2 - 1) // 2
    d_qkv = n_head * (2 * d_k + d_v)
    eps = 1e-5

    def kernel(*refs):
        (x_ref, wqkv_ref, bqkv_ref, wfc_ref, bfc_ref, ln1g_ref, ln1b_ref,
         w1_ref, b1_ref, w2_ref, b2_ref, ln2g_ref, ln2b_ref,
         kmask_ref, rmask_ref, fg_ref, fb_ref) = refs[:17]
        out_ref = refs[17]
        idx = 18
        attn_ref = None
        if return_attn:
            attn_ref = refs[idx]
            idx += 1
        scratch = refs[idx:]
        si = 0
        xp_s = hp_s = None
        if pad1 > 0:
            xp_s = scratch[si]; si += 1
        if pad2 > 0:
            hp_s = scratch[si]; si += 1

        x = x_ref[0]                                   # (T, H)  f32
        kmask = kmask_ref[0]                           # (1, T)  1.0 == masked key
        rmask = rmask_ref[0]                           # (T, 1)  1.0 == padded row

        # ---- multi-head self-attention (fused QKV; 1/sqrt(d_k) folded into wq) ----
        qkv = _bdot(x, wqkv_ref[...]) + bqkv_ref[...]  # (T, d_qkv) f32
        q = qkv[:, :n_head * d_k]
        k = qkv[:, n_head * d_k:2 * n_head * d_k]
        v = qkv[:, 2 * n_head * d_k:]

        heads = []
        for h in range(n_head):
            qh = q[:, h * d_k:(h + 1) * d_k]
            kh = k[:, h * d_k:(h + 1) * d_k]
            vh = v[:, h * d_v:(h + 1) * d_v]
            s = _bdot_nt(qh, kh)                       # (T, T) f32, q @ k^T
            # large finite negative (not -inf) so all-masked rows don't NaN
            s = jnp.where(kmask > 0.5, -1e30, s)
            m = jnp.max(s, axis=-1, keepdims=True)
            e = jnp.exp(s - m)
            p = e * pl.reciprocal(jnp.sum(e, axis=-1, keepdims=True), approx=True)
            if return_attn:
                attn_ref[0, h] = p.astype(attn_ref.dtype)   # bf16 writeback
            heads.append(_bdot(p, vh))                 # (T, d_v) f32
        # lane-axis head concat -> single deep output-projection contraction
        ctx = heads[0] if n_head == 1 else jnp.concatenate(heads, axis=-1)
        o = _bdot(ctx, wfc_ref[...]) + bfc_ref[...] + x   # fc + residual (dropout == identity)

        # LayerNorm 1 (two-pass: safer than E[x^2]-E[x]^2 under large means)
        mu = jnp.sum(o, axis=-1, keepdims=True) * (1.0 / H)
        c = o - mu
        var = jnp.sum(c * c, axis=-1, keepdims=True) * (1.0 / H)
        o = c * jax.lax.rsqrt(var + eps) * ln1g_ref[...] + ln1b_ref[...]
        o = jnp.where(rmask > 0.5, 0.0, o)             # masked_fill(mask, 0)

        # ---- position-wise FFN: Conv1d(k1) -> ReLU -> Conv1d(k2) -----------------
        resid = o
        if pad1 > 0:
            # Borders re-zeroed every step on purpose (megacore-safe: scratch is
            # per-core; only core 0 ever sees program_id(0) == 0).
            z = jnp.zeros((pad1, H), F32)
            xp_s[:pad1, :] = z
            xp_s[pad1 + T:, :] = z
            xp_s[pad1:pad1 + T, :] = o
            h1 = _bdot(xp_s[0:T, :], w1_ref[0])
            for j in range(1, k1):
                h1 = h1 + _bdot(xp_s[j:j + T, :], w1_ref[j])
        else:
            h1 = _bdot(o, w1_ref[0])
        h1 = jnp.maximum(h1 + b1_ref[...], 0.0)

        if pad2 > 0:
            z2 = jnp.zeros((pad2, d_inner), F32)
            hp_s[:pad2, :] = z2
            hp_s[pad2 + T:, :] = z2
            hp_s[pad2:pad2 + T, :] = h1
            o2 = _bdot(hp_s[0:T, :], w2_ref[0])
            for j in range(1, k2):
                o2 = o2 + _bdot(hp_s[j:j + T, :], w2_ref[j])
        else:
            o2 = _bdot(h1, w2_ref[0])
        o2 = o2 + b2_ref[...] + resid                  # conv bias + residual

        # LayerNorm 2 (two-pass)
        mu2 = jnp.sum(o2, axis=-1, keepdims=True) * (1.0 / H)
        c2 = o2 - mu2
        var2 = jnp.sum(c2 * c2, axis=-1, keepdims=True) * (1.0 / H)
        o2 = c2 * jax.lax.rsqrt(var2 + eps) * ln2g_ref[...] + ln2b_ref[...]

        # ---- FiLM (host precomputed: fg = s_gamma*gammas + 1, fb = s_beta*betas) ----
        o2 = fg_ref[0] * o2 + fb_ref[0]
        o2 = jnp.where(rmask > 0.5, 0.0, o2)
        out_ref[0] = o2

    def const_spec(shape):
        idx_map = lambda b, _n=len(shape): (0,) * _n
        if single_buffer_weights:
            # grid-invariant params: no double-buffering (saves weight VMEM)
            return pl.BlockSpec(shape, idx_map, pipeline_mode=pl.Buffered(1))
        return pl.BlockSpec(shape, idx_map)

    in_specs = [
        pl.BlockSpec((1, T, H), lambda b: (b, 0, 0)),            # x
        const_spec((H, d_qkv)), const_spec((1, d_qkv)),          # fused QKV weight (bf16) / bias
        const_spec((n_head * d_v, H)), const_spec((1, H)),       # fc weight (bf16) / bias
        const_spec((1, H)), const_spec((1, H)),                  # ln1 gamma/beta
        const_spec((k1, H, d_inner)), const_spec((1, d_inner)),  # conv1 taps (bf16) / bias
        const_spec((k2, d_inner, H)), const_spec((1, H)),        # conv2 taps (bf16) / bias
        const_spec((1, H)), const_spec((1, H)),                  # ln2 gamma/beta
        pl.BlockSpec((1, 1, T), lambda b: (b, 0, 0)),            # key-pad mask (lane dense)
        pl.BlockSpec((1, T, 1), lambda b: (b, 0, 0)),            # row-pad mask
        pl.BlockSpec((1, 1, H), lambda b: (b, 0, 0)),            # FiLM gamma (pre-scaled, +1)
        pl.BlockSpec((1, 1, H), lambda b: (b, 0, 0)),            # FiLM beta (pre-scaled)
    ]
    out_specs = [pl.BlockSpec((1, T, H), lambda b: (b, 0, 0))]
    out_shape = [jax.ShapeDtypeStruct((B, T, H), F32)]
    if return_attn:
        out_specs.append(pl.BlockSpec((1, n_head, T, T), lambda b: (b, 0, 0, 0)))
        out_shape.append(jax.ShapeDtypeStruct((B, n_head, T, T), attn_dtype))

    scratch_shapes = []
    if pad1 > 0:
        scratch_shapes.append(pltpu.VMEM((T + 2 * pad1, H), F32))
    if pad2 > 0:
        scratch_shapes.append(pltpu.VMEM((T + 2 * pad2, d_inner), F32))

    # Advisory cost estimate so XLA schedules surrounding ops to overlap.
    flops = 2 * B * (T * H * d_qkv
                     + n_head * T * T * (d_k + d_v)
                     + T * (n_head * d_v) * H
                     + k1 * T * H * d_inner
                     + k2 * T * d_inner * H)
    transcendentals = B * (n_head * T * T + 4 * T)
    attn_bytes = jnp.dtype(attn_dtype).itemsize * B * n_head * T * T if return_attn else 0
    bytes_accessed = (
        2 * 4 * B * T * H
        + 2 * (H * d_qkv + n_head * d_v * H + k1 * H * d_inner + k2 * d_inner * H)
        + 4 * (d_qkv + 6 * H + d_inner)
        + 4 * B * (2 * T + 2 * H)
        + attn_bytes)

    return pl.pallas_call(
        kernel,
        grid=(B,),
        in_specs=in_specs,
        out_specs=tuple(out_specs) if return_attn else out_specs[0],
        out_shape=tuple(out_shape) if return_attn else out_shape[0],
        scratch_shapes=scratch_shapes,
        compiler_params=pltpu.CompilerParams(
            dimension_semantics=("parallel",),
            vmem_limit_bytes=48 * 1024 * 1024),
        cost_estimate=pl.CostEstimate(
            flops=int(flops),
            transcendentals=int(transcendentals),
            bytes_accessed=int(bytes_accessed)),
    )


def fft_block_forward(params, x, gammas, betas, pad_mask_bool,
                      n_head, d_k, d_v, d_inner, kernel_size,
                      return_attn=False, attn_dtype=BF16):
    """FFTBlock forward. slf_attn_mask is derived in-kernel from the key-padding
    mask (standard FastSpeech usage: slf_attn_mask = mask[:, None, :])."""
    # TODO(synk): arbitrary (B,T,T) slf_attn_mask (e.g. causal) would need a full-mask path.
    B, T, H = x.shape
    inv_temp = 1.0 / (float(d_k) ** 0.5)
    # Fold softmax temperature into the Q projection, fuse Q|K|V, bf16 weights.
    wqkv = jnp.concatenate([params["wq"] * inv_temp, params["wk"], params["wv"]],
                           axis=1).astype(BF16)
    bqkv = jnp.concatenate([params["bq"] * inv_temp, params["bk"], params["bv"]],
                           axis=1).astype(F32)
    wfc = params["wfc"].astype(BF16)                               # (n_head*d_v, H)
    w1 = params["w1"].astype(BF16)
    w2 = params["w2"].astype(BF16)
    film_g = params["s_gamma"][0, 0] * gammas.astype(F32) + 1.0    # (B,1,H)
    film_b = params["s_beta"][0, 0] * betas.astype(F32)            # (B,1,H)
    pm = pad_mask_bool.astype(F32)
    kmask = pm[:, None, :]                                         # (B,1,T)
    rmask = pm[:, :, None]                                         # (B,T,1)

    args = (x.astype(F32), wqkv, bqkv, wfc, params["bfc"].astype(F32),
            params["ln1_g"].astype(F32), params["ln1_b"].astype(F32),
            w1, params["b1"].astype(F32), w2, params["b2"].astype(F32),
            params["ln2_g"].astype(F32), params["ln2_b"].astype(F32),
            kmask, rmask, film_g, film_b)

    def build_and_run(single_buffer):
        call = make_fft_block_call(B, T, H, n_head, d_k, d_v, d_inner, kernel_size,
                                   return_attn=return_attn, attn_dtype=attn_dtype,
                                   single_buffer_weights=single_buffer)
        return call(*args)

    try:
        result = build_and_run(True)
    except Exception:
        # Fallback for jax versions without BlockSpec.pipeline_mode / Buffered(1);
        # identical semantics, weights just stay double-buffered.
        result = build_and_run(False)

    if return_attn:
        out, attn = result
        # PyTorch returns attn with shape (n_head * B, T, T), head-major.
        attn_torch = jnp.transpose(attn, (1, 0, 2, 3)).reshape(n_head * B, T, T)
        return out, attn_torch
    return result, None


# ----------------------------- pure-JAX reference -----------------------------
def ref_forward(params, x, gammas, betas, pad_mask_bool, attn_mask_bool,
                n_head, d_k, d_v, d_inner, kernel_size):
    P = jax.lax.Precision.HIGHEST
    B, T, H = x.shape
    k1, k2 = kernel_size
    pad1, pad2 = (k1 - 1) // 2, (k2 - 1) // 2
    temp = float(d_k) ** 0.5
    eps = 1e-5

    def ln(y, g, b):
        mu = jnp.mean(y, axis=-1, keepdims=True)
        var = jnp.mean((y - mu) ** 2, axis=-1, keepdims=True)
        return (y - mu) * jax.lax.rsqrt(var + eps) * g + b

    q = (jnp.dot(x, params["wq"], precision=P) + params["bq"]).reshape(B, T, n_head, d_k).transpose(2, 0, 1, 3)
    k = (jnp.dot(x, params["wk"], precision=P) + params["bk"]).reshape(B, T, n_head, d_k).transpose(2, 0, 1, 3)
    v = (jnp.dot(x, params["wv"], precision=P) + params["bv"]).reshape(B, T, n_head, d_v).transpose(2, 0, 1, 3)
    s = jnp.einsum("hbqd,hbkd->hbqk", q, k, precision=P) / temp
    s = jnp.where(attn_mask_bool[None], -1e30, s)   # PyTorch uses -inf; identical for valid rows
    p = jax.nn.softmax(s, axis=-1)
    o = jnp.einsum("hbqk,hbkd->hbqd", p, v, precision=P).transpose(1, 2, 0, 3).reshape(B, T, n_head * d_v)
    o = jnp.dot(o, params["wfc"], precision=P) + params["bfc"] + x
    o = ln(o, params["ln1_g"], params["ln1_b"])
    o = jnp.where(pad_mask_bool[..., None], 0.0, o)

    resid = o
    xp = jnp.pad(o, ((0, 0), (pad1, pad1), (0, 0)))
    h1 = sum(jnp.dot(xp[:, j:j + T, :], params["w1"][j], precision=P) for j in range(k1)) + params["b1"]
    h1 = jnp.maximum(h1, 0.0)
    hp = jnp.pad(h1, ((0, 0), (pad2, pad2), (0, 0)))
    o2 = sum(jnp.dot(hp[:, j:j + T, :], params["w2"][j], precision=P) for j in range(k2)) + params["b2"]
    o2 = ln(o2 + resid, params["ln2_g"], params["ln2_b"])
    g = params["s_gamma"][0, 0] * gammas
    bb = params["s_beta"][0, 0] * betas
    o2 = (g + 1.0) * o2 + bb
    o2 = jnp.where(pad_mask_bool[..., None], 0.0, o2)
    return o2, p.reshape(n_head * B, T, T)


if __name__ == "__main__":
    # Small, module-consistent shapes.
    B, T = 2, 16
    d_model, n_head, d_k, d_v, d_inner = 32, 2, 16, 16, 64
    kernel_size = (3, 1)
    H = d_model

    key = jax.random.PRNGKey(0)
    ks = jax.random.split(key, 20)
    n = lambda k, s, sc=0.1: (sc * jax.random.normal(k, s)).astype(F32)

    params = {
        "wq": n(ks[0], (H, n_head * d_k)), "bq": n(ks[1], (1, n_head * d_k)),
        "wk": n(ks[2], (H, n_head * d_k)), "bk": n(ks[3], (1, n_head * d_k)),
        "wv": n(ks[4], (H, n_head * d_v)), "bv": n(ks[5], (1, n_head * d_v)),
        "wfc": n(ks[6], (n_head * d_v, H)), "bfc": n(ks[7], (1, H)),
        "ln1_g": 1.0 + n(ks[15], (1, H)), "ln1_b": n(ks[16], (1, H)),
        # conv taps already transposed to (K, C_in, C_out)
        "w1": n(ks[8], (kernel_size[0], H, d_inner)), "b1": n(ks[9], (1, d_inner)),
        "w2": n(ks[10], (kernel_size[1], d_inner, H)), "b2": n(ks[11], (1, H)),
        "ln2_g": 1.0 + n(ks[17], (1, H)), "ln2_b": n(ks[18], (1, H)),
        "s_gamma": jnp.full((1, 1), 1.3, F32), "s_beta": jnp.full((1, 1), 0.7, F32),
    }

    x = jax.random.normal(ks[12], (B, T, H), F32)
    gammas = 0.5 * jax.random.normal(ks[13], (B, 1, H), F32)
    betas = 0.5 * jax.random.normal(ks[14], (B, 1, H), F32)
    # padding mask: batch 0 unpadded, batch 1 has last 3 positions padded.
    pad_mask = jnp.array([[0] * T, [0] * (T - 3) + [1] * 3], dtype=bool)
    attn_mask = jnp.broadcast_to(pad_mask[:, None, :], (B, T, T))

    out, attn = fft_block_forward(params, x, gammas, betas, pad_mask,
                                  n_head, d_k, d_v, d_inner, kernel_size,
                                  return_attn=True)
    out = jax.block_until_ready(out)
    attn = jax.block_until_ready(attn)

    # production default path: no attention-probability writeback
    out_noattn, _ = fft_block_forward(params, x, gammas, betas, pad_mask,
                                      n_head, d_k, d_v, d_inner, kernel_size,
                                      return_attn=False)
    out_noattn = jax.block_until_ready(out_noattn)

    ref_out, ref_attn = ref_forward(params, x, gammas, betas, pad_mask, attn_mask,
                                    n_head, d_k, d_v, d_inner, kernel_size)

    # Tolerances reflect native-bf16 MXU operands (f32 accumulate) vs an f32
    # HIGHEST-precision reference, plus approx EUP reciprocal in softmax and the
    # bf16 attention-probability output.
    assert jnp.allclose(out, ref_out, rtol=2e-2, atol=2e-2), "enc_output mismatch"
    assert jnp.allclose(out_noattn, ref_out, rtol=2e-2, atol=2e-2), "enc_output (no-attn) mismatch"
    assert jnp.allclose(attn.astype(F32), ref_attn, rtol=2e-2, atol=1e-2), "attn mismatch"
    print("KERNEL_OK")
</pallas_src>

<mosaic_0001>
module attributes {stable_mosaic.version = 11 : i64} {
  func.func @kernel(%arg0: i32, %arg1: memref<1x16x32xf32, #tpu.memory_space<vmem>>, %arg2: memref<32x96xbf16, #tpu.memory_space<vmem>>, %arg3: memref<1x96xf32, #tpu.memory_space<vmem>>, %arg4: memref<32x32xbf16, #tpu.memory_space<vmem>>, %arg5: memref<1x32xf32, #tpu.memory_space<vmem>>, %arg6: memref<1x32xf32, #tpu.memory_space<vmem>>, %arg7: memref<1x32xf32, #tpu.memory_space<vmem>>, %arg8: memref<3x32x64xbf16, #tpu.memory_space<vmem>>, %arg9: memref<1x64xf32, #tpu.memory_space<vmem>>, %arg10: memref<1x64x32xbf16, #tpu.memory_space<vmem>>, %arg11: memref<1x32xf32, #tpu.memory_space<vmem>>, %arg12: memref<1x32xf32, #tpu.memory_space<vmem>>, %arg13: memref<1x32xf32, #tpu.memory_space<vmem>>, %arg14: memref<1x1x16xf32, #tpu.memory_space<vmem>>, %arg15: memref<1x16x1xf32, #tpu.memory_space<vmem>>, %arg16: memref<1x1x32xf32, #tpu.memory_space<vmem>>, %arg17: memref<1x1x32xf32, #tpu.memory_space<vmem>>, %arg18: memref<1x16x32xf32, #tpu.memory_space<vmem>>, %arg19: memref<1x2x16x16xbf16, #tpu.memory_space<vmem>>, %arg20: memref<18x32xf32, #tpu.memory_space<vmem>>) attributes {dimension_semantics = [#tpu.dimension_semantics<parallel>], iteration_bounds = array<i64: 2>, scalar_prefetch = 0 : i64, scratch_operands = 1 : i64, tpu.core_type = #tpu.core_type<tc>, window_params = [{transform_indices = @transform_0, window_bounds = array<i64: 1, 16, 32>}, {pipeline_mode = #tpu.pipeline_mode<synchronous>, transform_indices = @transform_1, window_bounds = array<i64: 32, 96>}, {pipeline_mode = #tpu.pipeline_mode<synchronous>, transform_indices = @transform_2, window_bounds = array<i64: 1, 96>}, {pipeline_mode = #tpu.pipeline_mode<synchronous>, transform_indices = @transform_3, window_bounds = array<i64: 32, 32>}, {pipeline_mode = #tpu.pipeline_mode<synchronous>, transform_indices = @transform_4, window_bounds = array<i64: 1, 32>}, {pipeline_mode = #tpu.pipeline_mode<synchronous>, transform_indices = @transform_5, window_bounds = array<i64: 1, 32>}, {pipeline_mode = #tpu.pipeline_mode<synchronous>, transform_indices = @transform_6, window_bounds = array<i64: 1, 32>}, {pipeline_mode = #tpu.pipeline_mode<synchronous>, transform_indices = @transform_7, window_bounds = array<i64: 3, 32, 64>}, {pipeline_mode = #tpu.pipeline_mode<synchronous>, transform_indices = @transform_8, window_bounds = array<i64: 1, 64>}, {pipeline_mode = #tpu.pipeline_mode<synchronous>, transform_indices = @transform_9, window_bounds = array<i64: 1, 64, 32>}, {pipeline_mode = #tpu.pipeline_mode<synchronous>, transform_indices = @transform_10, window_bounds = array<i64: 1, 32>}, {pipeline_mode = #tpu.pipeline_mode<synchronous>, transform_indices = @transform_11, window_bounds = array<i64: 1, 32>}, {pipeline_mode = #tpu.pipeline_mode<synchronous>, transform_indices = @transform_12, window_bounds = array<i64: 1, 32>}, {transform_indices = @transform_13, window_bounds = array<i64: 1, 1, 16>}, {transform_indices = @transform_14, window_bounds = array<i64: 1, 16, 1>}, {transform_indices = @transform_15, window_bounds = array<i64: 1, 1, 32>}, {transform_indices = @transform_16, window_bounds = array<i64: 1, 1, 32>}, {transform_indices = @transform_17, window_bounds = array<i64: 1, 16, 32>}, {transform_indices = @transform_18, window_bounds = array<i64: 1, 2, 16, 16>}]} {
    %c0 = arith.constant 0 : index
    %c0_0 = arith.constant 0 : index
    %c0_1 = arith.constant 0 : index
    %0 = vector.load %arg1[%c0, %c0_0, %c0_1] : memref<1x16x32xf32, #tpu.memory_space<vmem>>, vector<1x16x32xf32>
    %1 = vector.shape_cast %0 : vector<1x16x32xf32> to vector<16x32xf32>
    %c0_2 = arith.constant 0 : index
    %c0_3 = arith.constant 0 : index
    %c0_4 = arith.constant 0 : index
    %2 = vector.load %arg14[%c0_2, %c0_3, %c0_4] : memref<1x1x16xf32, #tpu.memory_space<vmem>>, vector<1x1x16xf32>
    %3 = vector.shape_cast %2 : vector<1x1x16xf32> to vector<1x16xf32>
    %c0_5 = arith.constant 0 : index
    %c0_6 = arith.constant 0 : index
    %c0_7 = arith.constant 0 : index
    %4 = vector.load %arg15[%c0_5, %c0_6, %c0_7] : memref<1x16x1xf32, #tpu.memory_space<vmem>>, vector<1x16x1xf32>
    %5 = vector.shape_cast %4 : vector<1x16x1xf32> to vector<16x1xf32>
    %c0_8 = arith.constant 0 : index
    %c0_9 = arith.constant 0 : index
    %6 = vector.load %arg2[%c0_8, %c0_9] : memref<32x96xbf16, #tpu.memory_space<vmem>>, vector<32x96xbf16>
    %7 = arith.truncf %1 : vector<16x32xf32> to vector<16x32xbf16>
    %cst = arith.constant dense<0.000000e+00> : vector<16x96xf32>
    %8 = tpu.matmul %7, %6, %cst {dimension_numbers = #tpu.dot_dimension_numbers<[1], [0], [0], [1], [0, 0, 1, 1], [], []>} : vector<16x32xbf16>, vector<32x96xbf16>, vector<16x96xf32> -> vector<16x96xf32>
    %c0_10 = arith.constant 0 : index
    %c0_11 = arith.constant 0 : index
    %9 = vector.load %arg3[%c0_10, %c0_11] : memref<1x96xf32, #tpu.memory_space<vmem>>, vector<1x96xf32>
    %10 = vector.broadcast %9 : vector<1x96xf32> to vector<16x96xf32>
    %11 = arith.addf %8, %10 : vector<16x96xf32>
    %12 = vector.extract_strided_slice %11 {offsets = [0, 0], sizes = [16, 32], strides = [1, 1]} : vector<16x96xf32> to vector<16x32xf32>
    %13 = vector.extract_strided_slice %11 {offsets = [0, 32], sizes = [16, 32], strides = [1, 1]} : vector<16x96xf32> to vector<16x32xf32>
    %14 = vector.extract_strided_slice %11 {offsets = [0, 64], sizes = [16, 32], strides = [1, 1]} : vector<16x96xf32> to vector<16x32xf32>
    %15 = vector.extract_strided_slice %12 {offsets = [0, 0], sizes = [16, 16], strides = [1, 1]} : vector<16x32xf32> to vector<16x16xf32>
    %16 = vector.extract_strided_slice %13 {offsets = [0, 0], sizes = [16, 16], strides = [1, 1]} : vector<16x32xf32> to vector<16x16xf32>
    %17 = vector.extract_strided_slice %14 {offsets = [0, 0], sizes = [16, 16], strides = [1, 1]} : vector<16x32xf32> to vector<16x16xf32>
    %18 = arith.truncf %15 : vector<16x16xf32> to vector<16x16xbf16>
    %19 = arith.truncf %16 : vector<16x16xf32> to vector<16x16xbf16>
    %cst_12 = arith.constant dense<0.000000e+00> : vector<16x16xf32>
    %20 = tpu.matmul %18, %19, %cst_12 {dimension_numbers = #tpu.dot_dimension_numbers<[1], [1], [0], [0], [0, 0, 1, 0], [], []>} : vector<16x16xbf16>, vector<16x16xbf16>, vector<16x16xf32> -> vector<16x16xf32>
    %cst_13 = arith.constant 5.000000e-01 : f32
    %21 = vector.broadcast %cst_13 : f32 to vector<1x16xf32>
    %22 = arith.cmpf ogt, %3, %21 : vector<1x16xf32>
    %cst_14 = arith.constant -1.000000e+30 : f32
    %23 = vector.shape_cast %22 : vector<1x16xi1> to vector<1x16xi1>
    %24 = vector.broadcast %23 : vector<1x16xi1> to vector<16x16xi1>
    %25 = vector.broadcast %cst_14 : f32 to vector<16x16xf32>
    %26 = arith.select %24, %25, %20 : vector<16x16xi1>, vector<16x16xf32>
    %cst_15 = arith.constant dense<0xFF800000> : vector<16xf32>
    %27 = vector.multi_reduction <maximumf>, %26, %cst_15 [1] : vector<16x16xf32> to vector<16xf32>
    %28 = vector.shape_cast %27 : vector<16xf32> to vector<16x1xf32>
    %29 = vector.broadcast %28 : vector<16x1xf32> to vector<16x16xf32>
    %30 = arith.subf %26, %29 : vector<16x16xf32>
    %31 = math.exp %30 : vector<16x16xf32>
    %cst_16 = arith.constant dense<0.000000e+00> : vector<16xf32>
    %32 = vector.multi_reduction <add>, %31, %cst_16 [1] : vector<16x16xf32> to vector<16xf32>
    %33 = vector.shape_cast %32 : vector<16xf32> to vector<16x1xf32>
    %34 = tpu.reciprocal %33 {approx = true} : vector<16x1xf32> -> vector<16x1xf32>
    %35 = vector.broadcast %34 : vector<16x1xf32> to vector<16x16xf32>
    %36 = arith.mulf %31, %35 : vector<16x16xf32>
    %37 = arith.truncf %36 : vector<16x16xf32> to vector<16x16xbf16>
    %c0_17 = arith.constant 0 : index
    %c0_18 = arith.constant 0 : index
    %c0_19 = arith.constant 0 : index
    %c0_20 = arith.constant 0 : index
    %38 = vector.load %arg19[%c0_17, %c0_18, %c0_19, %c0_20] : memref<1x2x16x16xbf16, #tpu.memory_space<vmem>>, vector<1x1x16x16xbf16>
    %39 = vector.shape_cast %38 : vector<1x1x16x16xbf16> to vector<16x16xbf16>
    %40 = vector.shape_cast %37 : vector<16x16xbf16> to vector<1x1x16x16xbf16>
    tpu.vector_store %arg19[%c0_17, %c0_18, %c0_19, %c0_20], %40 {strides = array<i32>} : memref<1x2x16x16xbf16, #tpu.memory_space<vmem>>, vector<1x1x16x16xbf16>,
    %41 = arith.truncf %36 : vector<16x16xf32> to vector<16x16xbf16>
    %42 = arith.truncf %17 : vector<16x16xf32> to vector<16x16xbf16>
    %cst_21 = arith.constant dense<0.000000e+00> : vector<16x16xf32>
    %43 = tpu.matmul %41, %42, %cst_21 {dimension_numbers = #tpu.dot_dimension_numbers<[1], [0], [0], [1], [0, 0, 1, 1], [], []>} : vector<16x16xbf16>, vector<16x16xbf16>, vector<16x16xf32> -> vector<16x16xf32>
    %44 = vector.extract_strided_slice %12 {offsets = [0, 16], sizes = [16, 16], strides = [1, 1]} : vector<16x32xf32> to vector<16x16xf32>
    %45 = vector.extract_strided_slice %13 {offsets = [0, 16], sizes = [16, 16], strides = [1, 1]} : vector<16x32xf32> to vector<16x16xf32>
    %46 = vector.extract_strided_slice %14 {offsets = [0, 16], sizes = [16, 16], strides = [1, 1]} : vector<16x32xf32> to vector<16x16xf32>
    %47 = arith.truncf %44 : vector<16x16xf32> to vector<16x16xbf16>
    %48 = arith.truncf %45 : vector<16x16xf32> to vector<16x16xbf16>
    %cst_22 = arith.constant dense<0.000000e+00> : vector<16x16xf32>
    %49 = tpu.matmul %47, %48, %cst_22 {dimension_numbers = #tpu.dot_dimension_numbers<[1], [1], [0], [0], [0, 0, 1, 0], [], []>} : vector<16x16xbf16>, vector<16x16xbf16>, vector<16x16xf32> -> vector<16x16xf32>
    %cst_23 = arith.constant 5.000000e-01 : f32
    %50 = vector.broadcast %cst_23 : f32 to vector<1x16xf32>
    %51 = arith.cmpf ogt, %3, %50 : vector<1x16xf32>
    %cst_24 = arith.constant -1.000000e+30 : f32
    %52 = vector.shape_cast %51 : vector<1x16xi1> to vector<1x16xi1>
    %53 = vector.broadcast %52 : vector<1x16xi1> to vector<16x16xi1>
    %54 = vector.broadcast %cst_24 : f32 to vector<16x16xf32>
    %55 = arith.select %53, %54, %49 : vector<16x16xi1>, vector<16x16xf32>
    %cst_25 = arith.constant dense<0xFF800000> : vector<16xf32>
    %56 = vector.multi_reduction <maximumf>, %55, %cst_25 [1] : vector<16x16xf32> to vector<16xf32>
    %57 = vector.shape_cast %56 : vector<16xf32> to vector<16x1xf32>
    %58 = vector.broadcast %57 : vector<16x1xf32> to vector<16x16xf32>
    %59 = arith.subf %55, %58 : vector<16x16xf32>
    %60 = math.exp %59 : vector<16x16xf32>
    %cst_26 = arith.constant dense<0.000000e+00> : vector<16xf32>
    %61 = vector.multi_reduction <add>, %60, %cst_26 [1] : vector<16x16xf32> to vector<16xf32>
    %62 = vector.shape_cast %61 : vector<16xf32> to vector<16x1xf32>
    %63 = tpu.reciprocal %62 {approx = true} : vector<16x1xf32> -> vector<16x1xf32>
    %64 = vector.broadcast %63 : vector<16x1xf32> to vector<16x16xf32>
    %65 = arith.mulf %60, %64 : vector<16x16xf32>
    %66 = arith.truncf %65 : vector<16x16xf32> to vector<16x16xbf16>
    %c0_27 = arith.constant 0 : index
    %c1 = arith.constant 1 : index
    %c0_28 = arith.constant 0 : index
    %c0_29 = arith.constant 0 : index
    %67 = vector.load %arg19[%c0_27, %c1, %c0_28, %c0_29] : memref<1x2x16x16xbf16, #tpu.memory_space<vmem>>, vector<1x1x16x16xbf16>
    %68 = vector.shape_cast %67 : vector<1x1x16x16xbf16> to vector<16x16xbf16>
    %69 = vector.shape_cast %66 : vector<16x16xbf16> to vector<1x1x16x16xbf16>
    tpu.vector_store %arg19[%c0_27, %c1, %c0_28, %c0_29], %69 {strides = array<i32>} : memref<1x2x16x16xbf16, #tpu.memory_space<vmem>>, vector<1x1x16x16xbf16>,
    %70 = arith.truncf %65 : vector<16x16xf32> to vector<16x16xbf16>
    %71 = arith.truncf %46 : vector<16x16xf32> to vector<16x16xbf16>
    %cst_30 = arith.constant dense<0.000000e+00> : vector<16x16xf32>
    %72 = tpu.matmul %70, %71, %cst_30 {dimension_numbers = #tpu.dot_dimension_numbers<[1], [0], [0], [1], [0, 0, 1, 1], [], []>} : vector<16x16xbf16>, vector<16x16xbf16>, vector<16x16xf32> -> vector<16x16xf32>
    %73 = tpu.concatenate %43, %72 in 1 : vector<16x16xf32>, vector<16x16xf32> -> vector<16x32xf32>
    %c0_31 = arith.constant 0 : index
    %c0_32 = arith.constant 0 : index
    %74 = vector.load %arg4[%c0_31, %c0_32] : memref<32x32xbf16, #tpu.memory_space<vmem>>, vector<32x32xbf16>
    %75 = arith.truncf %73 : vector<16x32xf32> to vector<16x32xbf16>
    %cst_33 = arith.constant dense<0.000000e+00> : vector<16x32xf32>
    %76 = tpu.matmul %75, %74, %cst_33 {dimension_numbers = #tpu.dot_dimension_numbers<[1], [0], [0], [1], [0, 0, 1, 1], [], []>} : vector<16x32xbf16>, vector<32x32xbf16>, vector<16x32xf32> -> vector<16x32xf32>
    %c0_34 = arith.constant 0 : index
    %c0_35 = arith.constant 0 : index
    %77 = vector.load %arg5[%c0_34, %c0_35] : memref<1x32xf32, #tpu.memory_space<vmem>>, vector<1x32xf32>
    %78 = vector.broadcast %77 : vector<1x32xf32> to vector<16x32xf32>
    %79 = arith.addf %76, %78 : vector<16x32xf32>
    %80 = arith.addf %79, %1 : vector<16x32xf32>
    %cst_36 = arith.constant dense<0.000000e+00> : vector<16xf32>
    %81 = vector.multi_reduction <add>, %80, %cst_36 [1] : vector<16x32xf32> to vector<16xf32>
    %82 = vector.shape_cast %81 : vector<16xf32> to vector<16x1xf32>
    %cst_37 = arith.constant 3.125000e-02 : f32
    %83 = vector.broadcast %cst_37 : f32 to vector<16x1xf32>
    %84 = arith.mulf %82, %83 : vector<16x1xf32>
    %85 = vector.broadcast %84 : vector<16x1xf32> to vector<16x32xf32>
    %86 = arith.subf %80, %85 : vector<16x32xf32>
    %87 = arith.mulf %86, %86 : vector<16x32xf32>
    %cst_38 = arith.constant dense<0.000000e+00> : vector<16xf32>
    %88 = vector.multi_reduction <add>, %87, %cst_38 [1] : vector<16x32xf32> to vector<16xf32>
    %89 = vector.shape_cast %88 : vector<16xf32> to vector<16x1xf32>
    %cst_39 = arith.constant 3.125000e-02 : f32
    %90 = vector.broadcast %cst_39 : f32 to vector<16x1xf32>
    %91 = arith.mulf %89, %90 : vector<16x1xf32>
    %cst_40 = arith.constant 9.99999974E-6 : f32
    %92 = vector.broadcast %cst_40 : f32 to vector<16x1xf32>
    %93 = arith.addf %91, %92 : vector<16x1xf32>
    %94 = math.rsqrt %93 : vector<16x1xf32>
    %95 = vector.broadcast %94 : vector<16x1xf32> to vector<16x32xf32>
    %96 = arith.mulf %86, %95 : vector<16x32xf32>
    %c0_41 = arith.constant 0 : index
    %c0_42 = arith.constant 0 : index
    %97 = vector.load %arg6[%c0_41, %c0_42] : memref<1x32xf32, #tpu.memory_space<vmem>>, vector<1x32xf32>
    %98 = vector.broadcast %97 : vector<1x32xf32> to vector<16x32xf32>
    %99 = arith.mulf %96, %98 : vector<16x32xf32>
    %c0_43 = arith.constant 0 : index
    %c0_44 = arith.constant 0 : index
    %100 = vector.load %arg7[%c0_43, %c0_44] : memref<1x32xf32, #tpu.memory_space<vmem>>, vector<1x32xf32>
    %101 = vector.broadcast %100 : vector<1x32xf32> to vector<16x32xf32>
    %102 = arith.addf %99, %101 : vector<16x32xf32>
    %cst_45 = arith.constant 5.000000e-01 : f32
    %103 = vector.broadcast %cst_45 : f32 to vector<16x1xf32>
    %104 = arith.cmpf ogt, %5, %103 : vector<16x1xf32>
    %cst_46 = arith.constant 0.000000e+00 : f32
    %105 = vector.shape_cast %104 : vector<16x1xi1> to vector<16x1xi1>
    %106 = vector.broadcast %105 : vector<16x1xi1> to vector<16x32xi1>
    %107 = vector.broadcast %cst_46 : f32 to vector<16x32xf32>
    %108 = arith.select %106, %107, %102 : vector<16x32xi1>, vector<16x32xf32>
    %cst_47 = arith.constant 0.000000e+00 : f32
    %109 = vector.broadcast %cst_47 : f32 to vector<1x32xf32>
    %c0_48 = arith.constant 0 : index
    %c0_49 = arith.constant 0 : index
    %110 = vector.load %arg20[%c0_48, %c0_49] : memref<18x32xf32, #tpu.memory_space<vmem>>, vector<1x32xf32>
    tpu.vector_store %arg20[%c0_48, %c0_49], %109 {strides = array<i32>} : memref<18x32xf32, #tpu.memory_space<vmem>>, vector<1x32xf32>,
    %c17 = arith.constant 17 : index
    %c0_50 = arith.constant 0 : index
    %111 = vector.load %arg20[%c17, %c0_50] : memref<18x32xf32, #tpu.memory_space<vmem>>, vector<1x32xf32>
    tpu.vector_store %arg20[%c17, %c0_50], %109 {strides = array<i32>} : memref<18x32xf32, #tpu.memory_space<vmem>>, vector<1x32xf32>,
    %c1_51 = arith.constant 1 : index
    %c0_52 = arith.constant 0 : index
    %112 = vector.load %arg20[%c1_51, %c0_52] : memref<18x32xf32, #tpu.memory_space<vmem>>, vector<16x32xf32>
    tpu.vector_store %arg20[%c1_51, %c0_52], %108 {strides = array<i32>} : memref<18x32xf32, #tpu.memory_space<vmem>>, vector<16x32xf32>,
    %c0_53 = arith.constant 0 : index
    %c0_54 = arith.constant 0 : index
    %113 = vector.load %arg20[%c0_53, %c0_54] : memref<18x32xf32, #tpu.memory_space<vmem>>, vector<16x32xf32>
    %c0_55 = arith.constant 0 : index
    %c0_56 = arith.constant 0 : index
    %c0_57 = arith.constant 0 : index
    %114 = vector.load %arg8[%c0_55, %c0_56, %c0_57] : memref<3x32x64xbf16, #tpu.memory_space<vmem>>, vector<1x32x64xbf16>
    %115 = vector.shape_cast %114 : vector<1x32x64xbf16> to vector<32x64xbf16>
    %116 = arith.truncf %113 : vector<16x32xf32> to vector<16x32xbf16>
    %cst_58 = arith.constant dense<0.000000e+00> : vector<16x64xf32>
    %117 = tpu.matmul %116, %115, %cst_58 {dimension_numbers = #tpu.dot_dimension_numbers<[1], [0], [0], [1], [0, 0, 1, 1], [], []>} : vector<16x32xbf16>, vector<32x64xbf16>, vector<16x64xf32> -> vector<16x64xf32>
    %c1_59 = arith.constant 1 : index
    %c0_60 = arith.constant 0 : index
    %118 = vector.load %arg20[%c1_59, %c0_60] : memref<18x32xf32, #tpu.memory_space<vmem>>, vector<16x32xf32>
    %c1_61 = arith.constant 1 : index
    %c0_62 = arith.constant 0 : index
    %c0_63 = arith.constant 0 : index
    %119 = vector.load %arg8[%c1_61, %c0_62, %c0_63] : memref<3x32x64xbf16, #tpu.memory_space<vmem>>, vector<1x32x64xbf16>
    %120 = vector.shape_cast %119 : vector<1x32x64xbf16> to vector<32x64xbf16>
    %121 = arith.truncf %118 : vector<16x32xf32> to vector<16x32xbf16>
    %cst_64 = arith.constant dense<0.000000e+00> : vector<16x64xf32>
    %122 = tpu.matmul %121, %120, %cst_64 {dimension_numbers = #tpu.dot_dimension_numbers<[1], [0], [0], [1], [0, 0, 1, 1], [], []>} : vector<16x32xbf16>, vector<32x64xbf16>, vector<16x64xf32> -> vector<16x64xf32>
    %123 = arith.addf %117, %122 : vector<16x64xf32>
    %c2 = arith.constant 2 : index
    %c0_65 = arith.constant 0 : index
    %124 = vector.load %arg20[%c2, %c0_65] : memref<18x32xf32, #tpu.memory_space<vmem>>, vector<16x32xf32>
    %c2_66 = arith.constant 2 : index
    %c0_67 = arith.constant 0 : index
    %c0_68 = arith.constant 0 : index
    %125 = vector.load %arg8[%c2_66, %c0_67, %c0_68] : memref<3x32x64xbf16, #tpu.memory_space<vmem>>, vector<1x32x64xbf16>
    %126 = vector.shape_cast %125 : vector<1x32x64xbf16> to vector<32x64xbf16>
    %127 = arith.truncf %124 : vector<16x32xf32> to vector<16x32xbf16>
    %cst_69 = arith.constant dense<0.000000e+00> : vector<16x64xf32>
    %128 = tpu.matmul %127, %126, %cst_69 {dimension_numbers = #tpu.dot_dimension_numbers<[1], [0], [0], [1], [0, 0, 1, 1], [], []>} : vector<16x32xbf16>, vector<32x64xbf16>, vector<16x64xf32> -> vector<16x64xf32>
    %129 = arith.addf %123, %128 : vector<16x64xf32>
    %c0_70 = arith.constant 0 : index
    %c0_71 = arith.constant 0 : index
    %130 = vector.load %arg9[%c0_70, %c0_71] : memref<1x64xf32, #tpu.memory_space<vmem>>, vector<1x64xf32>
    %131 = vector.broadcast %130 : vector<1x64xf32> to vector<16x64xf32>
    %132 = arith.addf %129, %131 : vector<16x64xf32>
    %cst_72 = arith.constant 0.000000e+00 : f32
    %133 = vector.broadcast %cst_72 : f32 to vector<16x64xf32>
    %134 = arith.maximumf %132, %133 : vector<16x64xf32>
    %c0_73 = arith.constant 0 : index
    %c0_74 = arith.constant 0 : index
    %c0_75 = arith.constant 0 : index
    %135 = vector.load %arg10[%c0_73, %c0_74, %c0_75] : memref<1x64x32xbf16, #tpu.memory_space<vmem>>, vector<1x64x32xbf16>
    %136 = vector.shape_cast %135 : vector<1x64x32xbf16> to vector<64x32xbf16>
    %137 = arith.truncf %134 : vector<16x64xf32> to vector<16x64xbf16>
    %cst_76 = arith.constant dense<0.000000e+00> : vector<16x32xf32>
    %138 = tpu.matmul %137, %136, %cst_76 {dimension_numbers = #tpu.dot_dimension_numbers<[1], [0], [0], [1], [0, 0, 1, 1], [], []>} : vector<16x64xbf16>, vector<64x32xbf16>, vector<16x32xf32> -> vector<16x32xf32>
    %c0_77 = arith.constant 0 : index
    %c0_78 = arith.constant 0 : index
    %139 = vector.load %arg11[%c0_77, %c0_78] : memref<1x32xf32, #tpu.memory_space<vmem>>, vector<1x32xf32>
    %140 = vector.broadcast %139 : vector<1x32xf32> to vector<16x32xf32>
    %141 = arith.addf %138, %140 : vector<16x32xf32>
    %142 = arith.addf %141, %108 : vector<16x32xf32>
    %cst_79 = arith.constant dense<0.000000e+00> : vector<16xf32>
    %143 = vector.multi_reduction <add>, %142, %cst_79 [1] : vector<16x32xf32> to vector<16xf32>
    %144 = vector.shape_cast %143 : vector<16xf32> to vector<16x1xf32>
    %cst_80 = arith.constant 3.125000e-02 : f32
    %145 = vector.broadcast %cst_80 : f32 to vector<16x1xf32>
    %146 = arith.mulf %144, %145 : vector<16x1xf32>
    %147 = vector.broadcast %146 : vector<16x1xf32> to vector<16x32xf32>
    %148 = arith.subf %142, %147 : vector<16x32xf32>
    %149 = arith.mulf %148, %148 : vector<16x32xf32>
    %cst_81 = arith.constant dense<0.000000e+00> : vector<16xf32>
    %150 = vector.multi_reduction <add>, %149, %cst_81 [1] : vector<16x32xf32> to vector<16xf32>
    %151 = vector.shape_cast %150 : vector<16xf32> to vector<16x1xf32>
    %cst_82 = arith.constant 3.125000e-02 : f32
    %152 = vector.broadcast %cst_82 : f32 to vector<16x1xf32>
    %153 = arith.mulf %151, %152 : vector<16x1xf32>
    %cst_83 = arith.constant 9.99999974E-6 : f32
    %154 = vector.broadcast %cst_83 : f32 to vector<16x1xf32>
    %155 = arith.addf %153, %154 : vector<16x1xf32>
    %156 = math.rsqrt %155 : vector<16x1xf32>
    %157 = vector.broadcast %156 : vector<16x1xf32> to vector<16x32xf32>
    %158 = arith.mulf %148, %157 : vector<16x32xf32>
    %c0_84 = arith.constant 0 : index
    %c0_85 = arith.constant 0 : index
    %159 = vector.load %arg12[%c0_84, %c0_85] : memref<1x32xf32, #tpu.memory_space<vmem>>, vector<1x32xf32>
    %160 = vector.broadcast %159 : vector<1x32xf32> to vector<16x32xf32>
    %161 = arith.mulf %158, %160 : vector<16x32xf32>
    %c0_86 = arith.constant 0 : index
    %c0_87 = arith.constant 0 : index
    %162 = vector.load %arg13[%c0_86, %c0_87] : memref<1x32xf32, #tpu.memory_space<vmem>>, vector<1x32xf32>
    %163 = vector.broadcast %162 : vector<1x32xf32> to vector<16x32xf32>
    %164 = arith.addf %161, %163 : vector<16x32xf32>
    %c0_88 = arith.constant 0 : index
    %c0_89 = arith.constant 0 : index
    %c0_90 = arith.constant 0 : index
    %165 = vector.load %arg16[%c0_88, %c0_89, %c0_90] : memref<1x1x32xf32, #tpu.memory_space<vmem>>, vector<1x1x32xf32>
    %166 = vector.shape_cast %165 : vector<1x1x32xf32> to vector<1x32xf32>
    %167 = vector.broadcast %166 : vector<1x32xf32> to vector<16x32xf32>
    %168 = arith.mulf %167, %164 : vector<16x32xf32>
    %c0_91 = arith.constant 0 : index
    %c0_92 = arith.constant 0 : index
    %c0_93 = arith.constant 0 : index
    %169 = vector.load %arg17[%c0_91, %c0_92, %c0_93] : memref<1x1x32xf32, #tpu.memory_space<vmem>>, vector<1x1x32xf32>
    %170 = vector.shape_cast %169 : vector<1x1x32xf32> to vector<1x32xf32>
    %171 = vector.broadcast %170 : vector<1x32xf32> to vector<16x32xf32>
    %172 = arith.addf %168, %171 : vector<16x32xf32>
    %cst_94 = arith.constant 5.000000e-01 : f32
    %173 = vector.broadcast %cst_94 : f32 to vector<16x1xf32>
    %174 = arith.cmpf ogt, %5, %173 : vector<16x1xf32>
    %cst_95 = arith.constant 0.000000e+00 : f32
    %175 = vector.shape_cast %174 : vector<16x1xi1> to vector<16x1xi1>
    %176 = vector.broadcast %175 : vector<16x1xi1> to vector<16x32xi1>
    %177 = vector.broadcast %cst_95 : f32 to vector<16x32xf32>
    %178 = arith.select %176, %177, %172 : vector<16x32xi1>, vector<16x32xf32>
    %c0_96 = arith.constant 0 : index
    %c0_97 = arith.constant 0 : index
    %c0_98 = arith.constant 0 : index
    %179 = vector.load %arg18[%c0_96, %c0_97, %c0_98] : memref<1x16x32xf32, #tpu.memory_space<vmem>>, vector<1x16x32xf32>
    %180 = vector.shape_cast %179 : vector<1x16x32xf32> to vector<16x32xf32>
    %181 = vector.shape_cast %178 : vector<16x32xf32> to vector<1x16x32xf32>
    tpu.vector_store %arg18[%c0_96, %c0_97, %c0_98], %181 {strides = array<i32>} : memref<1x16x32xf32, #tpu.memory_space<vmem>>, vector<1x16x32xf32>,
    return
  }
  func.func @transform_0(%arg0: i32) -> (i32, i32, i32) {
    %c0_i32 = arith.constant 0 : i32
    %c0_i32_0 = arith.constant 0 : i32
    %c0_i32_1 = arith.constant 0 : i32
    return %arg0, %c0_i32, %c0_i32_0 : i32, i32, i32
  }
  func.func @transform_1(%arg0: i32) -> (i32, i32) {
    %c0_i32 = arith.constant 0 : i32
    %c0_i32_0 = arith.constant 0 : i32
    %c0_i32_1 = arith.constant 0 : i32
    return %c0_i32, %c0_i32_0 : i32, i32
  }
  func.func @transform_2(%arg0: i32) -> (i32, i32) {
    %c0_i32 = arith.constant 0 : i32
    %c0_i32_0 = arith.constant 0 : i32
    %c0_i32_1 = arith.constant 0 : i32
    return %c0_i32, %c0_i32_0 : i32, i32
  }
  func.func @transform_3(%arg0: i32) -> (i32, i32) {
    %c0_i32 = arith.constant 0 : i32
    %c0_i32_0 = arith.constant 0 : i32
    %c0_i32_1 = arith.constant 0 : i32
    return %c0_i32, %c0_i32_0 : i32, i32
  }
  func.func @transform_4(%arg0: i32) -> (i32, i32) {
    %c0_i32 = arith.constant 0 : i32
    %c0_i32_0 = arith.constant 0 : i32
    %c0_i32_1 = arith.constant 0 : i32
    return %c0_i32, %c0_i32_0 : i32, i32
  }
  func.func @transform_5(%arg0: i32) -> (i32, i32) {
    %c0_i32 = arith.constant 0 : i32
    %c0_i32_0 = arith.constant 0 : i32
    %c0_i32_1 = arith.constant 0 : i32
    return %c0_i32, %c0_i32_0 : i32, i32
  }
  func.func @transform_6(%arg0: i32) -> (i32, i32) {
    %c0_i32 = arith.constant 0 : i32
    %c0_i32_0 = arith.constant 0 : i32
    %c0_i32_1 = arith.constant 0 : i32
    return %c0_i32, %c0_i32_0 : i32, i32
  }
  func.func @transform_7(%arg0: i32) -> (i32, i32, i32) {
    %c0_i32 = arith.constant 0 : i32
    %c0_i32_0 = arith.constant 0 : i32
    %c0_i32_1 = arith.constant 0 : i32
    %c0_i32_2 = arith.constant 0 : i32
    return %c0_i32, %c0_i32_0, %c0_i32_1 : i32, i32, i32
  }
  func.func @transform_8(%arg0: i32) -> (i32, i32) {
    %c0_i32 = arith.constant 0 : i32
    %c0_i32_0 = arith.constant 0 : i32
    %c0_i32_1 = arith.constant 0 : i32
    return %c0_i32, %c0_i32_0 : i32, i32
  }
  func.func @transform_9(%arg0: i32) -> (i32, i32, i32) {
    %c0_i32 = arith.constant 0 : i32
    %c0_i32_0 = arith.constant 0 : i32
    %c0_i32_1 = arith.constant 0 : i32
    %c0_i32_2 = arith.constant 0 : i32
    return %c0_i32, %c0_i32_0, %c0_i32_1 : i32, i32, i32
  }
  func.func @transform_10(%arg0: i32) -> (i32, i32) {
    %c0_i32 = arith.constant 0 : i32
    %c0_i32_0 = arith.constant 0 : i32
    %c0_i32_1 = arith.constant 0 : i32
    return %c0_i32, %c0_i32_0 : i32, i32
  }
  func.func @transform_11(%arg0: i32) -> (i32, i32) {
    %c0_i32 = arith.constant 0 : i32
    %c0_i32_0 = arith.constant 0 : i32
    %c0_i32_1 = arith.constant 0 : i32
    return %c0_i32, %c0_i32_0 : i32, i32
  }
  func.func @transform_12(%arg0: i32) -> (i32, i32) {
    %c0_i32 = arith.constant 0 : i32
    %c0_i32_0 = arith.constant 0 : i32
    %c0_i32_1 = arith.constant 0 : i32
    return %c0_i32, %c0_i32_0 : i32, i32
  }
  func.func @transform_13(%arg0: i32) -> (i32, i32, i32) {
    %c0_i32 = arith.constant 0 : i32
    %c0_i32_0 = arith.constant 0 : i32
    %c0_i32_1 = arith.constant 0 : i32
    return %arg0, %c0_i32, %c0_i32_0 : i32, i32, i32
  }
  func.func @transform_14(%arg0: i32) -> (i32, i32, i32) {
    %c0_i32 = arith.constant 0 : i32
    %c0_i32_0 = arith.constant 0 : i32
    %c0_i32_1 = arith.constant 0 : i32
    return %arg0, %c0_i32, %c0_i32_0 : i32, i32, i32
  }
  func.func @transform_15(%arg0: i32) -> (i32, i32, i32) {
    %c0_i32 = arith.constant 0 : i32
    %c0_i32_0 = arith.constant 0 : i32
    %c0_i32_1 = arith.constant 0 : i32
    return %arg0, %c0_i32, %c0_i32_0 : i32, i32, i32
  }
  func.func @transform_16(%arg0: i32) -> (i32, i32, i32) {
    %c0_i32 = arith.constant 0 : i32
    %c0_i32_0 = arith.constant 0 : i32
    %c0_i32_1 = arith.constant 0 : i32
    return %arg0, %c0_i32, %c0_i32_0 : i32, i32, i32
  }
  func.func @transform_17(%arg0: i32) -> (i32, i32, i32) {
    %c0_i32 = arith.constant 0 : i32
    %c0_i32_0 = arith.constant 0 : i32
    %c0_i32_1 = arith.constant 0 : i32
    return %arg0, %c0_i32, %c0_i32_0 : i32, i32, i32
  }
  func.func @transform_18(%arg0: i32) -> (i32, i32, i32, i32) {
    %c0_i32 = arith.constant 0 : i32
    %c0_i32_0 = arith.constant 0 : i32
    %c0_i32_1 = arith.constant 0 : i32
    %c0_i32_2 = arith.constant 0 : i32
    return %arg0, %c0_i32, %c0_i32_0, %c0_i32_1 : i32, i32, i32, i32
  }
}

module attributes {stable_mosaic.version = 11 : i64} {
  func.func @kernel(%arg0: i32, %arg1: memref<1x16x32xf32, #tpu.memory_space<vmem>>, %arg2: memref<32x96xbf16, #tpu.memory_space<vmem>>, %arg3: memref<1x96xf32, #tpu.memory_space<vmem>>, %arg4: memref<32x32xbf16, #tpu.memory_space<vmem>>, %arg5: memref<1x32xf32, #tpu.memory_space<vmem>>, %arg6: memref<1x32xf32, #tpu.memory_space<vmem>>, %arg7: memref<1x32xf32, #tpu.memory_space<vmem>>, %arg8: memref<3x32x64xbf16, #tpu.memory_space<vmem>>, %arg9: memref<1x64xf32, #tpu.memory_space<vmem>>, %arg10: memref<1x64x32xbf16, #tpu.memory_space<vmem>>, %arg11: memref<1x32xf32, #tpu.memory_space<vmem>>, %arg12: memref<1x32xf32, #tpu.memory_space<vmem>>, %arg13: memref<1x32xf32, #tpu.memory_space<vmem>>, %arg14: memref<1x1x16xf32, #tpu.memory_space<vmem>>, %arg15: memref<1x16x1xf32, #tpu.memory_space<vmem>>, %arg16: memref<1x1x32xf32, #tpu.memory_space<vmem>>, %arg17: memref<1x1x32xf32, #tpu.memory_space<vmem>>, %arg18: memref<1x16x32xf32, #tpu.memory_space<vmem>>, %arg19: memref<1x2x16x16xbf16, #tpu.memory_space<vmem>>, %arg20: memref<18x32xf32, #tpu.memory_space<vmem>>) attributes {dimension_semantics = [#tpu.dimension_semantics<parallel>], iteration_bounds = array<i64: 2>, scalar_prefetch = 0 : i64, scratch_operands = 1 : i64, tpu.core_type = #tpu.core_type<tc>, window_params = [{transform_indices = @transform_0, window_bounds = array<i64: 1, 16, 32>}, {pipeline_mode = #tpu.pipeline_mode<synchronous>, transform_indices = @transform_1, window_bounds = array<i64: 32, 96>}, {pipeline_mode = #tpu.pipeline_mode<synchronous>, transform_indices = @transform_2, window_bounds = array<i64: 1, 96>}, {pipeline_mode = #tpu.pipeline_mode<synchronous>, transform_indices = @transform_3, window_bounds = array<i64: 32, 32>}, {pipeline_mode = #tpu.pipeline_mode<synchronous>, transform_indices = @transform_4, window_bounds = array<i64: 1, 32>}, {pipeline_mode = #tpu.pipeline_mode<synchronous>, transform_indices = @transform_5, window_bounds = array<i64: 1, 32>}, {pipeline_mode = #tpu.pipeline_mode<synchronous>, transform_indices = @transform_6, window_bounds = array<i64: 1, 32>}, {pipeline_mode = #tpu.pipeline_mode<synchronous>, transform_indices = @transform_7, window_bounds = array<i64: 3, 32, 64>}, {pipeline_mode = #tpu.pipeline_mode<synchronous>, transform_indices = @transform_8, window_bounds = array<i64: 1, 64>}, {pipeline_mode = #tpu.pipeline_mode<synchronous>, transform_indices = @transform_9, window_bounds = array<i64: 1, 64, 32>}, {pipeline_mode = #tpu.pipeline_mode<synchronous>, transform_indices = @transform_10, window_bounds = array<i64: 1, 32>}, {pipeline_mode = #tpu.pipeline_mode<synchronous>, transform_indices = @transform_11, window_bounds = array<i64: 1, 32>}, {pipeline_mode = #tpu.pipeline_mode<synchronous>, transform_indices = @transform_12, window_bounds = array<i64: 1, 32>}, {transform_indices = @transform_13, window_bounds = array<i64: 1, 1, 16>}, {transform_indices = @transform_14, window_bounds = array<i64: 1, 16, 1>}, {transform_indices = @transform_15, window_bounds = array<i64: 1, 1, 32>}, {transform_indices = @transform_16, window_bounds = array<i64: 1, 1, 32>}, {transform_indices = @transform_17, window_bounds = array<i64: 1, 16, 32>}, {transform_indices = @transform_18, window_bounds = array<i64: 1, 2, 16, 16>}]} {
    %c0 = arith.constant 0 : index
    %c0_0 = arith.constant 0 : index
    %c0_1 = arith.constant 0 : index
    %0 = vector.load %arg1[%c0, %c0_0, %c0_1] : memref<1x16x32xf32, #tpu.memory_space<vmem>>, vector<1x16x32xf32>
    %1 = vector.shape_cast %0 : vector<1x16x32xf32> to vector<16x32xf32>
    %c0_2 = arith.constant 0 : index
    %c0_3 = arith.constant 0 : index
    %c0_4 = arith.constant 0 : index
    %2 = vector.load %arg14[%c0_2, %c0_3, %c0_4] : memref<1x1x16xf32, #tpu.memory_space<vmem>>, vector<1x1x16xf32>
    %3 = vector.shape_cast %2 : vector<1x1x16xf32> to vector<1x16xf32>
    %c0_5 = arith.constant 0 : index
    %c0_6 = arith.constant 0 : index
    %c0_7 = arith.constant 0 : index
    %4 = vector.load %arg15[%c0_5, %c0_6, %c0_7] : memref<1x16x1xf32, #tpu.memory_space<vmem>>, vector<1x16x1xf32>
    %5 = vector.shape_cast %4 : vector<1x16x1xf32> to vector<16x1xf32>
    %c0_8 = arith.constant 0 : index
    %c0_9 = arith.constant 0 : index
    %6 = vector.load %arg2[%c0_8, %c0_9] : memref<32x96xbf16, #tpu.memory_space<vmem>>, vector<32x96xbf16>
    %7 = arith.truncf %1 : vector<16x32xf32> to vector<16x32xbf16>
    %cst = arith.constant dense<0.000000e+00> : vector<16x96xf32>
    %8 = tpu.matmul %7, %6, %cst {dimension_numbers = #tpu.dot_dimension_numbers<[1], [0], [0], [1], [0, 0, 1, 1], [], []>} : vector<16x32xbf16>, vector<32x96xbf16>, vector<16x96xf32> -> vector<16x96xf32>
    %c0_10 = arith.constant 0 : index
    %c0_11 = arith.constant 0 : index
    %9 = vector.load %arg3[%c0_10, %c0_11] : memref<1x96xf32, #tpu.memory_space<vmem>>, vector<1x96xf32>
    %10 = vector.broadcast %9 : vector<1x96xf32> to vector<16x96xf32>
    %11 = arith.addf %8, %10 : vector<16x96xf32>
    %12 = vector.extract_strided_slice %11 {offsets = [0, 0], sizes = [16, 32], strides = [1, 1]} : vector<16x96xf32> to vector<16x32xf32>
    %13 = vector.extract_strided_slice %11 {offsets = [0, 32], sizes = [16, 32], strides = [1, 1]} : vector<16x96xf32> to vector<16x32xf32>
    %14 = vector.extract_strided_slice %11 {offsets = [0, 64], sizes = [16, 32], strides = [1, 1]} : vector<16x96xf32> to vector<16x32xf32>
    %15 = vector.extract_strided_slice %12 {offsets = [0, 0], sizes = [16, 16], strides = [1, 1]} : vector<16x32xf32> to vector<16x16xf32>
    %16 = vector.extract_strided_slice %13 {offsets = [0, 0], sizes = [16, 16], strides = [1, 1]} : vector<16x32xf32> to vector<16x16xf32>
    %17 = vector.extract_strided_slice %14 {offsets = [0, 0], sizes = [16, 16], strides = [1, 1]} : vector<16x32xf32> to vector<16x16xf32>
    %18 = arith.truncf %15 : vector<16x16xf32> to vector<16x16xbf16>
    %19 = arith.truncf %16 : vector<16x16xf32> to vector<16x16xbf16>
    %cst_12 = arith.constant dense<0.000000e+00> : vector<16x16xf32>
    %20 = tpu.matmul %18, %19, %cst_12 {dimension_numbers = #tpu.dot_dimension_numbers<[1], [1], [0], [0], [0, 0, 1, 0], [], []>} : vector<16x16xbf16>, vector<16x16xbf16>, vector<16x16xf32> -> vector<16x16xf32>
    %cst_13 = arith.constant 5.000000e-01 : f32
    %21 = vector.broadcast %cst_13 : f32 to vector<1x16xf32>
    %22 = arith.cmpf ogt, %3, %21 : vector<1x16xf32>
    %cst_14 = arith.constant -1.000000e+30 : f32
    %23 = vector.shape_cast %22 : vector<1x16xi1> to vector<1x16xi1>
    %24 = vector.broadcast %23 : vector<1x16xi1> to vector<16x16xi1>
    %25 = vector.broadcast %cst_14 : f32 to vector<16x16xf32>
    %26 = arith.select %24, %25, %20 : vector<16x16xi1>, vector<16x16xf32>
    %cst_15 = arith.constant dense<0xFF800000> : vector<16xf32>
    %27 = vector.multi_reduction <maximumf>, %26, %cst_15 [1] : vector<16x16xf32> to vector<16xf32>
    %28 = vector.shape_cast %27 : vector<16xf32> to vector<16x1xf32>
    %29 = vector.broadcast %28 : vector<16x1xf32> to vector<16x16xf32>
    %30 = arith.subf %26, %29 : vector<16x16xf32>
    %31 = math.exp %30 : vector<16x16xf32>
    %cst_16 = arith.constant dense<0.000000e+00> : vector<16xf32>
    %32 = vector.multi_reduction <add>, %31, %cst_16 [1] : vector<16x16xf32> to vector<16xf32>
    %33 = vector.shape_cast %32 : vector<16xf32> to vector<16x1xf32>
    %34 = tpu.reciprocal %33 {approx = true} : vector<16x1xf32> -> vector<16x1xf32>
    %35 = vector.broadcast %34 : vector<16x1xf32> to vector<16x16xf32>
    %36 = arith.mulf %31, %35 : vector<16x16xf32>
    %37 = arith.truncf %36 : vector<16x16xf32> to vector<16x16xbf16>
    %c0_17 = arith.constant 0 : index
    %c0_18 = arith.constant 0 : index
    %c0_19 = arith.constant 0 : index
    %c0_20 = arith.constant 0 : index
    %38 = vector.load %arg19[%c0_17, %c0_18, %c0_19, %c0_20] : memref<1x2x16x16xbf16, #tpu.memory_space<vmem>>, vector<1x1x16x16xbf16>
    %39 = vector.shape_cast %38 : vector<1x1x16x16xbf16> to vector<16x16xbf16>
    %40 = vector.shape_cast %37 : vector<16x16xbf16> to vector<1x1x16x16xbf16>
    tpu.vector_store %arg19[%c0_17, %c0_18, %c0_19, %c0_20], %40 {strides = array<i32>} : memref<1x2x16x16xbf16, #tpu.memory_space<vmem>>, vector<1x1x16x16xbf16>,
    %41 = arith.truncf %36 : vector<16x16xf32> to vector<16x16xbf16>
    %42 = arith.truncf %17 : vector<16x16xf32> to vector<16x16xbf16>
    %cst_21 = arith.constant dense<0.000000e+00> : vector<16x16xf32>
    %43 = tpu.matmul %41, %42, %cst_21 {dimension_numbers = #tpu.dot_dimension_numbers<[1], [0], [0], [1], [0, 0, 1, 1], [], []>} : vector<16x16xbf16>, vector<16x16xbf16>, vector<16x16xf32> -> vector<16x16xf32>
    %44 = vector.extract_strided_slice %12 {offsets = [0, 16], sizes = [16, 16], strides = [1, 1]} : vector<16x32xf32> to vector<16x16xf32>
    %45 = vector.extract_strided_slice %13 {offsets = [0, 16], sizes = [16, 16], strides = [1, 1]} : vector<16x32xf32> to vector<16x16xf32>
    %46 = vector.extract_strided_slice %14 {offsets = [0, 16], sizes = [16, 16], strides = [1, 1]} : vector<16x32xf32> to vector<16x16xf32>
    %47 = arith.truncf %44 : vector<16x16xf32> to vector<16x16xbf16>
    %48 = arith.truncf %45 : vector<16x16xf32> to vector<16x16xbf16>
    %cst_22 = arith.constant dense<0.000000e+00> : vector<16x16xf32>
    %49 = tpu.matmul %47, %48, %cst_22 {dimension_numbers = #tpu.dot_dimension_numbers<[1], [1], [0], [0], [0, 0, 1, 0], [], []>} : vector<16x16xbf16>, vector<16x16xbf16>, vector<16x16xf32> -> vector<16x16xf32>
    %cst_23 = arith.constant 5.000000e-01 : f32
    %50 = vector.broadcast %cst_23 : f32 to vector<1x16xf32>
    %51 = arith.cmpf ogt, %3, %50 : vector<1x16xf32>
    %cst_24 = arith.constant -1.000000e+30 : f32
    %52 = vector.shape_cast %51 : vector<1x16xi1> to vector<1x16xi1>
    %53 = vector.broadcast %52 : vector<1x16xi1> to vector<16x16xi1>
    %54 = vector.broadcast %cst_24 : f32 to vector<16x16xf32>
    %55 = arith.select %53, %54, %49 : vector<16x16xi1>, vector<16x16xf32>
    %cst_25 = arith.constant dense<0xFF800000> : vector<16xf32>
    %56 = vector.multi_reduction <maximumf>, %55, %cst_25 [1] : vector<16x16xf32> to vector<16xf32>
    %57 = vector.shape_cast %56 : vector<16xf32> to vector<16x1xf32>
    %58 = vector.broadcast %57 : vector<16x1xf32> to vector<16x16xf32>
    %59 = arith.subf %55, %58 : vector<16x16xf32>
    %60 = math.exp %59 : vector<16x16xf32>
    %cst_26 = arith.constant dense<0.000000e+00> : vector<16xf32>
    %61 = vector.multi_reduction <add>, %60, %cst_26 [1] : vector<16x16xf32> to vector<16xf32>
    %62 = vector.shape_cast %61 : vector<16xf32> to vector<16x1xf32>
    %63 = tpu.reciprocal %62 {approx = true} : vector<16x1xf32> -> vector<16x1xf32>
    %64 = vector.broadcast %63 : vector<16x1xf32> to vector<16x16xf32>
    %65 = arith.mulf %60, %64 : vector<16x16xf32>
    %66 = arith.truncf %65 : vector<16x16xf32> to vector<16x16xbf16>
    %c0_27 = arith.constant 0 : index
    %c1 = arith.constant 1 : index
    %c0_28 = arith.constant 0 : index
    %c0_29 = arith.constant 0 : index
    %67 = vector.load %arg19[%c0_27, %c1, %c0_28, %c0_29] : memref<1x2x16x16xbf16, #tpu.memory_space<vmem>>, vector<1x1x16x16xbf16>
    %68 = vector.shape_cast %67 : vector<1x1x16x16xbf16> to vector<16x16xbf16>
    %69 = vector.shape_cast %66 : vector<16x16xbf16> to vector<1x1x16x16xbf16>
    tpu.vector_store %arg19[%c0_27, %c1, %c0_28, %c0_29], %69 {strides = array<i32>} : memref<1x2x16x16xbf16, #tpu.memory_space<vmem>>, vector<1x1x16x16xbf16>,
    %70 = arith.truncf %65 : vector<16x16xf32> to vector<16x16xbf16>
    %71 = arith.truncf %46 : vector<16x16xf32> to vector<16x16xbf16>
    %cst_30 = arith.constant dense<0.000000e+00> : vector<16x16xf32>
    %72 = tpu.matmul %70, %71, %cst_30 {dimension_numbers = #tpu.dot_dimension_numbers<[1], [0], [0], [1], [0, 0, 1, 1], [], []>} : vector<16x16xbf16>, vector<16x16xbf16>, vector<16x16xf32> -> vector<16x16xf32>
    %73 = tpu.concatenate %43, %72 in 1 : vector<16x16xf32>, vector<16x16xf32> -> vector<16x32xf32>
    %c0_31 = arith.constant 0 : index
    %c0_32 = arith.constant 0 : index
    %74 = vector.load %arg4[%c0_31, %c0_32] : memref<32x32xbf16, #tpu.memory_space<vmem>>, vector<32x32xbf16>
    %75 = arith.truncf %73 : vector<16x32xf32> to vector<16x32xbf16>
    %cst_33 = arith.constant dense<0.000000e+00> : vector<16x32xf32>
    %76 = tpu.matmul %75, %74, %cst_33 {dimension_numbers = #tpu.dot_dimension_numbers<[1], [0], [0], [1], [0, 0, 1, 1], [], []>} : vector<16x32xbf16>, vector<32x32xbf16>, vector<16x32xf32> -> vector<16x32xf32>
    %c0_34 = arith.constant 0 : index
    %c0_35 = arith.constant 0 : index
    %77 = vector.load %arg5[%c0_34, %c0_35] : memref<1x32xf32, #tpu.memory_space<vmem>>, vector<1x32xf32>
    %78 = vector.broadcast %77 : vector<1x32xf32> to vector<16x32xf32>
    %79 = arith.addf %76, %78 : vector<16x32xf32>
    %80 = arith.addf %79, %1 : vector<16x32xf32>
    %cst_36 = arith.constant dense<0.000000e+00> : vector<16xf32>
    %81 = vector.multi_reduction <add>, %80, %cst_36 [1] : vector<16x32xf32> to vector<16xf32>
    %82 = vector.shape_cast %81 : vector<16xf32> to vector<16x1xf32>
    %cst_37 = arith.constant 3.125000e-02 : f32
    %83 = vector.broadcast %cst_37 : f32 to vector<16x1xf32>
    %84 = arith.mulf %82, %83 : vector<16x1xf32>
    %85 = vector.broadcast %84 : vector<16x1xf32> to vector<16x32xf32>
    %86 = arith.subf %80, %85 : vector<16x32xf32>
    %87 = arith.mulf %86, %86 : vector<16x32xf32>
    %cst_38 = arith.constant dense<0.000000e+00> : vector<16xf32>
    %88 = vector.multi_reduction <add>, %87, %cst_38 [1] : vector<16x32xf32> to vector<16xf32>
    %89 = vector.shape_cast %88 : vector<16xf32> to vector<16x1xf32>
    %cst_39 = arith.constant 3.125000e-02 : f32
    %90 = vector.broadcast %cst_39 : f32 to vector<16x1xf32>
    %91 = arith.mulf %89, %90 : vector<16x1xf32>
    %cst_40 = arith.constant 9.99999974E-6 : f32
    %92 = vector.broadcast %cst_40 : f32 to vector<16x1xf32>
    %93 = arith.addf %91, %92 : vector<16x1xf32>
    %94 = math.rsqrt %93 : vector<16x1xf32>
    %95 = vector.broadcast %94 : vector<16x1xf32> to vector<16x32xf32>
    %96 = arith.mulf %86, %95 : vector<16x32xf32>
    %c0_41 = arith.constant 0 : index
    %c0_42 = arith.constant 0 : index
    %97 = vector.load %arg6[%c0_41, %c0_42] : memref<1x32xf32, #tpu.memory_space<vmem>>, vector<1x32xf32>
    %98 = vector.broadcast %97 : vector<1x32xf32> to vector<16x32xf32>
    %99 = arith.mulf %96, %98 : vector<16x32xf32>
    %c0_43 = arith.constant 0 : index
    %c0_44 = arith.constant 0 : index
    %100 = vector.load %arg7[%c0_43, %c0_44] : memref<1x32xf32, #tpu.memory_space<vmem>>, vector<1x32xf32>
    %101 = vector.broadcast %100 : vector<1x32xf32> to vector<16x32xf32>
    %102 = arith.addf %99, %101 : vector<16x32xf32>
    %cst_45 = arith.constant 5.000000e-01 : f32
    %103 = vector.broadcast %cst_45 : f32 to vector<16x1xf32>
    %104 = arith.cmpf ogt, %5, %103 : vector<16x1xf32>
    %cst_46 = arith.constant 0.000000e+00 : f32
    %105 = vector.shape_cast %104 : vector<16x1xi1> to vector<16x1xi1>
    %106 = vector.broadcast %105 : vector<16x1xi1> to vector<16x32xi1>
    %107 = vector.broadcast %cst_46 : f32 to vector<16x32xf32>
    %108 = arith.select %106, %107, %102 : vector<16x32xi1>, vector<16x32xf32>
    %cst_47 = arith.constant 0.000000e+00 : f32
    %109 = vector.broadcast %cst_47 : f32 to vector<1x32xf32>
    %c0_48 = arith.constant 0 : index
    %c0_49 = arith.constant 0 : index
    %110 = vector.load %arg20[%c0_48, %c0_49] : memref<18x32xf32, #tpu.memory_space<vmem>>, vector<1x32xf32>
    tpu.vector_store %arg20[%c0_48, %c0_49], %109 {strides = array<i32>} : memref<18x32xf32, #tpu.memory_space<vmem>>, vector<1x32xf32>,
    %c17 = arith.constant 17 : index
    %c0_50 = arith.constant 0 : index
    %111 = vector.load %arg20[%c17, %c0_50] : memref<18x32xf32, #tpu.memory_space<vmem>>, vector<1x32xf32>
    tpu.vector_store %arg20[%c17, %c0_50], %109 {strides = array<i32>} : memref<18x32xf32, #tpu.memory_space<vmem>>, vector<1x32xf32>,
    %c1_51 = arith.constant 1 : index
    %c0_52 = arith.constant 0 : index
    %112 = vector.load %arg20[%c1_51, %c0_52] : memref<18x32xf32, #tpu.memory_space<vmem>>, vector<16x32xf32>
    tpu.vector_store %arg20[%c1_51, %c0_52], %108 {strides = array<i32>} : memref<18x32xf32, #tpu.memory_space<vmem>>, vector<16x32xf32>,
    %c0_53 = arith.constant 0 : index
    %c0_54 = arith.constant 0 : index
    %113 = vector.load %arg20[%c0_53, %c0_54] : memref<18x32xf32, #tpu.memory_space<vmem>>, vector<16x32xf32>
    %c0_55 = arith.constant 0 : index
    %c0_56 = arith.constant 0 : index
    %c0_57 = arith.constant 0 : index
    %114 = vector.load %arg8[%c0_55, %c0_56, %c0_57] : memref<3x32x64xbf16, #tpu.memory_space<vmem>>, vector<1x32x64xbf16>
    %115 = vector.shape_cast %114 : vector<1x32x64xbf16> to vector<32x64xbf16>
    %116 = arith.truncf %113 : vector<16x32xf32> to vector<16x32xbf16>
    %cst_58 = arith.constant dense<0.000000e+00> : vector<16x64xf32>
    %117 = tpu.matmul %116, %115, %cst_58 {dimension_numbers = #tpu.dot_dimension_numbers<[1], [0], [0], [1], [0, 0, 1, 1], [], []>} : vector<16x32xbf16>, vector<32x64xbf16>, vector<16x64xf32> -> vector<16x64xf32>
    %c1_59 = arith.constant 1 : index
    %c0_60 = arith.constant 0 : index
    %118 = vector.load %arg20[%c1_59, %c0_60] : memref<18x32xf32, #tpu.memory_space<vmem>>, vector<16x32xf32>
    %c1_61 = arith.constant 1 : index
    %c0_62 = arith.constant 0 : index
    %c0_63 = arith.constant 0 : index
    %119 = vector.load %arg8[%c1_61, %c0_62, %c0_63] : memref<3x32x64xbf16, #tpu.memory_space<vmem>>, vector<1x32x64xbf16>
    %120 = vector.shape_cast %119 : vector<1x32x64xbf16> to vector<32x64xbf16>
    %121 = arith.truncf %118 : vector<16x32xf32> to vector<16x32xbf16>
    %cst_64 = arith.constant dense<0.000000e+00> : vector<16x64xf32>
    %122 = tpu.matmul %121, %120, %cst_64 {dimension_numbers = #tpu.dot_dimension_numbers<[1], [0], [0], [1], [0, 0, 1, 1], [], []>} : vector<16x32xbf16>, vector<32x64xbf16>, vector<16x64xf32> -> vector<16x64xf32>
    %123 = arith.addf %117, %122 : vector<16x64xf32>
    %c2 = arith.constant 2 : index
    %c0_65 = arith.constant 0 : index
    %124 = vector.load %arg20[%c2, %c0_65] : memref<18x32xf32, #tpu.memory_space<vmem>>, vector<16x32xf32>
    %c2_66 = arith.constant 2 : index
    %c0_67 = arith.constant 0 : index
    %c0_68 = arith.constant 0 : index
    %125 = vector.load %arg8[%c2_66, %c0_67, %c0_68] : memref<3x32x64xbf16, #tpu.memory_space<vmem>>, vector<1x32x64xbf16>
    %126 = vector.shape_cast %125 : vector<1x32x64xbf16> to vector<32x64xbf16>
    %127 = arith.truncf %124 : vector<16x32xf32> to vector<16x32xbf16>
    %cst_69 = arith.constant dense<0.000000e+00> : vector<16x64xf32>
    %128 = tpu.matmul %127, %126, %cst_69 {dimension_numbers = #tpu.dot_dimension_numbers<[1], [0], [0], [1], [0, 0, 1, 1], [], []>} : vector<16x32xbf16>, vector<32x64xbf16>, vector<16x64xf32> -> vector<16x64xf32>
    %129 = arith.addf %123, %128 : vector<16x64xf32>
    %c0_70 = arith.constant 0 : index
    %c0_71 = arith.constant 0 : index
    %130 = vector.load %arg9[%c0_70, %c0_71] : memref<1x64xf32, #tpu.memory_space<vmem>>, vector<1x64xf32>
    %131 = vector.broadcast %130 : vector<1x64xf32> to vector<16x64xf32>
    %132 = arith.addf %129, %131 : vector<16x64xf32>
    %cst_72 = arith.constant 0.000000e+00 : f32
    %133 = vector.broadcast %cst_72 : f32 to vector<16x64xf32>
    %134 = arith.maximumf %132, %133 : vector<16x64xf32>
    %c0_73 = arith.constant 0 : index
    %c0_74 = arith.constant 0 : index
    %c0_75 = arith.constant 0 : index
    %135 = vector.load %arg10[%c0_73, %c0_74, %c0_75] : memref<1x64x32xbf16, #tpu.memory_space<vmem>>, vector<1x64x32xbf16>
    %136 = vector.shape_cast %135 : vector<1x64x32xbf16> to vector<64x32xbf16>
    %137 = arith.truncf %134 : vector<16x64xf32> to vector<16x64xbf16>
    %cst_76 = arith.constant dense<0.000000e+00> : vector<16x32xf32>
    %138 = tpu.matmul %137, %136, %cst_76 {dimension_numbers = #tpu.dot_dimension_numbers<[1], [0], [0], [1], [0, 0, 1, 1], [], []>} : vector<16x64xbf16>, vector<64x32xbf16>, vector<16x32xf32> -> vector<16x32xf32>
    %c0_77 = arith.constant 0 : index
    %c0_78 = arith.constant 0 : index
    %139 = vector.load %arg11[%c0_77, %c0_78] : memref<1x32xf32, #tpu.memory_space<vmem>>, vector<1x32xf32>
    %140 = vector.broadcast %139 : vector<1x32xf32> to vector<16x32xf32>
    %141 = arith.addf %138, %140 : vector<16x32xf32>
    %142 = arith.addf %141, %108 : vector<16x32xf32>
    %cst_79 = arith.constant dense<0.000000e+00> : vector<16xf32>
    %143 = vector.multi_reduction <add>, %142, %cst_79 [1] : vector<16x32xf32> to vector<16xf32>
    %144 = vector.shape_cast %143 : vector<16xf32> to vector<16x1xf32>
    %cst_80 = arith.constant 3.125000e-02 : f32
    %145 = vector.broadcast %cst_80 : f32 to vector<16x1xf32>
    %146 = arith.mulf %144, %145 : vector<16x1xf32>
    %147 = vector.broadcast %146 : vector<16x1xf32> to vector<16x32xf32>
    %148 = arith.subf %142, %147 : vector<16x32xf32>
    %149 = arith.mulf %148, %148 : vector<16x32xf32>
    %cst_81 = arith.constant dense<0.000000e+00> : vector<16xf32>
    %150 = vector.multi_reduction <add>, %149, %cst_81 [1] : vector<16x32xf32> to vector<16xf32>
    %151 = vector.shape_cast %150 : vector<16xf32> to vector<16x1xf32>
    %cst_82 = arith.constant 3.125000e-02 : f32
    %152 = vector.broadcast %cst_82 : f32 to vector<16x1xf32>
    %153 = arith.mulf %151, %152 : vector<16x1xf32>
    %cst_83 = arith.constant 9.99999974E-6 : f32
    %154 = vector.broadcast %cst_83 : f32 to vector<16x1xf32>
    %155 = arith.addf %153, %154 : vector<16x1xf32>
    %156 = math.rsqrt %155 : vector<16x1xf32>
    %157 = vector.broadcast %156 : vector<16x1xf32> to vector<16x32xf32>
    %158 = arith.mulf %148, %157 : vector<16x32xf32>
    %c0_84 = arith.constant 0 : index
    %c0_85 = arith.constant 0 : index
    %159 = vector.load %arg12[%c0_84, %c0_85] : memref<1x32xf32, #tpu.memory_space<vmem>>, vector<1x32xf32>
    %160 = vector.broadcast %159 : vector<1x32xf32> to vector<16x32xf32>
    %161 = arith.mulf %158, %160 : vector<16x32xf32>
    %c0_86 = arith.constant 0 : index
    %c0_87 = arith.constant 0 : index
    %162 = vector.load %arg13[%c0_86, %c0_87] : memref<1x32xf32, #tpu.memory_space<vmem>>, vector<1x32xf32>
    %163 = vector.broadcast %162 : vector<1x32xf32> to vector<16x32xf32>
    %164 = arith.addf %161, %163 : vector<16x32xf32>
    %c0_88 = arith.constant 0 : index
    %c0_89 = arith.constant 0 : index
    %c0_90 = arith.constant 0 : index
    %165 = vector.load %arg16[%c0_88, %c0_89, %c0_90] : memref<1x1x32xf32, #tpu.memory_space<vmem>>, vector<1x1x32xf32>
    %166 = vector.shape_cast %165 : vector<1x1x32xf32> to vector<1x32xf32>
    %167 = vector.broadcast %166 : vector<1x32xf32> to vector<16x32xf32>
    %168 = arith.mulf %167, %164 : vector<16x32xf32>
    %c0_91 = arith.constant 0 : index
    %c0_92 = arith.constant 0 : index
    %c0_93 = arith.constant 0 : index
    %169 = vector.load %arg17[%c0_91, %c0_92, %c0_93] : memref<1x1x32xf32, #tpu.memory_space<vmem>>, vector<1x1x32xf32>
    %170 = vector.shape_cast %169 : vector<1x1x32xf32> to vector<1x32xf32>
    %171 = vector.broadcast %170 : vector<1x32xf32> to vector<16x32xf32>
    %172 = arith.addf %168, %171 : vector<16x32xf32>
    %cst_94 = arith.constant 5.000000e-01 : f32
    %173 = vector.broadcast %cst_94 : f32 to vector<16x1xf32>
    %174 = arith.cmpf ogt, %5, %173 : vector<16x1xf32>
    %cst_95 = arith.constant 0.000000e+00 : f32
    %175 = vector.shape_cast %174 : vector<16x1xi1> to vector<16x1xi1>
    %176 = vector.broadcast %175 : vector<16x1xi1> to vector<16x32xi1>
    %177 = vector.broadcast %cst_95 : f32 to vector<16x32xf32>
    %178 = arith.select %176, %177, %172 : vector<16x32xi1>, vector<16x32xf32>
    %c0_96 = arith.constant 0 : index
    %c0_97 = arith.constant 0 : index
    %c0_98 = arith.constant 0 : index
    %179 = vector.load %arg18[%c0_96, %c0_97, %c0_98] : memref<1x16x32xf32, #tpu.memory_space<vmem>>, vector<1x16x32xf32>
    %180 = vector.shape_cast %179 : vector<1x16x32xf32> to vector<16x32xf32>
    %181 = vector.shape_cast %178 : vector<16x32xf32> to vector<1x16x32xf32>
    tpu.vector_store %arg18[%c0_96, %c0_97, %c0_98], %181 {strides = array<i32>} : memref<1x16x32xf32, #tpu.memory_space<vmem>>, vector<1x16x32xf32>,
    return
  }
  func.func @transform_0(%arg0: i32) -> (i32, i32, i32) {
    %c0_i32 = arith.constant 0 : i32
    %c0_i32_0 = arith.constant 0 : i32
    %c0_i32_1 = arith.constant 0 : i32
    return %arg0, %c0_i32, %c0_i32_0 : i32, i32, i32
  }
  func.func @transform_1(%arg0: i32) -> (i32, i32) {
    %c0_i32 = arith.constant 0 : i32
    %c0_i32_0 = arith.constant 0 : i32
    %c0_i32_1 = arith.constant 0 : i32
    return %c0_i32, %c0_i32_0 : i32, i32
  }
  func.func @transform_2(%arg0: i32) -> (i32, i32) {
    %c0_i32 = arith.constant 0 : i32
    %c0_i32_0 = arith.constant 0 : i32
    %c0_i32_1 = arith.constant 0 : i32
    return %c0_i32, %c0_i32_0 : i32, i32
  }
  func.func @transform_3(%arg0: i32) -> (i32, i32) {
    %c0_i32 = arith.constant 0 : i32
    %c0_i32_0 = arith.constant 0 : i32
    %c0_i32_1 = arith.constant 0 : i32
    return %c0_i32, %c0_i32_0 : i32, i32
  }
  func.func @transform_4(%arg0: i32) -> (i32, i32) {
    %c0_i32 = arith.constant 0 : i32
    %c0_i32_0 = arith.constant 0 : i32
    %c0_i32_1 = arith.constant 0 : i32
    return %c0_i32, %c0_i32_0 : i32, i32
  }
  func.func @transform_5(%arg0: i32) -> (i32, i32) {
    %c0_i32 = arith.constant 0 : i32
    %c0_i32_0 = arith.constant 0 : i32
    %c0_i32_1 = arith.constant 0 : i32
    return %c0_i32, %c0_i32_0 : i32, i32
  }
  func.func @transform_6(%arg0: i32) -> (i32, i32) {
    %c0_i32 = arith.constant 0 : i32
    %c0_i32_0 = arith.constant 0 : i32
    %c0_i32_1 = arith.constant 0 : i32
    return %c0_i32, %c0_i32_0 : i32, i32
  }
  func.func @transform_7(%arg0: i32) -> (i32, i32, i32) {
    %c0_i32 = arith.constant 0 : i32
    %c0_i32_0 = arith.constant 0 : i32
    %c0_i32_1 = arith.constant 0 : i32
    %c0_i32_2 = arith.constant 0 : i32
    return %c0_i32, %c0_i32_0, %c0_i32_1 : i32, i32, i32
  }
  func.func @transform_8(%arg0: i32) -> (i32, i32) {
    %c0_i32 = arith.constant 0 : i32
    %c0_i32_0 = arith.constant 0 : i32
    %c0_i32_1 = arith.constant 0 : i32
    return %c0_i32, %c0_i32_0 : i32, i32
  }
  func.func @transform_9(%arg0: i32) -> (i32, i32, i32) {
    %c0_i32 = arith.constant 0 : i32
    %c0_i32_0 = arith.constant 0 : i32
    %c0_i32_1 = arith.constant 0 : i32
    %c0_i32_2 = arith.constant 0 : i32
    return %c0_i32, %c0_i32_0, %c0_i32_1 : i32, i32, i32
  }
  func.func @transform_10(%arg0: i32) -> (i32, i32) {
    %c0_i32 = arith.constant 0 : i32
    %c0_i32_0 = arith.constant 0 : i32
    %c0_i32_1 = arith.constant 0 : i32
    return %c0_i32, %c0_i32_0 : i32, i32
  }
  func.func @transform_11(%arg0: i32) -> (i32, i32) {
    %c0_i32 = arith.constant 0 : i32
    %c0_i32_0 = arith.constant 0 : i32
    %c0_i32_1 = arith.constant 0 : i32
    return %c0_i32, %c0_i32_0 : i32, i32
  }
  func.func @transform_12(%arg0: i32) -> (i32, i32) {
    %c0_i32 = arith.constant 0 : i32
    %c0_i32_0 = arith.constant 0 : i32
    %c0_i32_1 = arith.constant 0 : i32
    return %c0_i32, %c0_i32_0 : i32, i32
  }
  func.func @transform_13(%arg0: i32) -> (i32, i32, i32) {
    %c0_i32 = arith.constant 0 : i32
    %c0_i32_0 = arith.constant 0 : i32
    %c0_i32_1 = arith.constant 0 : i32
    return %arg0, %c0_i32, %c0_i32_0 : i32, i32, i32
  }
  func.func @transform_14(%arg0: i32) -> (i32, i32, i32) {
    %c0_i32 = arith.constant 0 : i32
    %c0_i32_0 = arith.constant 0 : i32
    %c0_i32_1 = arith.constant 0 : i32
    return %arg0, %c0_i32, %c0_i32_0 : i32, i32, i32
  }
  func.func @transform_15(%arg0: i32) -> (i32, i32, i32) {
    %c0_i32 = arith.constant 0 : i32
    %c0_i32_0 = arith.constant 0 : i32
    %c0_i32_1 = arith.constant 0 : i32
    return %arg0, %c0_i32, %c0_i32_0 : i32, i32, i32
  }
  func.func @transform_16(%arg0: i32) -> (i32, i32, i32) {
    %c0_i32 = arith.constant 0 : i32
    %c0_i32_0 = arith.constant 0 : i32
    %c0_i32_1 = arith.constant 0 : i32
    return %arg0, %c0_i32, %c0_i32_0 : i32, i32, i32
  }
  func.func @transform_17(%arg0: i32) -> (i32, i32, i32) {
    %c0_i32 = arith.constant 0 : i32
    %c0_i32_0 = arith.constant 0 : i32
    %c0_i32_1 = arith.constant 0 : i32
    return %arg0, %c0_i32, %c0_i32_0 : i32, i32, i32
  }
  func.func @transform_18(%arg0: i32) -> (i32, i32, i32, i32) {
    %c0_i32 = arith.constant 0 : i32
    %c0_i32_0 = arith.constant 0 : i32
    %c0_i32_1 = arith.constant 0 : i32
    %c0_i32_2 = arith.constant 0 : i32
    return %arg0, %c0_i32, %c0_i32_0, %c0_i32_1 : i32, i32, i32, i32
  }
}

</mosaic_0001>

<llo_original>
// kernel: tpu_custom_call.1
$region0: #{tpu_custom_call.1}
  #allocation0 [shape = 'u32[]', space=smem, size = 0x4, offset = 0x4, fixed_abs, tag = 'smem constant byte address 0x4 - core index']
  #allocation1 [shape = 'u32[144,128]{1,0:T(1,128)}', space=vmem, size = 0x12000, scoped, tag = 'internal scratch']
  #allocation2 [shape = 'f32[18,32]{1,0:T(8,128)}', space=vmem, size = 0x3000, scoped, tag = 'scratch operand']
  %s0 = inlined_call_operand.vmem [shape: f32[2,16,32], index: 0, kind: input, shape index: {}]
  %s1 = inlined_call_operand.vmem [shape: bf16[32,96], index: 1, kind: input, shape index: {}]
  %s2 = inlined_call_operand.hbm [shape: f32[1,96], index: 2, kind: input, shape index: {}]
  %s3 = inlined_call_operand.hbm [shape: bf16[32,32], index: 3, kind: input, shape index: {}]
  %s4 = inlined_call_operand.hbm [shape: f32[1,32], index: 4, kind: input, shape index: {}]
  %s5 = inlined_call_operand.hbm [shape: f32[1,32], index: 5, kind: input, shape index: {}]
  %s6 = inlined_call_operand.hbm [shape: f32[1,32], index: 6, kind: input, shape index: {}]
  %s7 = inlined_call_operand.vmem [shape: bf16[3,32,64], index: 7, kind: input, shape index: {}]
  %s8 = inlined_call_operand.hbm [shape: f32[1,64], index: 8, kind: input, shape index: {}]
  %s9 = inlined_call_operand.vmem [shape: bf16[1,64,32], index: 9, kind: input, shape index: {}]
  %s10 = inlined_call_operand.vmem [shape: f32[1,32], index: 10, kind: input, shape index: {}]
  %s11 = inlined_call_operand.vmem [shape: f32[1,32], index: 11, kind: input, shape index: {}]
  %s12 = inlined_call_operand.vmem [shape: f32[1,32], index: 12, kind: input, shape index: {}]
  %s13 = inlined_call_operand.vmem [shape: f32[2,1,16], index: 13, kind: input, shape index: {}]
  %s14 = inlined_call_operand.vmem [shape: f32[2,16,1], index: 14, kind: input, shape index: {}]
  %s15 = inlined_call_operand.vmem [shape: f32[2,1,32], index: 15, kind: input, shape index: {}]
  %s16 = inlined_call_operand.vmem [shape: f32[2,1,32], index: 16, kind: input, shape index: {}]
  %s17 = inlined_call_operand.hbm [shape: f32[2,16,32], index: 17, kind: output, shape index: {0}]
  %s18 = inlined_call_operand.hbm [shape: bf16[2,2,16,16], index: 18, kind: output, shape index: {1}]
  %19 = xla_tuple %s17, %s18
  %s20 = sld [smem:[#allocation0]]
  $region133: #{tpu_custom_call.1} parent=0
    _
  %s22 = ssub.s32 1, %s20
  %s23 = scalar_select 0, %s22, %s20
  $region1: #{tpu_custom_call.1} parent=0
    #allocation3 [shape = 'u8[512]{0}', space=vmem, size = 0x400, scoped, tag = 'input window, operand 2, single buffered']
    #allocation4 [shape = 's32[2]{0}', space=sflag, size = 0x8, scoped, tag = 'scoped memory for tpu_custom_call.1']
    #allocation5 [shape = 's32[2]{0}', space=sflag, size = 0x8, scoped, tag = 'scoped memory for tpu_custom_call.1']
    #allocation6 [shape = 'u8[8192]{0}', space=vmem, size = 0x2000, scoped, tag = 'input window, operand 3, single buffered']
    #allocation7 [shape = 's32[1]{0}', space=sflag, size = 0x4, scoped, tag = 'scoped memory for tpu_custom_call.1']
    #allocation8 [shape = 'u8[512]{0}', space=vmem, size = 0x400, scoped, tag = 'input window, operand 4, single buffered']
    #allocation9 [shape = 'u8[512]{0}', space=vmem, size = 0x400, scoped, tag = 'input window, operand 5, single buffered']
    #allocation10 [shape = 's32[1]{0}', space=sflag, size = 0x4, scoped, tag = 'scoped memory for tpu_custom_call.1']
    #allocation11 [shape = 'u8[512]{0}', space=vmem, size = 0x400, scoped, tag = 'input window, operand 6, single buffered']
    #allocation12 [shape = 'u8[512]{0}', space=vmem, size = 0x400, scoped, tag = 'input window, operand 8, single buffered']
    #allocation13 [shape = 's32[1]{0}', space=sflag, size = 0x4, scoped, tag = 'scoped memory for tpu_custom_call.1']
    #allocation14 [shape = 'u8[16384]{0}', space=vmem, size = 0x4000, scoped, tag = 'output window, operand 0']
    #allocation15 [shape = 'u8[16384]{0}', space=vmem, size = 0x4000, scoped, tag = 'output window, operand 1']
    #allocation16 [shape = 's32[2]{0}', space=sflag, size = 0x8, scoped, tag = 'scoped memory for tpu_custom_call.1']
    %24 = vsyncpa [#allocation4], 0
    %25 = vsyncpa [#allocation7], 0
    %26 = vsyncpa [#allocation10], 0
    %27 = vsyncpa [#allocation13], 0
    %28 = vsyncpa [#allocation5], 0
    %s29 = scalar_lea.sflag [#allocation5], 1
    %30 = vsyncpa %s29, 0
    %31 = vsyncpa [#allocation16], 0
    %s32 = scalar_lea.sflag [#allocation16], 1
    %33 = vsyncpa %s32, 0
    loop: start=0, step=1, limit=4
    $region2: #{tpu_custom_call.1} parent=1 // loop_pre_header
      _
    $region3: #{tpu_custom_call.1} parent=1 // loop_header
      %s35 = sphi 0, %s39
      %p36 = scmp.ge.s32.totalorder %s35, 4
      %s45 = sphi 0, %s47
      %s48 = sphi 0, %s45
      %s49 = sphi 0, %s48
      %s65 = sphi 0, %s49
      %s69 = sphi 0, %s69
      %s71 = sphi 0, %s69
      %s72 = sphi 0, %s71
      %s86 = sphi 0, %s72
      %s90 = sphi 0, %s90
      %s92 = sphi 0, %s90
      %s93 = sphi 0, %s92
      %s107 = sphi 0, %s93
      %s111 = sphi 0, %s111
      %s113 = sphi 0, %s111
      %s114 = sphi 0, %s113
      %s128 = sphi 0, %s114
      %s132 = sphi 0, %s132
      %s134 = sphi 0, %s132
      %s135 = sphi 0, %s134
      %s149 = sphi 0, %s135
      %s153 = sphi 0, %s153
      %s155 = sphi 0, %s153
      %s156 = sphi 0, %s155
      %s170 = sphi 0, %s156
      %s174 = sphi 0, %s174
      %s176 = sphi 0, %s174
      %s177 = sphi 0, %s176
      %s191 = sphi 0, %s177
      %s195 = sphi 0, %s195
      %s197 = sphi 0, %s195
      %s198 = sphi 0, %s197
      %s212 = sphi 0, %s198
      %s216 = sphi 0, %s216
      %s218 = sphi 0, %s216
      %s219 = sphi 0, %s218
      %s233 = sphi 0, %s219
      %s237 = sphi 0, %s237
      %s239 = sphi 0, %s237
      %s240 = sphi 0, %s239
      %s254 = sphi 0, %s240
      %s258 = sphi 0, %s258
      %s260 = sphi 0, %s258
      %s261 = sphi 0, %s260
      %s275 = sphi 0, %s261
      %s279 = sphi 0, %s279
      %s281 = sphi 0, %s279
      %s282 = sphi 0, %s281
      %s296 = sphi 0, %s282
      %s300 = sphi 0, %s300
      %s302 = sphi 0, %s300
      %s303 = sphi 0, %s302
      %s317 = sphi 0, %s303
      %s323 = sphi 0, %s325
      %s326 = sphi 0, %s323
      %s327 = sphi 0, %s326
      %s343 = sphi 0, %s327
      %s349 = sphi 0, %s351
      %s352 = sphi 0, %s349
      %s353 = sphi 0, %s352
      %s369 = sphi 0, %s353
      %s375 = sphi 0, %s377
      %s378 = sphi 0, %s375
      %s379 = sphi 0, %s378
      %s395 = sphi 0, %s379
      %s401 = sphi 0, %s403
      %s404 = sphi 0, %s401
      %s405 = sphi 0, %s404
      %s421 = sphi 0, %s405
      %s427 = sphi 0, %s429
      %s430 = sphi 0, %s427
      %s431 = sphi 0, %s430
      %s447 = sphi 0, %s431
      %s453 = sphi 0, %s455
      %s456 = sphi 0, %s453
      %s457 = sphi 0, %s456
      %s473 = sphi 0, %s457
    $region4: #{tpu_custom_call.1} parent=1 // loop_header_branch
      %38 = sbr.rel (%p36) target = $region8
    $region5: #{tpu_custom_call.1} parent=1 // loop_body
      %s40 = ssub.s32 %s35, 1
      %s41 = ssub.s32 %s35, 2
      %s42 = sadd.s32 %s35, 1
      %s43 = ssub.s32 %s35, %s42
      %p44 = scmp.eq.s32.totalorder %s43, 0
      %s46 = sadd.s32 %s45, 1
      %s47 = scalar_select %p44, %s45, %s46
      %p50 = pneg %p44
      %p51 = scmp.eq.s32.totalorder %s35, 1
      %p52 = por %p50, %p51
      %p53 = scmp.ne.s32.totalorder %s45, %s48
      %p54 = scmp.eq.s32.totalorder %s35, 0
      %p55 = por %p53, %p54
      %p56 = scmp.ne.s32.totalorder %s45, %s48
      %p57 = scmp.eq.s32.totalorder %s40, 1
      %p58 = por %p56, %p57
      %p59 = scmp.ne.s32.totalorder %s48, %s49
      %p60 = scmp.eq.s32.totalorder %s40, 0
      %p61 = por %p59, %p60
      %p62 = scmp.ne.s32.totalorder %s48, %s49
      %p63 = scmp.eq.s32.totalorder %s41, 1
      %p64 = por %p62, %p63
      %p66 = scmp.ne.s32.totalorder %s49, %s65
      %p67 = scmp.eq.s32.totalorder %s41, 0
      %p68 = por %p66, %p67
      %s70 = sadd.s32 %s69, 1
      %p73 = scmp.eq.s32.totalorder %s35, 1
      %p74 = scmp.ne.s32.totalorder %s69, %s71
      %p75 = scmp.eq.s32.totalorder %s35, 0
      %p76 = por %p74, %p75
      %p77 = scmp.ne.s32.totalorder %s69, %s71
      %p78 = scmp.eq.s32.totalorder %s40, 1
      %p79 = por %p77, %p78
      %p80 = scmp.ne.s32.totalorder %s71, %s72
      %p81 = scmp.eq.s32.totalorder %s40, 0
      %p82 = por %p80, %p81
      %p83 = scmp.ne.s32.totalorder %s71, %s72
      %p84 = scmp.eq.s32.totalorder %s41, 1
      %p85 = por %p83, %p84
      %p87 = scmp.ne.s32.totalorder %s72, %s86
      %p88 = scmp.eq.s32.totalorder %s41, 0
      %p89 = por %p87, %p88
      %s91 = sadd.s32 %s90, 1
      %p94 = scmp.eq.s32.totalorder %s35, 1
      %p95 = scmp.ne.s32.totalorder %s90, %s92
      %p96 = scmp.eq.s32.totalorder %s35, 0
      %p97 = por %p95, %p96
      %p98 = scmp.ne.s32.totalorder %s90, %s92
      %p99 = scmp.eq.s32.totalorder %s40, 1
      %p100 = por %p98, %p99
      %p101 = scmp.ne.s32.totalorder %s92, %s93
      %p102 = scmp.eq.s32.totalorder %s40, 0
      %p103 = por %p101, %p102
      %p104 = scmp.ne.s32.totalorder %s92, %s93
      %p105 = scmp.eq.s32.totalorder %s41, 1
      %p106 = por %p104, %p105
      %p108 = scmp.ne.s32.totalorder %s93, %s107
      %p109 = scmp.eq.s32.totalorder %s41, 0
      %p110 = por %p108, %p109
      %s112 = sadd.s32 %s111, 1
      %p115 = scmp.eq.s32.totalorder %s35, 1
      %p116 = scmp.ne.s32.totalorder %s111, %s113
      %p117 = scmp.eq.s32.totalorder %s35, 0
      %p118 = por %p116, %p117
      %p119 = scmp.ne.s32.totalorder %s111, %s113
      %p120 = scmp.eq.s32.totalorder %s40, 1
      %p121 = por %p119, %p120
      %p122 = scmp.ne.s32.totalorder %s113, %s114
      %p123 = scmp.eq.s32.totalorder %s40, 0
      %p124 = por %p122, %p123
      %p125 = scmp.ne.s32.totalorder %s113, %s114
      %p126 = scmp.eq.s32.totalorder %s41, 1
      %p127 = por %p125, %p126
      %p129 = scmp.ne.s32.totalorder %s114, %s128
      %p130 = scmp.eq.s32.totalorder %s41, 0
      %p131 = por %p129, %p130
      %s133 = sadd.s32 %s132, 1
      %p136 = scmp.eq.s32.totalorder %s35, 1
      %p137 = scmp.ne.s32.totalorder %s132, %s134
      %p138 = scmp.eq.s32.totalorder %s35, 0
      %p139 = por %p137, %p138
      %p140 = scmp.ne.s32.totalorder %s132, %s134
      %p141 = scmp.eq.s32.totalorder %s40, 1
      %p142 = por %p140, %p141
      %p143 = scmp.ne.s32.totalorder %s134, %s135
      %p144 = scmp.eq.s32.totalorder %s40, 0
      %p145 = por %p143, %p144
      %p146 = scmp.ne.s32.totalorder %s134, %s135
      %p147 = scmp.eq.s32.totalorder %s41, 1
      %p148 = por %p146, %p147
      %p150 = scmp.ne.s32.totalorder %s135, %s149
      %p151 = scmp.eq.s32.totalorder %s41, 0
      %p152 = por %p150, %p151
      %s154 = sadd.s32 %s153, 1
      %p157 = scmp.eq.s32.totalorder %s35, 1
      %p158 = scmp.ne.s32.totalorder %s153, %s155
      %p159 = scmp.eq.s32.totalorder %s35, 0
      %p160 = por %p158, %p159
      %p161 = scmp.ne.s32.totalorder %s153, %s155
      %p162 = scmp.eq.s32.totalorder %s40, 1
      %p163 = por %p161, %p162
      %p164 = scmp.ne.s32.totalorder %s155, %s156
      %p165 = scmp.eq.s32.totalorder %s40, 0
      %p166 = por %p164, %p165
      %p167 = scmp.ne.s32.totalorder %s155, %s156
      %p168 = scmp.eq.s32.totalorder %s41, 1
      %p169 = por %p167, %p168
      %p171 = scmp.ne.s32.totalorder %s156, %s170
      %p172 = scmp.eq.s32.totalorder %s41, 0
      %p173 = por %p171, %p172
      %s175 = sadd.s32 %s174, 1
      %p178 = scmp.eq.s32.totalorder %s35, 1
      %p179 = scmp.ne.s32.totalorder %s174, %s176
      %p180 = scmp.eq.s32.totalorder %s35, 0
      %p181 = por %p179, %p180
      %p182 = scmp.ne.s32.totalorder %s174, %s176
      %p183 = scmp.eq.s32.totalorder %s40, 1
      %p184 = por %p182, %p183
      %p185 = scmp.ne.s32.totalorder %s176, %s177
      %p186 = scmp.eq.s32.totalorder %s40, 0
      %p187 = por %p185, %p186
      %p188 = scmp.ne.s32.totalorder %s176, %s177
      %p189 = scmp.eq.s32.totalorder %s41, 1
      %p190 = por %p188, %p189
      %p192 = scmp.ne.s32.totalorder %s177, %s191
      %p193 = scmp.eq.s32.totalorder %s41, 0
      %p194 = por %p192, %p193
      %s196 = sadd.s32 %s195, 1
      %p199 = scmp.eq.s32.totalorder %s35, 1
      %p200 = scmp.ne.s32.totalorder %s195, %s197
      %p201 = scmp.eq.s32.totalorder %s35, 0
      %p202 = por %p200, %p201
      %p203 = scmp.ne.s32.totalorder %s195, %s197
      %p204 = scmp.eq.s32.totalorder %s40, 1
      %p205 = por %p203, %p204
      %p206 = scmp.ne.s32.totalorder %s197, %s198
      %p207 = scmp.eq.s32.totalorder %s40, 0
      %p208 = por %p206, %p207
      %p209 = scmp.ne.s32.totalorder %s197, %s198
      %p210 = scmp.eq.s32.totalorder %s41, 1
      %p211 = por %p209, %p210
      %p213 = scmp.ne.s32.totalorder %s198, %s212
      %p214 = scmp.eq.s32.totalorder %s41, 0
      %p215 = por %p213, %p214
      %s217 = sadd.s32 %s216, 1
      %p220 = scmp.eq.s32.totalorder %s35, 1
      %p221 = scmp.ne.s32.totalorder %s216, %s218
      %p222 = scmp.eq.s32.totalorder %s35, 0
      %p223 = por %p221, %p222
      %p224 = scmp.ne.s32.totalorder %s216, %s218
      %p225 = scmp.eq.s32.totalorder %s40, 1
      %p226 = por %p224, %p225
      %p227 = scmp.ne.s32.totalorder %s218, %s219
      %p228 = scmp.eq.s32.totalorder %s40, 0
      %p229 = por %p227, %p228
      %p230 = scmp.ne.s32.totalorder %s218, %s219
      %p231 = scmp.eq.s32.totalorder %s41, 1
      %p232 = por %p230, %p231
      %p234 = scmp.ne.s32.totalorder %s219, %s233
      %p235 = scmp.eq.s32.totalorder %s41, 0
      %p236 = por %p234, %p235
      %s238 = sadd.s32 %s237, 1
      %p241 = scmp.eq.s32.totalorder %s35, 1
      %p242 = scmp.ne.s32.totalorder %s237, %s239
      %p243 = scmp.eq.s32.totalorder %s35, 0
      %p244 = por %p242, %p243
      %p245 = scmp.ne.s32.totalorder %s237, %s239
      %p246 = scmp.eq.s32.totalorder %s40, 1
      %p247 = por %p245, %p246
      %p248 = scmp.ne.s32.totalorder %s239, %s240
      %p249 = scmp.eq.s32.totalorder %s40, 0
      %p250 = por %p248, %p249
      %p251 = scmp.ne.s32.totalorder %s239, %s240
      %p252 = scmp.eq.s32.totalorder %s41, 1
      %p253 = por %p251, %p252
      %p255 = scmp.ne.s32.totalorder %s240, %s254
      %p256 = scmp.eq.s32.totalorder %s41, 0
      %p257 = por %p255, %p256
      %s259 = sadd.s32 %s258, 1
      %p262 = scmp.eq.s32.totalorder %s35, 1
      %p263 = scmp.ne.s32.totalorder %s258, %s260
      %p264 = scmp.eq.s32.totalorder %s35, 0
      %p265 = por %p263, %p264
      %p266 = scmp.ne.s32.totalorder %s258, %s260
      %p267 = scmp.eq.s32.totalorder %s40, 1
      %p268 = por %p266, %p267
      %p269 = scmp.ne.s32.totalorder %s260, %s261
      %p270 = scmp.eq.s32.totalorder %s40, 0
      %p271 = por %p269, %p270
      %p272 = scmp.ne.s32.totalorder %s260, %s261
      %p273 = scmp.eq.s32.totalorder %s41, 1
      %p274 = por %p272, %p273
      %p276 = scmp.ne.s32.totalorder %s261, %s275
      %p277 = scmp.eq.s32.totalorder %s41, 0
      %p278 = por %p276, %p277
      %s280 = sadd.s32 %s279, 1
      %p283 = scmp.eq.s32.totalorder %s35, 1
      %p284 = scmp.ne.s32.totalorder %s279, %s281
      %p285 = scmp.eq.s32.totalorder %s35, 0
      %p286 = por %p284, %p285
      %p287 = scmp.ne.s32.totalorder %s279, %s281
      %p288 = scmp.eq.s32.totalorder %s40, 1
      %p289 = por %p287, %p288
      %p290 = scmp.ne.s32.totalorder %s281, %s282
      %p291 = scmp.eq.s32.totalorder %s40, 0
      %p292 = por %p290, %p291
      %p293 = scmp.ne.s32.totalorder %s281, %s282
      %p294 = scmp.eq.s32.totalorder %s41, 1
      %p295 = por %p293, %p294
      %p297 = scmp.ne.s32.totalorder %s282, %s296
      %p298 = scmp.eq.s32.totalorder %s41, 0
      %p299 = por %p297, %p298
      %s301 = sadd.s32 %s300, 1
      %p304 = scmp.eq.s32.totalorder %s35, 1
      %p305 = scmp.ne.s32.totalorder %s300, %s302
      %p306 = scmp.eq.s32.totalorder %s35, 0
      %p307 = por %p305, %p306
      %p308 = scmp.ne.s32.totalorder %s300, %s302
      %p309 = scmp.eq.s32.totalorder %s40, 1
      %p310 = por %p308, %p309
      %p311 = scmp.ne.s32.totalorder %s302, %s303
      %p312 = scmp.eq.s32.totalorder %s40, 0
      %p313 = por %p311, %p312
      %p314 = scmp.ne.s32.totalorder %s302, %s303
      %p315 = scmp.eq.s32.totalorder %s41, 1
      %p316 = por %p314, %p315
      %p318 = scmp.ne.s32.totalorder %s303, %s317
      %p319 = scmp.eq.s32.totalorder %s41, 0
      %p320 = por %p318, %p319
      %s321 = ssub.s32 %s35, %s42
      %p322 = scmp.eq.s32.totalorder %s321, 0
      %s324 = sadd.s32 %s323, 1
      %s325 = scalar_select %p322, %s323, %s324
      %p328 = pneg %p322
      %p329 = scmp.eq.s32.totalorder %s35, 1
      %p330 = por %p328, %p329
      %p331 = scmp.ne.s32.totalorder %s323, %s326
      %p332 = scmp.eq.s32.totalorder %s35, 0
      %p333 = por %p331, %p332
      %p334 = scmp.ne.s32.totalorder %s323, %s326
      %p335 = scmp.eq.s32.totalorder %s40, 1
      %p336 = por %p334, %p335
      %p337 = scmp.ne.s32.totalorder %s326, %s327
      %p338 = scmp.eq.s32.totalorder %s40, 0
      %p339 = por %p337, %p338
      %p340 = scmp.ne.s32.totalorder %s326, %s327
      %p341 = scmp.eq.s32.totalorder %s41, 1
      %p342 = por %p340, %p341
      %p344 = scmp.ne.s32.totalorder %s327, %s343
      %p345 = scmp.eq.s32.totalorder %s41, 0
      %p346 = por %p344, %p345
      %s347 = ssub.s32 %s35, %s42
      %p348 = scmp.eq.s32.totalorder %s347, 0
      %s350 = sadd.s32 %s349, 1
      %s351 = scalar_select %p348, %s349, %s350
      %p354 = pneg %p348
      %p355 = scmp.eq.s32.totalorder %s35, 1
      %p356 = por %p354, %p355
      %p357 = scmp.ne.s32.totalorder %s349, %s352
      %p358 = scmp.eq.s32.totalorder %s35, 0
      %p359 = por %p357, %p358
      %p360 = scmp.ne.s32.totalorder %s349, %s352
      %p361 = scmp.eq.s32.totalorder %s40, 1
      %p362 = por %p360, %p361
      %p363 = scmp.ne.s32.totalorder %s352, %s353
      %p364 = scmp.eq.s32.totalorder %s40, 0
      %p365 = por %p363, %p364
      %p366 = scmp.ne.s32.totalorder %s352, %s353
      %p367 = scmp.eq.s32.totalorder %s41, 1
      %p368 = por %p366, %p367
      %p370 = scmp.ne.s32.totalorder %s353, %s369
      %p371 = scmp.eq.s32.totalorder %s41, 0
      %p372 = por %p370, %p371
      %s373 = ssub.s32 %s35, %s42
      %p374 = scmp.eq.s32.totalorder %s373, 0
      %s376 = sadd.s32 %s375, 1
      %s377 = scalar_select %p374, %s375, %s376
      %p380 = pneg %p374
      %p381 = scmp.eq.s32.totalorder %s35, 1
      %p382 = por %p380, %p381
      %p383 = scmp.ne.s32.totalorder %s375, %s378
      %p384 = scmp.eq.s32.totalorder %s35, 0
      %p385 = por %p383, %p384
      %p386 = scmp.ne.s32.totalorder %s375, %s378
      %p387 = scmp.eq.s32.totalorder %s40, 1
      %p388 = por %p386, %p387
      %p389 = scmp.ne.s32.totalorder %s378, %s379
      %p390 = scmp.eq.s32.totalorder %s40, 0
      %p391 = por %p389, %p390
      %p392 = scmp.ne.s32.totalorder %s378, %s379
      %p393 = scmp.eq.s32.totalorder %s41, 1
      %p394 = por %p392, %p393
      %p396 = scmp.ne.s32.totalorder %s379, %s395
      %p397 = scmp.eq.s32.totalorder %s41, 0
      %p398 = por %p396, %p397
      %s399 = ssub.s32 %s35, %s42
      %p400 = scmp.eq.s32.totalorder %s399, 0
      %s402 = sadd.s32 %s401, 1
      %s403 = scalar_select %p400, %s401, %s402
      %p406 = pneg %p400
      %p407 = scmp.eq.s32.totalorder %s35, 1
      %p408 = por %p406, %p407
      %p409 = scmp.ne.s32.totalorder %s401, %s404
      %p410 = scmp.eq.s32.totalorder %s35, 0
      %p411 = por %p409, %p410
      %p412 = scmp.ne.s32.totalorder %s401, %s404
      %p413 = scmp.eq.s32.totalorder %s40, 1
      %p414 = por %p412, %p413
      %p415 = scmp.ne.s32.totalorder %s404, %s405
      %p416 = scmp.eq.s32.totalorder %s40, 0
      %p417 = por %p415, %p416
      %p418 = scmp.ne.s32.totalorder %s404, %s405
      %p419 = scmp.eq.s32.totalorder %s41, 1
      %p420 = por %p418, %p419
      %p422 = scmp.ne.s32.totalorder %s405, %s421
      %p423 = scmp.eq.s32.totalorder %s41, 0
      %p424 = por %p422, %p423
      %s425 = ssub.s32 %s35, %s42
      %p426 = scmp.eq.s32.totalorder %s425, 0
      %s428 = sadd.s32 %s427, 1
      %s429 = scalar_select %p426, %s427, %s428
      %p432 = pneg %p426
      %p433 = scmp.eq.s32.totalorder %s35, 1
      %p434 = por %p432, %p433
      %p435 = scmp.ne.s32.totalorder %s427, %s430
      %p436 = scmp.eq.s32.totalorder %s35, 0
      %p437 = por %p435, %p436
      %p438 = scmp.ne.s32.totalorder %s427, %s430
      %p439 = scmp.eq.s32.totalorder %s40, 1
      %p440 = por %p438, %p439
      %p441 = scmp.ne.s32.totalorder %s430, %s431
      %p442 = scmp.eq.s32.totalorder %s40, 0
      %p443 = por %p441, %p442
      %p444 = scmp.ne.s32.totalorder %s430, %s431
      %p445 = scmp.eq.s32.totalorder %s41, 1
      %p446 = por %p444, %p445
      %p448 = scmp.ne.s32.totalorder %s431, %s447
      %p449 = scmp.eq.s32.totalorder %s41, 0
      %p450 = por %p448, %p449
      %s451 = ssub.s32 %s35, %s42
      %p452 = scmp.eq.s32.totalorder %s451, 0
      %s454 = sadd.s32 %s453, 1
      %s455 = scalar_select %p452, %s453, %s454
      %p458 = pneg %p452
      %p459 = scmp.eq.s32.totalorder %s35, 1
      %p460 = por %p458, %p459
      %p461 = scmp.ne.s32.totalorder %s453, %s456
      %p462 = scmp.eq.s32.totalorder %s35, 0
      %p463 = por %p461, %p462
      %p464 = scmp.ne.s32.totalorder %s453, %s456
      %p465 = scmp.eq.s32.totalorder %s40, 1
      %p466 = por %p464, %p465
      %p467 = scmp.ne.s32.totalorder %s456, %s457
      %p468 = scmp.eq.s32.totalorder %s40, 0
      %p469 = por %p467, %p468
      %p470 = scmp.ne.s32.totalorder %s456, %s457
      %p471 = scmp.eq.s32.totalorder %s41, 1
      %p472 = por %p470, %p471
      %p474 = scmp.ne.s32.totalorder %s457, %s473
      %p475 = scmp.eq.s32.totalorder %s41, 0
      %p476 = por %p474, %p475
      %p477 = scmp.le.s32.totalorder 1, %s35
      %p478 = scmp.lt.s32.totalorder %s35, 3
      %p479 = pnand %p477, %p478
      %p480 = pneg %p479
      // Predicated region
      $region9: #{tpu_custom_call.1} parent=5 // pred_check
        _
      $region10: #{tpu_custom_call.1} parent=5 // pred_check_branch
        %482 = sbr.rel (%p479) target = $region12
      $region11: #{tpu_custom_call.1} parent=5 // pred_region
        %s483 = ssub.s32 %s35, 1
        // Predicated region
        $region13: #{tpu_custom_call.1} parent=11 // pred_check
          %p484 = pneg %p82
        $region14: #{tpu_custom_call.1} parent=11 // pred_check_branch
          %486 = sbr.rel (%p484) target = $region16
        $region15: #{tpu_custom_call.1} parent=11 // pred_region
          _
        $region16: #{tpu_custom_call.1} parent=11 // pred_fallthru
          _
        // Predicated region
        $region17: #{tpu_custom_call.1} parent=11 // pred_check
          %p487 = pneg %p103
        $region18: #{tpu_custom_call.1} parent=11 // pred_check_branch
          %489 = sbr.rel (%p487) target = $region20
        $region19: #{tpu_custom_call.1} parent=11 // pred_region
          %s491 = ssub.s32 16, 16
          %492 = vsyncadd [#allocation4], %s491
          %s494 = sshll.u32 [#allocation3], 4
          %s495 = int_to_ptr.vmem [resolvable:$true] %s494
          %497 = dma.hbm_to_vmem [thread:$0]  %s2, 16, %s495, [#allocation4]
        $region20: #{tpu_custom_call.1} parent=11 // pred_fallthru
          _
        // Predicated region
        $region21: #{tpu_custom_call.1} parent=11 // pred_check
          %p498 = pneg %p124
        $region22: #{tpu_custom_call.1} parent=11 // pred_check_branch
          %500 = sbr.rel (%p498) target = $region24
        $region23: #{tpu_custom_call.1} parent=11 // pred_region
          %s502 = ssub.s32 256, 256
          %503 = vsyncadd [#allocation7], %s502
          %s504 = sshll.u32 [#allocation6], 4
          %s505 = int_to_ptr.vmem [resolvable:$true] %s504
          %510 = dma.hbm_to_vmem [thread:$0]  %s3, 256, %s505, [#allocation7], 64, 64, 4
        $region24: #{tpu_custom_call.1} parent=11 // pred_fallthru
          _
        // Predicated region
        $region25: #{tpu_custom_call.1} parent=11 // pred_check
          %p511 = pneg %p145
        $region26: #{tpu_custom_call.1} parent=11 // pred_check_branch
          %513 = sbr.rel (%p511) target = $region28
        $region27: #{tpu_custom_call.1} parent=11 // pred_region
          %s515 = ssub.s32 16, 16
          %516 = vsyncadd [#allocation7], %s515
          %s518 = sshll.u32 [#allocation8], 4
          %s519 = int_to_ptr.vmem [resolvable:$true] %s518
          %521 = dma.hbm_to_vmem [thread:$0]  %s4, 16, %s519, [#allocation7]
        $region28: #{tpu_custom_call.1} parent=11 // pred_fallthru
          _
        // Predicated region
        $region29: #{tpu_custom_call.1} parent=11 // pred_check
          %p522 = pneg %p166
        $region30: #{tpu_custom_call.1} parent=11 // pred_check_branch
          %524 = sbr.rel (%p522) target = $region32
        $region31: #{tpu_custom_call.1} parent=11 // pred_region
          %s526 = ssub.s32 16, 16
          %527 = vsyncadd [#allocation10], %s526
          %s529 = sshll.u32 [#allocation9], 4
          %s530 = int_to_ptr.vmem [resolvable:$true] %s529
          %532 = dma.hbm_to_vmem [thread:$0]  %s5, 16, %s530, [#allocation10]
        $region32: #{tpu_custom_call.1} parent=11 // pred_fallthru
          _
        // Predicated region
        $region33: #{tpu_custom_call.1} parent=11 // pred_check
          %p533 = pneg %p187
        $region34: #{tpu_custom_call.1} parent=11 // pred_check_branch
          %535 = sbr.rel (%p533) target = $region36
        $region35: #{tpu_custom_call.1} parent=11 // pred_region
          %s537 = ssub.s32 16, 16
          %538 = vsyncadd [#allocation10], %s537
          %s540 = sshll.u32 [#allocation11], 4
          %s541 = int_to_ptr.vmem [resolvable:$true] %s540
          %543 = dma.hbm_to_vmem [thread:$0]  %s6, 16, %s541, [#allocation10]
        $region36: #{tpu_custom_call.1} parent=11 // pred_fallthru
          _
        // Predicated region
        $region37: #{tpu_custom_call.1} parent=11 // pred_check
          %p544 = pneg %p208
        $region38: #{tpu_custom_call.1} parent=11 // pred_check_branch
          %546 = sbr.rel (%p544) target = $region40
        $region39: #{tpu_custom_call.1} parent=11 // pred_region
          _
        $region40: #{tpu_custom_call.1} parent=11 // pred_fallthru
          _
        // Predicated region
        $region41: #{tpu_custom_call.1} parent=11 // pred_check
          %p547 = pneg %p229
        $region42: #{tpu_custom_call.1} parent=11 // pred_check_branch
          %549 = sbr.rel (%p547) target = $region44
        $region43: #{tpu_custom_call.1} parent=11 // pred_region
          %s551 = ssub.s32 16, 16
          %552 = vsyncadd [#allocation13], %s551
          %s554 = sshll.u32 [#allocation12], 4
          %s555 = int_to_ptr.vmem [resolvable:$true] %s554
          %557 = dma.hbm_to_vmem [thread:$0]  %s8, 16, %s555, [#allocation13]
        $region44: #{tpu_custom_call.1} parent=11 // pred_fallthru
          _
        // Predicated region
        $region45: #{tpu_custom_call.1} parent=11 // pred_check
          %p558 = pneg %p250
        $region46: #{tpu_custom_call.1} parent=11 // pred_check_branch
          %560 = sbr.rel (%p558) target = $region48
        $region47: #{tpu_custom_call.1} parent=11 // pred_region
          _
        $region48: #{tpu_custom_call.1} parent=11 // pred_fallthru
          _
        // Predicated region
        $region49: #{tpu_custom_call.1} parent=11 // pred_check
          %p561 = pneg %p271
        $region50: #{tpu_custom_call.1} parent=11 // pred_check_branch
          %563 = sbr.rel (%p561) target = $region52
        $region51: #{tpu_custom_call.1} parent=11 // pred_region
          _
        $region52: #{tpu_custom_call.1} parent=11 // pred_fallthru
          _
        // Predicated region
        $region53: #{tpu_custom_call.1} parent=11 // pred_check
          %p564 = pneg %p292
        $region54: #{tpu_custom_call.1} parent=11 // pred_check_branch
          %566 = sbr.rel (%p564) target = $region56
        $region55: #{tpu_custom_call.1} parent=11 // pred_region
          _
        $region56: #{tpu_custom_call.1} parent=11 // pred_fallthru
          _
        // Predicated region
        $region57: #{tpu_custom_call.1} parent=11 // pred_check
          %p567 = pneg %p313
        $region58: #{tpu_custom_call.1} parent=11 // pred_check_branch
          %569 = sbr.rel (%p567) target = $region60
        $region59: #{tpu_custom_call.1} parent=11 // pred_region
          _
        $region60: #{tpu_custom_call.1} parent=11 // pred_fallthru
          _
      $region12: #{tpu_custom_call.1} parent=5 // pred_fallthru
        _
      %p570 = scmp.lt.s32.totalorder %s35, 2
      // Predicated region
      $region61: #{tpu_custom_call.1} parent=5 // pred_check
        %p571 = pneg %p570
      $region62: #{tpu_custom_call.1} parent=5 // pred_check_branch
        %573 = sbr.rel (%p571) target = $region64
      $region63: #{tpu_custom_call.1} parent=5 // pred_region
        // Predicated region
        $region65: #{tpu_custom_call.1} parent=63 // pred_check
          %p574 = pneg %p55
        $region66: #{tpu_custom_call.1} parent=63 // pred_check_branch
          %576 = sbr.rel (%p574) target = $region68
        $region67: #{tpu_custom_call.1} parent=63 // pred_region
          %p577 = scmp.lt.s32.totalorder %s35, 1
          %s578 = scalar_select %p577, %s35, 1
          %s579 = smul.addr %s578, 2
          %s580 = smul.addr %s579, 8
          %s581 = scalar_lea.vmem %s0, %s580
        $region68: #{tpu_custom_call.1} parent=63 // pred_fallthru
          _
        // Predicated region
        $region69: #{tpu_custom_call.1} parent=63 // pred_check
          %p582 = pneg %p333
        $region70: #{tpu_custom_call.1} parent=63 // pred_check_branch
          %584 = sbr.rel (%p582) target = $region72
        $region71: #{tpu_custom_call.1} parent=63 // pred_region
          %p585 = scmp.lt.s32.totalorder %s35, 1
          %s586 = scalar_select %p585, %s35, 1
          %s587 = scalar_lea.vmem %s13, %s586
        $region72: #{tpu_custom_call.1} parent=63 // pred_fallthru
          _
        // Predicated region
        $region73: #{tpu_custom_call.1} parent=63 // pred_check
          %p588 = pneg %p359
        $region74: #{tpu_custom_call.1} parent=63 // pred_check_branch
          %590 = sbr.rel (%p588) target = $region76
        $region75: #{tpu_custom_call.1} parent=63 // pred_region
          %p591 = scmp.lt.s32.totalorder %s35, 1
          %s592 = scalar_select %p591, %s35, 1
          %s593 = smul.addr %s592, 2
          %s594 = smul.addr %s593, 8
          %s595 = scalar_lea.vmem %s14, %s594
        $region76: #{tpu_custom_call.1} parent=63 // pred_fallthru
          _
        // Predicated region
        $region77: #{tpu_custom_call.1} parent=63 // pred_check
          %p596 = pneg %p385
        $region78: #{tpu_custom_call.1} parent=63 // pred_check_branch
          %598 = sbr.rel (%p596) target = $region80
        $region79: #{tpu_custom_call.1} parent=63 // pred_region
          %p599 = scmp.lt.s32.totalorder %s35, 1
          %s600 = scalar_select %p599, %s35, 1
          %s601 = scalar_lea.vmem %s15, %s600
        $region80: #{tpu_custom_call.1} parent=63 // pred_fallthru
          _
        // Predicated region
        $region81: #{tpu_custom_call.1} parent=63 // pred_check
          %p602 = pneg %p411
        $region82: #{tpu_custom_call.1} parent=63 // pred_check_branch
          %604 = sbr.rel (%p602) target = $region84
        $region83: #{tpu_custom_call.1} parent=63 // pred_region
          %p605 = scmp.lt.s32.totalorder %s35, 1
          %s606 = scalar_select %p605, %s35, 1
          %s607 = scalar_lea.vmem %s16, %s606
        $region84: #{tpu_custom_call.1} parent=63 // pred_fallthru
          _
      $region64: #{tpu_custom_call.1} parent=5 // pred_fallthru
        _
      %p608 = scmp.le.s32.totalorder 1, %s35
      %p609 = scmp.lt.s32.totalorder %s35, 3
      %p610 = pnand %p608, %p609
      %p611 = pneg %p610
      // Predicated region
      $region85: #{tpu_custom_call.1} parent=5 // pred_check
        _
      $region86: #{tpu_custom_call.1} parent=5 // pred_check_branch
        %613 = sbr.rel (%p610) target = $region88
      $region87: #{tpu_custom_call.1} parent=5 // pred_region
        %s614 = ssub.s32 %s35, 1
        // Predicated region
        $region89: #{tpu_custom_call.1} parent=87 // pred_check
          %p615 = pneg %p103
        $region90: #{tpu_custom_call.1} parent=87 // pred_check_branch
          %617 = sbr.rel (%p615) target = $region92
        $region91: #{tpu_custom_call.1} parent=87 // pred_region
          %618 = dma.done [#allocation4], 16
        $region92: #{tpu_custom_call.1} parent=87 // pred_fallthru
          _
        // Predicated region
        $region93: #{tpu_custom_call.1} parent=87 // pred_check
          %p619 = pneg %p124
        $region94: #{tpu_custom_call.1} parent=87 // pred_check_branch
          %621 = sbr.rel (%p619) target = $region96
        $region95: #{tpu_custom_call.1} parent=87 // pred_region
          %622 = dma.done [#allocation7], 256
        $region96: #{tpu_custom_call.1} parent=87 // pred_fallthru
          _
        // Predicated region
        $region97: #{tpu_custom_call.1} parent=87 // pred_check
          %p623 = pneg %p145
        $region98: #{tpu_custom_call.1} parent=87 // pred_check_branch
          %625 = sbr.rel (%p623) target = $region100
        $region99: #{tpu_custom_call.1} parent=87 // pred_region
          %626 = dma.done [#allocation7], 16
        $region100: #{tpu_custom_call.1} parent=87 // pred_fallthru
          _
        // Predicated region
        $region101: #{tpu_custom_call.1} parent=87 // pred_check
          %p627 = pneg %p166
        $region102: #{tpu_custom_call.1} parent=87 // pred_check_branch
          %629 = sbr.rel (%p627) target = $region104
        $region103: #{tpu_custom_call.1} parent=87 // pred_region
          %630 = dma.done [#allocation10], 16
        $region104: #{tpu_custom_call.1} parent=87 // pred_fallthru
          _
        // Predicated region
        $region105: #{tpu_custom_call.1} parent=87 // pred_check
          %p631 = pneg %p187
        $region106: #{tpu_custom_call.1} parent=87 // pred_check_branch
          %633 = sbr.rel (%p631) target = $region108
        $region107: #{tpu_custom_call.1} parent=87 // pred_region
          %634 = dma.done [#allocation10], 16
        $region108: #{tpu_custom_call.1} parent=87 // pred_fallthru
          _
        // Predicated region
        $region109: #{tpu_custom_call.1} parent=87 // pred_check
          %p635 = pneg %p229
        $region110: #{tpu_custom_call.1} parent=87 // pred_check_branch
          %637 = sbr.rel (%p635) target = $region112
        $region111: #{tpu_custom_call.1} parent=87 // pred_region
          %638 = dma.done [#allocation13], 16
        $region112: #{tpu_custom_call.1} parent=87 // pred_fallthru
          _
        %p639 = scmp.lt.s32.totalorder %s40, 1
        %s640 = scalar_select %p639, %s40, 1
        %s641 = smul.addr %s640, 2
        %s642 = smul.addr %s641, 8
        %s643 = scalar_lea.vmem %s0, %s642
        %p644 = pneg %p61
        %p645 = pneg %p58
        %p646 = pneg %p82
        %p647 = pneg %p79
        %p648 = pneg %p103
        %p649 = pneg %p100
        %p650 = pneg %p124
        %p651 = pneg %p121
        %p652 = pneg %p145
        %p653 = pneg %p142
        %p654 = pneg %p166
        %p655 = pneg %p163
        %p656 = pneg %p187
        %p657 = pneg %p184
        %p658 = pneg %p208
        %p659 = pneg %p205
        %p660 = pneg %p229
        %p661 = pneg %p226
        %p662 = pneg %p250
        %p663 = pneg %p247
        %p664 = pneg %p271
        %p665 = pneg %p268
        %p666 = pneg %p292
        %p667 = pneg %p289
        %p668 = pneg %p313
        %p669 = pneg %p310
        %p670 = scmp.lt.s32.totalorder %s40, 1
        %s671 = scalar_select %p670, %s40, 1
        %s672 = scalar_lea.vmem %s13, %s671
        %p673 = pneg %p339
        %p674 = pneg %p336
        %p675 = scmp.lt.s32.totalorder %s40, 1
        %s676 = scalar_select %p675, %s40, 1
        %s677 = smul.addr %s676, 2
        %s678 = smul.addr %s677, 8
        %s679 = scalar_lea.vmem %s14, %s678
        %p680 = pneg %p365
        %p681 = pneg %p362
        %p682 = scmp.lt.s32.totalorder %s40, 1
        %s683 = scalar_select %p682, %s40, 1
        %s684 = scalar_lea.vmem %s15, %s683
        %p685 = pneg %p391
        %p686 = pneg %p388
        %p687 = scmp.lt.s32.totalorder %s40, 1
        %s688 = scalar_select %p687, %s40, 1
        %s689 = scalar_lea.vmem %s16, %s688
        %p690 = pneg %p417
        %p691 = pneg %p414
        %p692 = pneg %p443
        %p693 = pneg %p440
        %s694 = sand.u32 %s430, 1
        %s695 = scalar_lea.sflag [#allocation5], %s694
        %s696 = sand.u32 %s430, 1
        %s697 = smul.addr %s696, 16
        %s698 = scalar_lea.vmem [#allocation14], %s697
        %p699 = pneg %p469
        %p700 = pneg %p466
        %s701 = sand.u32 %s456, 1
        %s702 = scalar_lea.sflag [#allocation16], %s701
        %s703 = sand.u32 %s456, 1
        %s704 = smul.addr %s703, 16
        %s705 = scalar_lea.vmem [#allocation15], %s704
        %p706 = scmp.lt.s32.totalorder %s40, 1
        %s707 = scalar_select %p706, %s40, 1
        %s708 = smul.addr %s707, 2
        %s709 = smul.addr %s708, 8
        %s710 = scalar_lea.vmem %s0, %s709
        %p711 = scmp.lt.s32.totalorder %s40, 1
        %s712 = scalar_select %p711, %s40, 1
        %s713 = scalar_lea.vmem %s13, %s712
        %p714 = scmp.lt.s32.totalorder %s40, 1
        %s715 = scalar_select %p714, %s40, 1
        %s716 = smul.addr %s715, 2
        %s717 = smul.addr %s716, 8
        %s718 = scalar_lea.vmem %s14, %s717
        %p719 = scmp.lt.s32.totalorder %s40, 1
        %s720 = scalar_select %p719, %s40, 1
        %s721 = scalar_lea.vmem %s15, %s720
        %p722 = scmp.lt.s32.totalorder %s40, 1
        %s723 = scalar_select %p722, %s40, 1
        %s724 = scalar_lea.vmem %s16, %s723
        %v726 = vld [vmem:[%s710] sm:$0xff]
        %v727 = vld [vmem:[%s710 + $0x8] sm:$0xff]
        %v728 = vld [vmem:[%s713] sm:$0x1]
        %v729 = vld [vmem:[%s718] sm:$0xff]
        %v730 = vld [vmem:[%s718 + $0x8] sm:$0xff]
        %v731 = vld [vmem:[%s1] sm:$0xf]
        %v732 = vld [vmem:[%s1 + $0x4] sm:$0xf]
        %v733 = vld [vmem:[%s1 + $0x8] sm:$0xf]
        %v734 = vld [vmem:[%s1 + $0xc] sm:$0xf]
        %v735 = vpack.c.bf16 %v727, %v726
        %v736 = vld [vmem:[#allocation3] sm:$0x1]
        %v738 = vlaneseq
        %v739 = vshrl.u32 %v738, 7
        %v740 = vsub.s32 0, %v739
        %v741 = vrot.slane %v736, %v740
        %v747 = vunpack.c.l.b16 %v731
        %v748 = vunpack.c.l.b16 %v732
        %v749 = vunpack.c.l.b16 %v733
        %v750 = vunpack.c.l.b16 %v734
        %v751 = vpack.c.b16 %v748, %v747
        %v752 = vpack.c.b16 %v750, %v749
        %vm755 = vcmask 261120
        %v757 = vsel %vm755, %v735, 0
        %759 = vmatprep.subr.bf16.mxu0 0
        %760 = vmatpush1.bf16.msra.mxu0 %v751
        %761 = vmatprep.subr.bf16.mxu0 0
        %762 = vmatpush1.bf16.msra.mxu0 %v752
        %763 = vmatprep.subr.bf16.mxu0 0
        %764 = vmatpush1.bf16.msra.mxu0 0
        %765 = vmatprep.subr.bf16.mxu0 0
        %766 = vmatpush1.bf16.msra.mxu0 0
        %767 = vmatprep.subr.bf16.mxu0 0
        %768 = vmatpush1.bf16.msra.mxu0 0
        %769 = vmatprep.subr.bf16.mxu0 0
        %770 = vmatpush1.bf16.msra.mxu0 0
        %771 = vmatprep.subr.bf16.mxu0 0
        %772 = vmatpush1.bf16.msra.mxu0 0
        %773 = vmatprep.subr.bf16.mxu0 0
        %774 = vmatpush1.bf16.msra.mxu0 0
        %775 = vmatprep.subr.bf16.mxu0 0
        %776 = vmatpush1.bf16.msra.mxu0 0
        %777 = vmatprep.subr.bf16.mxu0 0
        %778 = vmatpush1.bf16.msra.mxu0 0
        %779 = vmatprep.subr.bf16.mxu0 0
        %780 = vmatpush1.bf16.msra.mxu0 0
        %781 = vmatprep.subr.bf16.mxu0 0
        %782 = vmatpush1.bf16.msra.mxu0 0
        %783 = vmatprep.subr.bf16.mxu0 0
        %784 = vmatpush1.bf16.msra.mxu0 0
        %785 = vmatprep.subr.bf16.mxu0 0
        %786 = vmatpush1.bf16.msra.mxu0 0
        %787 = vmatprep.subr.bf16.mxu0 0
        %788 = vmatpush1.bf16.msra.mxu0 0
        %789 = vmatprep.subr.bf16.mxu0 0
        %790 = vmatpush1.bf16.msra.mxu0 0
        %791 = vmatprep.mubr.bf16.mxu0 0
        %792 = vmatmul.mubr.bf16.gmra.mrb[0].mxu0 %v757
        %v793 = vpop.f32.mrb[0].mxu0
        %v794 = vadd.f32 %v741, %v793
        %v795 = vpop.f32.mrb[0].mxu0
        %v796 = vpop.f32.mrb[0].mxu0
        %v797 = vadd.f32 %v741, %v796
        %v798 = vpop.f32.mrb[0].mxu0
        %799 = vdwg.mxu0
        %v800 = vpack.c.bf16 %v797, %v794
        %802 = vrot.lane.b32.xlu0 %v800, 96
        %v803 = vpop.permute.xlu0 %802
        %vm804 = vcmask 130048
        %v806 = vsel %vm804, %v800, 0
        %v809 = vsel %vm804, %v803, 0
        %811 = vmatprep.subr.bf16.mxu0 0
        %812 = vmatpush1.bf16.xpose.msra.mxu0 %v809
        %813 = vmatprep.subr.bf16.mxu0 0
        %814 = vmatpush1.bf16.xpose.msra.mxu0 0
        %815 = vmatprep.subr.bf16.mxu0 0
        %816 = vmatpush1.bf16.xpose.msra.mxu0 0
        %817 = vmatprep.subr.bf16.mxu0 0
        %818 = vmatpush1.bf16.xpose.msra.mxu0 0
        %819 = vmatprep.subr.bf16.mxu0 0
        %820 = vmatpush1.bf16.xpose.msra.mxu0 0
        %821 = vmatprep.subr.bf16.mxu0 0
        %822 = vmatpush1.bf16.xpose.msra.mxu0 0
        %823 = vmatprep.subr.bf16.mxu0 0
        %824 = vmatpush1.bf16.xpose.msra.mxu0 0
        %825 = vmatprep.subr.bf16.mxu0 0
        %826 = vmatpush1.bf16.xpose.msra.mxu0 0
        %827 = vmatprep.subr.bf16.mxu0 0
        %828 = vmatpush1.bf16.xpose.msra.mxu0 0
        %829 = vmatprep.subr.bf16.mxu0 0
        %830 = vmatpush1.bf16.xpose.msra.mxu0 0
        %831 = vmatprep.subr.bf16.mxu0 0
        %832 = vmatpush1.bf16.xpose.msra.mxu0 0
        %833 = vmatprep.subr.bf16.mxu0 0
        %834 = vmatpush1.bf16.xpose.msra.mxu0 0
        %835 = vmatprep.subr.bf16.mxu0 0
        %836 = vmatpush1.bf16.xpose.msra.mxu0 0
        %837 = vmatprep.subr.bf16.mxu0 0
        %838 = vmatpush1.bf16.xpose.msra.mxu0 0
        %839 = vmatprep.subr.bf16.mxu0 0
        %840 = vmatpush1.bf16.xpose.msra.mxu0 0
        %841 = vmatprep.subr.bf16.mxu0 0
        %842 = vmatpush1.bf16.xpose.msra.mxu0 0
        %843 = vmatprep.mubr.bf16.mxu0 0
        %844 = vmatmul.mubr.bf16.gmra.mrb[0].mxu0 %v806
        %v845 = vpop.f32.mrb[0].mxu0
        %v846 = vadd.f32 0.0, %v845
        %v847 = vpop.f32.mrb[0].mxu0
        %v848 = vpop.f32.mrb[0].mxu0
        %v849 = vadd.f32 0.0, %v848
        %v850 = vpop.f32.mrb[0].mxu0
        %851 = vdwg.mxu0
        %vm852 = vcmp.gt.f32.partialorder %v728, 0.5
        %v853 = vsel %vm852, 1, 0
        %v854 = vlaneseq
        %v855 = vshrl.u32 %v854, 7
        %v856 = vsub.s32 0, %v855
        %v857 = vrot.slane %v853, %v856
        %vm858 = vcmp.eq.s32.totalorder %v857, 1
        %v859 = vsel %vm858, -1e+30, %v846
        %v860 = vsel %vm858, -1e+30, %v849
        %v861 = vsel %vm804, %v859, -inf
        %862 = vmax.xlane.f32.xlu0 %v861
        %v863 = vpop.xlane.xlu0 %862
        %v864 = vsel %vm804, %v860, -inf
        %865 = vmax.xlane.f32.xlu0 %v864
        %v866 = vpop.xlane.xlu0 %865
        %v867 = vsub.f32 %v859, %v863
        %v868 = vsub.f32 %v860, %v866
        %v869 = vmul.f32 %v867, 1.442695
        %v870 = vpow.pop %v869
        %v871 = vmul.f32 %v868, 1.442695
        %v872 = vpow.pop %v871
        %v873 = vsel %vm804, %v870, 0.0
        %874 = vadd.xlane.f32.xlu0 %v873
        %v875 = vpop.xlane.xlu0 %874
        %v876 = vsel %vm804, %v872, 0.0
        %877 = vadd.xlane.f32.xlu0 %v876
        %v878 = vpop.xlane.xlu0 %877
        %v879 = vrcp.pop %v875
        %v880 = vrcp.pop %v878
        %v881 = vmul.f32 %v870, %v879
        %v882 = vmul.f32 %v872, %v880
        %v883 = vpack.c.bf16 %v882, %v881
        %v885 = vunpack.c.l.b16 %v883
        %v886 = vunpack.c.h.b16 %v883
        %v887 = vpack.c.b16 %v885, %v885
        %v888 = vpack.c.b16 %v886, %v886
        %vm891 = vcmask 125952
        %892 = vst.msk [vmem:[%s705] sm:$0xf] %vm891, %v887
        %893 = vst.msk [vmem:[%s705 + $0x4] sm:$0xf] %vm891, %v888
        %894 = vrot.lane.b32.xlu0 %v800, 64
        %v895 = vpop.permute.xlu0 %894
        %v898 = vsel %vm804, %v883, 0
        %900 = vmatprep.subr.bf16.mxu0 0
        %901 = vmatpush1.bf16.msra.mxu0 %v895
        %902 = vmatprep.subr.bf16.mxu0 0
        %903 = vmatpush1.bf16.msra.mxu0 0
        %904 = vmatprep.subr.bf16.mxu0 0
        %905 = vmatpush1.bf16.msra.mxu0 0
        %906 = vmatprep.subr.bf16.mxu0 0
        %907 = vmatpush1.bf16.msra.mxu0 0
        %908 = vmatprep.subr.bf16.mxu0 0
        %909 = vmatpush1.bf16.msra.mxu0 0
        %910 = vmatprep.subr.bf16.mxu0 0
        %911 = vmatpush1.bf16.msra.mxu0 0
        %912 = vmatprep.subr.bf16.mxu0 0
        %913 = vmatpush1.bf16.msra.mxu0 0
        %914 = vmatprep.subr.bf16.mxu0 0
        %915 = vmatpush1.bf16.msra.mxu0 0
        %916 = vmatprep.subr.bf16.mxu0 0
        %917 = vmatpush1.bf16.msra.mxu0 0
        %918 = vmatprep.subr.bf16.mxu0 0
        %919 = vmatpush1.bf16.msra.mxu0 0
        %920 = vmatprep.subr.bf16.mxu0 0
        %921 = vmatpush1.bf16.msra.mxu0 0
        %922 = vmatprep.subr.bf16.mxu0 0
        %923 = vmatpush1.bf16.msra.mxu0 0
        %924 = vmatprep.subr.bf16.mxu0 0
        %925 = vmatpush1.bf16.msra.mxu0 0
        %926 = vmatprep.subr.bf16.mxu0 0
        %927 = vmatpush1.bf16.msra.mxu0 0
        %928 = vmatprep.subr.bf16.mxu0 0
        %929 = vmatpush1.bf16.msra.mxu0 0
        %930 = vmatprep.subr.bf16.mxu0 0
        %931 = vmatpush1.bf16.msra.mxu0 0
        %932 = vmatprep.mubr.bf16.mxu0 0
        %933 = vmatmul.mubr.bf16.gmra.mrb[0].mxu0 %v898
        %v934 = vpop.f32.mrb[0].mxu0
        %v935 = vadd.f32 0.0, %v934
        %v936 = vpop.f32.mrb[0].mxu0
        %v937 = vpop.f32.mrb[0].mxu0
        %v938 = vadd.f32 0.0, %v937
        %v939 = vpop.f32.mrb[0].mxu0
        %940 = vdwg.mxu0
        %941 = vrot.lane.b32.xlu0 %v800, 112
        %v942 = vpop.permute.xlu0 %941
        %943 = vrot.lane.b32.xlu0 %v800, 80
        %v944 = vpop.permute.xlu0 %943
        %v946 = vsel %vm804, %v942, 0
        %v949 = vsel %vm804, %v944, 0
        %951 = vmatprep.subr.bf16.mxu0 0
        %952 = vmatpush1.bf16.xpose.msra.mxu0 %v949
        %953 = vmatprep.subr.bf16.mxu0 0
        %954 = vmatpush1.bf16.xpose.msra.mxu0 0
        %955 = vmatprep.subr.bf16.mxu0 0
        %956 = vmatpush1.bf16.xpose.msra.mxu0 0
        %957 = vmatprep.subr.bf16.mxu0 0
        %958 = vmatpush1.bf16.xpose.msra.mxu0 0
        %959 = vmatprep.subr.bf16.mxu0 0
        %960 = vmatpush1.bf16.xpose.msra.mxu0 0
        %961 = vmatprep.subr.bf16.mxu0 0
        %962 = vmatpush1.bf16.xpose.msra.mxu0 0
        %963 = vmatprep.subr.bf16.mxu0 0
        %964 = vmatpush1.bf16.xpose.msra.mxu0 0
        %965 = vmatprep.subr.bf16.mxu0 0
        %966 = vmatpush1.bf16.xpose.msra.mxu0 0
        %967 = vmatprep.subr.bf16.mxu0 0
        %968 = vmatpush1.bf16.xpose.msra.mxu0 0
        %969 = vmatprep.subr.bf16.mxu0 0
        %970 = vmatpush1.bf16.xpose.msra.mxu0 0
        %971 = vmatprep.subr.bf16.mxu0 0
        %972 = vmatpush1.bf16.xpose.msra.mxu0 0
        %973 = vmatprep.subr.bf16.mxu0 0
        %974 = vmatpush1.bf16.xpose.msra.mxu0 0
        %975 = vmatprep.subr.bf16.mxu0 0
        %976 = vmatpush1.bf16.xpose.msra.mxu0 0
        %977 = vmatprep.subr.bf16.mxu0 0
        %978 = vmatpush1.bf16.xpose.msra.mxu0 0
        %979 = vmatprep.subr.bf16.mxu0 0
        %980 = vmatpush1.bf16.xpose.msra.mxu0 0
        %981 = vmatprep.subr.bf16.mxu0 0
        %982 = vmatpush1.bf16.xpose.msra.mxu0 0
        %983 = vmatprep.mubr.bf16.mxu0 0
        %984 = vmatmul.mubr.bf16.gmra.mrb[0].mxu0 %v946
        %v985 = vpop.f32.mrb[0].mxu0
        %v986 = vadd.f32 0.0, %v985
        %v987 = vpop.f32.mrb[0].mxu0
        %v988 = vpop.f32.mrb[0].mxu0
        %v989 = vadd.f32 0.0, %v988
        %v990 = vpop.f32.mrb[0].mxu0
        %991 = vdwg.mxu0
        %v992 = vsel %vm858, -1e+30, %v986
        %v993 = vsel %vm858, -1e+30, %v989
        %v994 = vsel %vm804, %v992, -inf
        %995 = vmax.xlane.f32.xlu0 %v994
        %v996 = vpop.xlane.xlu0 %995
        %v997 = vsel %vm804, %v993, -inf
        %998 = vmax.xlane.f32.xlu0 %v997
        %v999 = vpop.xlane.xlu0 %998
        %v1000 = vsub.f32 %v992, %v996
        %v1001 = vsub.f32 %v993, %v999
        %v1002 = vmul.f32 %v1000, 1.442695
        %v1003 = vpow.pop %v1002
        %v1004 = vmul.f32 %v1001, 1.442695
        %v1005 = vpow.pop %v1004
        %v1006 = vsel %vm804, %v1003, 0.0
        %1007 = vadd.xlane.f32.xlu0 %v1006
        %v1008 = vpop.xlane.xlu0 %1007
        %v1009 = vsel %vm804, %v1005, 0.0
        %1010 = vadd.xlane.f32.xlu0 %v1009
        %v1011 = vpop.xlane.xlu0 %1010
        %v1012 = vrcp.pop %v1008
        %v1013 = vrcp.pop %v1011
        %v1014 = vmul.f32 %v1003, %v1012
        %v1015 = vmul.f32 %v1005, %v1013
        %v1016 = vpack.c.bf16 %v1015, %v1014
        %v1018 = vunpack.c.l.b16 %v1016
        %v1019 = vunpack.c.h.b16 %v1016
        %v1020 = vpack.c.b16 %v1018, %v1018
        %v1021 = vpack.c.b16 %v1019, %v1019
        %s1024 = scalar_lea.vmem %s705, 8 [#allocation15]
        %1025 = vst.msk [vmem:[%s1024] sm:$0xf] %vm891, %v1020
        %1026 = vst.msk [vmem:[%s1024 + $0x4] sm:$0xf] %vm891, %v1021
        %1027 = vrot.lane.b32.xlu0 %v800, 48
        %v1028 = vpop.permute.xlu0 %1027
        %v1031 = vsel %vm804, %v1016, 0
        %1033 = vmatprep.subr.bf16.mxu0 0
        %1034 = vmatpush1.bf16.msra.mxu0 %v1028
        %1035 = vmatprep.subr.bf16.mxu0 0
        %1036 = vmatpush1.bf16.msra.mxu0 0
        %1037 = vmatprep.subr.bf16.mxu0 0
        %1038 = vmatpush1.bf16.msra.mxu0 0
        %1039 = vmatprep.subr.bf16.mxu0 0
        %1040 = vmatpush1.bf16.msra.mxu0 0
        %1041 = vmatprep.subr.bf16.mxu0 0
        %1042 = vmatpush1.bf16.msra.mxu0 0
        %1043 = vmatprep.subr.bf16.mxu0 0
        %1044 = vmatpush1.bf16.msra.mxu0 0
        %1045 = vmatprep.subr.bf16.mxu0 0
        %1046 = vmatpush1.bf16.msra.mxu0 0
        %1047 = vmatprep.subr.bf16.mxu0 0
        %1048 = vmatpush1.bf16.msra.mxu0 0
        %1049 = vmatprep.subr.bf16.mxu0 0
        %1050 = vmatpush1.bf16.msra.mxu0 0
        %1051 = vmatprep.subr.bf16.mxu0 0
        %1052 = vmatpush1.bf16.msra.mxu0 0
        %1053 = vmatprep.subr.bf16.mxu0 0
        %1054 = vmatpush1.bf16.msra.mxu0 0
        %1055 = vmatprep.subr.bf16.mxu0 0
        %1056 = vmatpush1.bf16.msra.mxu0 0
        %1057 = vmatprep.subr.bf16.mxu0 0
        %1058 = vmatpush1.bf16.msra.mxu0 0
        %1059 = vmatprep.subr.bf16.mxu0 0
        %1060 = vmatpush1.bf16.msra.mxu0 0
        %1061 = vmatprep.subr.bf16.mxu0 0
        %1062 = vmatpush1.bf16.msra.mxu0 0
        %1063 = vmatprep.subr.bf16.mxu0 0
        %1064 = vmatpush1.bf16.msra.mxu0 0
        %1065 = vmatprep.mubr.bf16.mxu0 0
        %1066 = vmatmul.mubr.bf16.gmra.mrb[0].mxu0 %v1031
        %v1067 = vpop.f32.mrb[0].mxu0
        %v1068 = vadd.f32 0.0, %v1067
        %v1069 = vpop.f32.mrb[0].mxu0
        %v1070 = vpop.f32.mrb[0].mxu0
        %v1071 = vadd.f32 0.0, %v1070
        %v1072 = vpop.f32.mrb[0].mxu0
        %1073 = vdwg.mxu0
        %1076 = vrot.lane.b32.xlu0 %v1068, 16
        %v1077 = vpop.permute.xlu0 %1076
        %1078 = vrot.lane.b32.xlu0 %v1071, 16
        %v1079 = vpop.permute.xlu0 %1078
        %v1082 = vsel %vm804, %v935, %v1077
        %v1083 = vsel %vm804, %v938, %v1079
        %v1084 = vld [vmem:[#allocation6] sm:$0xf]
        %v1085 = vld [vmem:[#allocation6 + $0x4] sm:$0xf]
        %v1086 = vld [vmem:[#allocation6 + $0x8] sm:$0xf]
        %v1087 = vld [vmem:[#allocation6 + $0xc] sm:$0xf]
        %v1088 = vpack.c.bf16 %v1083, %v1082
        %v1089 = vld [vmem:[#allocation8] sm:$0x1]
        %v1091 = vlaneseq
        %v1092 = vshrl.u32 %v1091, 7
        %v1093 = vsub.s32 0, %v1092
        %v1094 = vrot.slane %v1089, %v1093
        %v1100 = vunpack.c.l.b16 %v1084
        %v1101 = vunpack.c.l.b16 %v1085
        %v1102 = vunpack.c.l.b16 %v1086
        %v1103 = vunpack.c.l.b16 %v1087
        %v1104 = vpack.c.b16 %v1101, %v1100
        %v1105 = vpack.c.b16 %v1103, %v1102
        %v1109 = vsel %vm755, %v1088, 0
        %1111 = vmatprep.subr.bf16.mxu0 0
        %1112 = vmatpush1.bf16.msra.mxu0 %v1104
        %1113 = vmatprep.subr.bf16.mxu0 0
        %1114 = vmatpush1.bf16.msra.mxu0 %v1105
        %1115 = vmatprep.subr.bf16.mxu0 0
        %1116 = vmatpush1.bf16.msra.mxu0 0
        %1117 = vmatprep.subr.bf16.mxu0 0
        %1118 = vmatpush1.bf16.msra.mxu0 0
        %1119 = vmatprep.subr.bf16.mxu0 0
        %1120 = vmatpush1.bf16.msra.mxu0 0
        %1121 = vmatprep.subr.bf16.mxu0 0
        %1122 = vmatpush1.bf16.msra.mxu0 0
        %1123 = vmatprep.subr.bf16.mxu0 0
        %1124 = vmatpush1.bf16.msra.mxu0 0
        %1125 = vmatprep.subr.bf16.mxu0 0
        %1126 = vmatpush1.bf16.msra.mxu0 0
        %1127 = vmatprep.subr.bf16.mxu0 0
        %1128 = vmatpush1.bf16.msra.mxu0 0
        %1129 = vmatprep.subr.bf16.mxu0 0
        %1130 = vmatpush1.bf16.msra.mxu0 0
        %1131 = vmatprep.subr.bf16.mxu0 0
        %1132 = vmatpush1.bf16.msra.mxu0 0
        %1133 = vmatprep.subr.bf16.mxu0 0
        %1134 = vmatpush1.bf16.msra.mxu0 0
        %1135 = vmatprep.subr.bf16.mxu0 0
        %1136 = vmatpush1.bf16.msra.mxu0 0
        %1137 = vmatprep.subr.bf16.mxu0 0
        %1138 = vmatpush1.bf16.msra.mxu0 0
        %1139 = vmatprep.subr.bf16.mxu0 0
        %1140 = vmatpush1.bf16.msra.mxu0 0
        %1141 = vmatprep.subr.bf16.mxu0 0
        %1142 = vmatpush1.bf16.msra.mxu0 0
        %1143 = vmatprep.mubr.bf16.mxu0 0
        %1144 = vmatmul.mubr.bf16.gmra.mrb[0].mxu0 %v1109
        %v1145 = vpop.f32.mrb[0].mxu0
        %v1146 = vadd.f32 %v1094, %v1145
        %v1147 = vpop.f32.mrb[0].mxu0
        %v1148 = vpop.f32.mrb[0].mxu0
        %v1149 = vadd.f32 %v1094, %v1148
        %v1150 = vpop.f32.mrb[0].mxu0
        %1151 = vdwg.mxu0
        %v1152 = vadd.f32 %v1146, %v726
        %v1153 = vadd.f32 %v1149, %v727
        %v1154 = vsel %vm755, %v1152, 0.0
        %1155 = vadd.xlane.f32.xlu0 %v1154
        %v1156 = vpop.xlane.xlu0 %1155
        %v1157 = vsel %vm755, %v1153, 0.0
        %1158 = vadd.xlane.f32.xlu0 %v1157
        %v1159 = vpop.xlane.xlu0 %1158
        %v1160 = vmul.f32 %v1156, 0.03125
        %v1161 = vmul.f32 %v1159, 0.03125
        %v1162 = vsub.f32 %v1152, %v1160
        %v1163 = vsub.f32 %v1153, %v1161
        %v1164 = vmul.f32 %v1162, %v1162
        %v1165 = vmul.f32 %v1163, %v1163
        %v1166 = vsel %vm755, %v1164, 0.0
        %1167 = vadd.xlane.f32.xlu0 %v1166
        %v1168 = vpop.xlane.xlu0 %1167
        %v1169 = vsel %vm755, %v1165, 0.0
        %1170 = vadd.xlane.f32.xlu0 %v1169
        %v1171 = vpop.xlane.xlu0 %1170
        %v1172 = vmul.f32 %v1168, 0.03125
        %v1173 = vmul.f32 %v1171, 0.03125
        %v1174 = vadd.f32 %v1172, 1e-05
        %v1175 = vadd.f32 %v1173, 1e-05
        %v1176 = vrsqrt.pop %v1174
        %v1177 = vrsqrt.pop %v1175
        %v1178 = vmul.f32 %v1162, %v1176
        %v1179 = vmul.f32 %v1163, %v1177
        %v1180 = vld [vmem:[#allocation9] sm:$0x1]
        %v1182 = vlaneseq
        %v1183 = vshrl.u32 %v1182, 7
        %v1184 = vsub.s32 0, %v1183
        %v1185 = vrot.slane %v1180, %v1184
        %v1187 = vmul.f32 %v1178, %v1185
        %v1188 = vmul.f32 %v1179, %v1185
        %v1189 = vld [vmem:[#allocation11] sm:$0x1]
        %v1191 = vlaneseq
        %v1192 = vshrl.u32 %v1191, 7
        %v1193 = vsub.s32 0, %v1192
        %v1194 = vrot.slane %v1189, %v1193
        %v1196 = vadd.f32 %v1187, %v1194
        %v1197 = vadd.f32 %v1188, %v1194
        %vm1198 = vcmp.gt.f32.partialorder %v729, 0.5
        %vm1199 = vcmp.gt.f32.partialorder %v730, 0.5
        %v1200 = vsel %vm1198, 1, 0
        %v1201 = vsel %vm1199, 1, 0
        %1202 = vset.pattern.permute.xlu0 0
        %1203 = vperm.xlu0 %1202, %v1200
        %v1204 = vpop.permute.xlu0 %1203
        %1205 = vset.pattern.permute.xlu0 0
        %1206 = vperm.xlu0 %1205, %v1201
        %v1207 = vpop.permute.xlu0 %1206
        %vm1208 = vcmp.eq.s32.totalorder %v1204, 1
        %vm1209 = vcmp.eq.s32.totalorder %v1207, 1
        %v1210 = vsel %vm1208, 0.0, %v1196
        %v1211 = vsel %vm1209, 0.0, %v1197
        %vm1212 = vcmask 253952
        %1213 = vst.msk [vmem:[#allocation2] sm:$0x1] %vm1212, 0.0
        %1214 = vst.msk [vmem:[#allocation2 + $0x11] sm:$0x1] %vm1212, 0.0
        %1215 = vst.msk [vmem:[#allocation2 + $0x1] sm:$0xff] %vm755, %v1210
        %1216 = vst.msk [vmem:[#allocation2 + $0x9] sm:$0xff] %vm755, %v1211
        %v1217 = vld [vmem:[#allocation2] sm:$0xff]
        %v1218 = vld [vmem:[#allocation2 + $0x8] sm:$0xff]
        %v1219 = vld [vmem:[%s7] sm:$0xf]
        %v1220 = vld [vmem:[%s7 + $0x4] sm:$0xf]
        %v1221 = vld [vmem:[%s7 + $0x8] sm:$0xf]
        %v1222 = vld [vmem:[%s7 + $0xc] sm:$0xf]
        %v1223 = vpack.c.bf16 %v1218, %v1217
        %v1224 = vld [vmem:[#allocation2 + $0x1] sm:$0xff]
        %v1225 = vld [vmem:[#allocation2 + $0x9] sm:$0xff]
        %s1226 = scalar_lea.vmem %s7, 16
        %v1227 = vld [vmem:[%s1226] sm:$0xf]
        %v1228 = vld [vmem:[%s1226 + $0x4] sm:$0xf]
        %v1229 = vld [vmem:[%s1226 + $0x8] sm:$0xf]
        %v1230 = vld [vmem:[%s1226 + $0xc] sm:$0xf]
        %v1231 = vpack.c.bf16 %v1225, %v1224
        %v1236 = vunpack.c.l.b16 %v1227
        %v1237 = vunpack.c.l.b16 %v1228
        %v1238 = vunpack.c.l.b16 %v1229
        %v1239 = vunpack.c.l.b16 %v1230
        %v1240 = vpack.c.b16 %v1237, %v1236
        %v1241 = vpack.c.b16 %v1239, %v1238
        %v1245 = vsel %vm755, %v1231, 0
        %1247 = vmatprep.subr.bf16.mxu0 0
        %1248 = vmatpush1.bf16.msra.mxu0 %v1240
        %1249 = vmatprep.subr.bf16.mxu0 0
        %1250 = vmatpush1.bf16.msra.mxu0 %v1241
        %1251 = vmatprep.subr.bf16.mxu0 0
        %1252 = vmatpush1.bf16.msra.mxu0 0
        %1253 = vmatprep.subr.bf16.mxu0 0
        %1254 = vmatpush1.bf16.msra.mxu0 0
        %1255 = vmatprep.subr.bf16.mxu0 0
        %1256 = vmatpush1.bf16.msra.mxu0 0
        %1257 = vmatprep.subr.bf16.mxu0 0
        %1258 = vmatpush1.bf16.msra.mxu0 0
        %1259 = vmatprep.subr.bf16.mxu0 0
        %1260 = vmatpush1.bf16.msra.mxu0 0
        %1261 = vmatprep.subr.bf16.mxu0 0
        %1262 = vmatpush1.bf16.msra.mxu0 0
        %1263 = vmatprep.subr.bf16.mxu0 0
        %1264 = vmatpush1.bf16.msra.mxu0 0
        %1265 = vmatprep.subr.bf16.mxu0 0
        %1266 = vmatpush1.bf16.msra.mxu0 0
        %1267 = vmatprep.subr.bf16.mxu0 0
        %1268 = vmatpush1.bf16.msra.mxu0 0
        %1269 = vmatprep.subr.bf16.mxu0 0
        %1270 = vmatpush1.bf16.msra.mxu0 0
        %1271 = vmatprep.subr.bf16.mxu0 0
        %1272 = vmatpush1.bf16.msra.mxu0 0
        %1273 = vmatprep.subr.bf16.mxu0 0
        %1274 = vmatpush1.bf16.msra.mxu0 0
        %1275 = vmatprep.subr.bf16.mxu0 0
        %1276 = vmatpush1.bf16.msra.mxu0 0
        %1277 = vmatprep.subr.bf16.mxu0 0
        %1278 = vmatpush1.bf16.msra.mxu0 0
        %1279 = vmatprep.mubr.bf16.mxu0 0
        %1280 = vmatmul.mubr.bf16.gmra.mrb[0].mxu0 %v1245
        %v1281 = vpop.f32.mrb[0].mxu0
        %v1282 = vadd.f32 0.0, %v1281
        %v1283 = vpop.f32.mrb[0].mxu0
        %v1284 = vpop.f32.mrb[0].mxu0
        %v1285 = vadd.f32 0.0, %v1284
        %v1286 = vpop.f32.mrb[0].mxu0
        %1287 = vdwg.mxu0
        %v1292 = vunpack.c.l.b16 %v1219
        %v1293 = vunpack.c.l.b16 %v1220
        %v1294 = vunpack.c.l.b16 %v1221
        %v1295 = vunpack.c.l.b16 %v1222
        %v1296 = vpack.c.b16 %v1293, %v1292
        %v1297 = vpack.c.b16 %v1295, %v1294
        %v1301 = vsel %vm755, %v1223, 0
        %1303 = vmatprep.subr.bf16.mxu0 0
        %1304 = vmatpush1.bf16.msra.mxu0 %v1296
        %1305 = vmatprep.subr.bf16.mxu0 0
        %1306 = vmatpush1.bf16.msra.mxu0 %v1297
        %1307 = vmatprep.subr.bf16.mxu0 0
        %1308 = vmatpush1.bf16.msra.mxu0 0
        %1309 = vmatprep.subr.bf16.mxu0 0
        %1310 = vmatpush1.bf16.msra.mxu0 0
        %1311 = vmatprep.subr.bf16.mxu0 0
        %1312 = vmatpush1.bf16.msra.mxu0 0
        %1313 = vmatprep.subr.bf16.mxu0 0
        %1314 = vmatpush1.bf16.msra.mxu0 0
        %1315 = vmatprep.subr.bf16.mxu0 0
        %1316 = vmatpush1.bf16.msra.mxu0 0
        %1317 = vmatprep.subr.bf16.mxu0 0
        %1318 = vmatpush1.bf16.msra.mxu0 0
        %1319 = vmatprep.subr.bf16.mxu0 0
        %1320 = vmatpush1.bf16.msra.mxu0 0
        %1321 = vmatprep.subr.bf16.mxu0 0
        %1322 = vmatpush1.bf16.msra.mxu0 0
        %1323 = vmatprep.subr.bf16.mxu0 0
        %1324 = vmatpush1.bf16.msra.mxu0 0
        %1325 = vmatprep.subr.bf16.mxu0 0
        %1326 = vmatpush1.bf16.msra.mxu0 0
        %1327 = vmatprep.subr.bf16.mxu0 0
        %1328 = vmatpush1.bf16.msra.mxu0 0
        %1329 = vmatprep.subr.bf16.mxu0 0
        %1330 = vmatpush1.bf16.msra.mxu0 0
        %1331 = vmatprep.subr.bf16.mxu0 0
        %1332 = vmatpush1.bf16.msra.mxu0 0
        %1333 = vmatprep.subr.bf16.mxu0 0
        %1334 = vmatpush1.bf16.msra.mxu0 0
        %1335 = vmatprep.mubr.bf16.mxu0 0
        %1336 = vmatmul.mubr.bf16.gmra.mrb[0].mxu0 %v1301
        %v1337 = vpop.f32.mrb[0].mxu0
        %v1338 = vadd.f32 %v1282, %v1337
        %v1339 = vpop.f32.mrb[0].mxu0
        %v1340 = vpop.f32.mrb[0].mxu0
        %v1341 = vadd.f32 %v1285, %v1340
        %v1342 = vpop.f32.mrb[0].mxu0
        %1343 = vdwg.mxu0
        %v1344 = vld [vmem:[#allocation2 + $0x2] sm:$0xff]
        %v1345 = vld [vmem:[#allocation2 + $0xa] sm:$0xff]
        %s1346 = scalar_lea.vmem %s7, 32
        %v1347 = vld [vmem:[%s1346] sm:$0xf]
        %v1348 = vld [vmem:[%s1346 + $0x4] sm:$0xf]
        %v1349 = vld [vmem:[%s1346 + $0x8] sm:$0xf]
        %v1350 = vld [vmem:[%s1346 + $0xc] sm:$0xf]
        %v1351 = vpack.c.bf16 %v1345, %v1344
        %v1356 = vunpack.c.l.b16 %v1347
        %v1357 = vunpack.c.l.b16 %v1348
        %v1358 = vunpack.c.l.b16 %v1349
        %v1359 = vunpack.c.l.b16 %v1350
        %v1360 = vpack.c.b16 %v1357, %v1356
        %v1361 = vpack.c.b16 %v1359, %v1358
        %v1365 = vsel %vm755, %v1351, 0
        %1367 = vmatprep.subr.bf16.mxu0 0
        %1368 = vmatpush1.bf16.msra.mxu0 %v1360
        %1369 = vmatprep.subr.bf16.mxu0 0
        %1370 = vmatpush1.bf16.msra.mxu0 %v1361
        %1371 = vmatprep.subr.bf16.mxu0 0
        %1372 = vmatpush1.bf16.msra.mxu0 0
        %1373 = vmatprep.subr.bf16.mxu0 0
        %1374 = vmatpush1.bf16.msra.mxu0 0
        %1375 = vmatprep.subr.bf16.mxu0 0
        %1376 = vmatpush1.bf16.msra.mxu0 0
        %1377 = vmatprep.subr.bf16.mxu0 0
        %1378 = vmatpush1.bf16.msra.mxu0 0
        %1379 = vmatprep.subr.bf16.mxu0 0
        %1380 = vmatpush1.bf16.msra.mxu0 0
        %1381 = vmatprep.subr.bf16.mxu0 0
        %1382 = vmatpush1.bf16.msra.mxu0 0
        %1383 = vmatprep.subr.bf16.mxu0 0
        %1384 = vmatpush1.bf16.msra.mxu0 0
        %1385 = vmatprep.subr.bf16.mxu0 0
        %1386 = vmatpush1.bf16.msra.mxu0 0
        %1387 = vmatprep.subr.bf16.mxu0 0
        %1388 = vmatpush1.bf16.msra.mxu0 0
        %1389 = vmatprep.subr.bf16.mxu0 0
        %1390 = vmatpush1.bf16.msra.mxu0 0
        %1391 = vmatprep.subr.bf16.mxu0 0
        %1392 = vmatpush1.bf16.msra.mxu0 0
        %1393 = vmatprep.subr.bf16.mxu0 0
        %1394 = vmatpush1.bf16.msra.mxu0 0
        %1395 = vmatprep.subr.bf16.mxu0 0
        %1396 = vmatpush1.bf16.msra.mxu0 0
        %1397 = vmatprep.subr.bf16.mxu0 0
        %1398 = vmatpush1.bf16.msra.mxu0 0
        %1399 = vmatprep.mubr.bf16.mxu0 0
        %1400 = vmatmul.mubr.bf16.gmra.mrb[0].mxu0 %v1365
        %v1401 = vpop.f32.mrb[0].mxu0
        %v1402 = vadd.f32 0.0, %v1401
        %v1403 = vpop.f32.mrb[0].mxu0
        %v1404 = vpop.f32.mrb[0].mxu0
        %v1405 = vadd.f32 0.0, %v1404
        %v1406 = vpop.f32.mrb[0].mxu0
        %1407 = vdwg.mxu0
        %v1408 = vadd.f32 %v1338, %v1402
        %v1409 = vadd.f32 %v1341, %v1405
        %v1410 = vld [vmem:[#allocation12] sm:$0x1]
        %v1412 = vlaneseq
        %v1413 = vshrl.u32 %v1412, 7
        %v1414 = vsub.s32 0, %v1413
        %v1415 = vrot.slane %v1410, %v1414
        %v1417 = vadd.f32 %v1408, %v1415
        %v1418 = vadd.f32 %v1409, %v1415
        %v1419 = vmax.f32 %v1417, 0.0
        %v1420 = vmax.f32 %v1418, 0.0
        %v1421 = vld [vmem:[%s9] sm:$0xf]
        %v1422 = vld [vmem:[%s9 + $0x4] sm:$0xf]
        %v1423 = vld [vmem:[%s9 + $0x8] sm:$0xf]
        %v1424 = vld [vmem:[%s9 + $0xc] sm:$0xf]
        %v1425 = vld [vmem:[%s9 + $0x10] sm:$0xf]
        %v1426 = vld [vmem:[%s9 + $0x14] sm:$0xf]
        %v1427 = vld [vmem:[%s9 + $0x18] sm:$0xf]
        %v1428 = vld [vmem:[%s9 + $0x1c] sm:$0xf]
        %v1429 = vpack.c.bf16 %v1420, %v1419
        %v1430 = vld [vmem:[%s10] sm:$0x1]
        %v1432 = vlaneseq
        %v1433 = vshrl.u32 %v1432, 7
        %v1434 = vsub.s32 0, %v1433
        %v1435 = vrot.slane %v1430, %v1434
        %v1445 = vunpack.c.l.b16 %v1421
        %v1446 = vunpack.c.l.b16 %v1422
        %v1447 = vunpack.c.l.b16 %v1423
        %v1448 = vunpack.c.l.b16 %v1424
        %v1449 = vunpack.c.l.b16 %v1425
        %v1450 = vunpack.c.l.b16 %v1426
        %v1451 = vunpack.c.l.b16 %v1427
        %v1452 = vunpack.c.l.b16 %v1428
        %v1453 = vpack.c.b16 %v1446, %v1445
        %v1454 = vpack.c.b16 %v1448, %v1447
        %v1455 = vpack.c.b16 %v1450, %v1449
        %v1456 = vpack.c.b16 %v1452, %v1451
        %vm1461 = vcmask 523264
        %v1463 = vsel %vm1461, %v1429, 0
        %1465 = vmatprep.subr.bf16.mxu0 0
        %1466 = vmatpush1.bf16.msra.mxu0 %v1453
        %1467 = vmatprep.subr.bf16.mxu0 0
        %1468 = vmatpush1.bf16.msra.mxu0 %v1454
        %1469 = vmatprep.subr.bf16.mxu0 0
        %1470 = vmatpush1.bf16.msra.mxu0 %v1455
        %1471 = vmatprep.subr.bf16.mxu0 0
        %1472 = vmatpush1.bf16.msra.mxu0 %v1456
        %1473 = vmatprep.subr.bf16.mxu0 0
        %1474 = vmatpush1.bf16.msra.mxu0 0
        %1475 = vmatprep.subr.bf16.mxu0 0
        %1476 = vmatpush1.bf16.msra.mxu0 0
        %1477 = vmatprep.subr.bf16.mxu0 0
        %1478 = vmatpush1.bf16.msra.mxu0 0
        %1479 = vmatprep.subr.bf16.mxu0 0
        %1480 = vmatpush1.bf16.msra.mxu0 0
        %1481 = vmatprep.subr.bf16.mxu0 0
        %1482 = vmatpush1.bf16.msra.mxu0 0
        %1483 = vmatprep.subr.bf16.mxu0 0
        %1484 = vmatpush1.bf16.msra.mxu0 0
        %1485 = vmatprep.subr.bf16.mxu0 0
        %1486 = vmatpush1.bf16.msra.mxu0 0
        %1487 = vmatprep.subr.bf16.mxu0 0
        %1488 = vmatpush1.bf16.msra.mxu0 0
        %1489 = vmatprep.subr.bf16.mxu0 0
        %1490 = vmatpush1.bf16.msra.mxu0 0
        %1491 = vmatprep.subr.bf16.mxu0 0
        %1492 = vmatpush1.bf16.msra.mxu0 0
        %1493 = vmatprep.subr.bf16.mxu0 0
        %1494 = vmatpush1.bf16.msra.mxu0 0
        %1495 = vmatprep.subr.bf16.mxu0 0
        %1496 = vmatpush1.bf16.msra.mxu0 0
        %1497 = vmatprep.mubr.bf16.mxu0 0
        %1498 = vmatmul.mubr.bf16.gmra.mrb[0].mxu0 %v1463
        %v1499 = vpop.f32.mrb[0].mxu0
        %v1500 = vadd.f32 %v1435, %v1499
        %v1501 = vpop.f32.mrb[0].mxu0
        %v1502 = vpop.f32.mrb[0].mxu0
        %v1503 = vadd.f32 %v1435, %v1502
        %v1504 = vpop.f32.mrb[0].mxu0
        %1505 = vdwg.mxu0
        %v1506 = vadd.f32 %v1500, %v1210
        %v1507 = vadd.f32 %v1503, %v1211
        %v1508 = vsel %vm755, %v1506, 0.0
        %1509 = vadd.xlane.f32.xlu0 %v1508
        %v1510 = vpop.xlane.xlu0 %1509
        %v1511 = vsel %vm755, %v1507, 0.0
        %1512 = vadd.xlane.f32.xlu0 %v1511
        %v1513 = vpop.xlane.xlu0 %1512
        %v1514 = vmul.f32 %v1510, 0.03125
        %v1515 = vmul.f32 %v1513, 0.03125
        %v1516 = vsub.f32 %v1506, %v1514
        %v1517 = vsub.f32 %v1507, %v1515
        %v1518 = vmul.f32 %v1516, %v1516
        %v1519 = vmul.f32 %v1517, %v1517
        %v1520 = vsel %vm755, %v1518, 0.0
        %1521 = vadd.xlane.f32.xlu0 %v1520
        %v1522 = vpop.xlane.xlu0 %1521
        %v1523 = vsel %vm755, %v1519, 0.0
        %1524 = vadd.xlane.f32.xlu0 %v1523
        %v1525 = vpop.xlane.xlu0 %1524
        %v1526 = vmul.f32 %v1522, 0.03125
        %v1527 = vmul.f32 %v1525, 0.03125
        %v1528 = vadd.f32 %v1526, 1e-05
        %v1529 = vadd.f32 %v1527, 1e-05
        %v1530 = vrsqrt.pop %v1528
        %v1531 = vrsqrt.pop %v1529
        %v1532 = vmul.f32 %v1516, %v1530
        %v1533 = vmul.f32 %v1517, %v1531
        %v1534 = vld [vmem:[%s11] sm:$0x1]
        %v1536 = vlaneseq
        %v1537 = vshrl.u32 %v1536, 7
        %v1538 = vsub.s32 0, %v1537
        %v1539 = vrot.slane %v1534, %v1538
        %v1541 = vmul.f32 %v1532, %v1539
        %v1542 = vmul.f32 %v1533, %v1539
        %v1543 = vld [vmem:[%s12] sm:$0x1]
        %v1545 = vlaneseq
        %v1546 = vshrl.u32 %v1545, 7
        %v1547 = vsub.s32 0, %v1546
        %v1548 = vrot.slane %v1543, %v1547
        %v1550 = vadd.f32 %v1541, %v1548
        %v1551 = vadd.f32 %v1542, %v1548
        %v1552 = vld [vmem:[%s721] sm:$0x1]
        %v1554 = vlaneseq
        %v1555 = vshrl.u32 %v1554, 7
        %v1556 = vsub.s32 0, %v1555
        %v1557 = vrot.slane %v1552, %v1556
        %v1559 = vmul.f32 %v1557, %v1550
        %v1560 = vmul.f32 %v1557, %v1551
        %v1561 = vld [vmem:[%s724] sm:$0x1]
        %v1563 = vlaneseq
        %v1564 = vshrl.u32 %v1563, 7
        %v1565 = vsub.s32 0, %v1564
        %v1566 = vrot.slane %v1561, %v1565
        %v1568 = vadd.f32 %v1559, %v1566
        %v1569 = vadd.f32 %v1560, %v1566
        %v1570 = vsel %vm1208, 0.0, %v1568
        %v1571 = vsel %vm1209, 0.0, %v1569
        %1572 = vst.msk [vmem:[%s698] sm:$0xff] %vm755, %v1570
        %1573 = vst.msk [vmem:[%s698 + $0x8] sm:$0xff] %vm755, %v1571
        %s1574 = sand.u32 %s430, 1
        %s1575 = scalar_lea.sflag [#allocation5], %s1574
        %s1576 = sand.u32 %s430, 1
        %s1577 = smul.addr %s1576, 16
        %s1578 = scalar_lea.vmem [#allocation14], %s1577
        %s1579 = sand.u32 %s456, 1
        %s1580 = scalar_lea.sflag [#allocation16], %s1579
        %s1581 = sand.u32 %s456, 1
        %s1582 = smul.addr %s1581, 16
        %s1583 = scalar_lea.vmem [#allocation15], %s1582
        // Predicated region
        $region113: #{tpu_custom_call.1} parent=87 // pred_check
          %p1584 = pneg %p440
        $region114: #{tpu_custom_call.1} parent=87 // pred_check_branch
          %1586 = sbr.rel (%p1584) target = $region116
        $region115: #{tpu_custom_call.1} parent=87 // pred_region
          %s1588 = ssub.s32 256, 256
          %1589 = vsyncadd %s1575, %s1588
          %s1590 = smul.addr %s40, 2
          %s1591 = smul.addr %s1590, 128
          %s1592 = scalar_lea.hbm %s17, %s1591
          %s1593 = sshll.u32 %s1578, 4
          %s1594 = int_to_ptr.vmem [resolvable:$true] %s1593
          %1599 = dma.vmem_to_hbm [thread:$0]  %s1594, 256, %s1592, %s1575, 128, 128, 8
        $region116: #{tpu_custom_call.1} parent=87 // pred_fallthru
          _
        // Predicated region
        $region117: #{tpu_custom_call.1} parent=87 // pred_check
          %p1600 = pneg %p466
        $region118: #{tpu_custom_call.1} parent=87 // pred_check_branch
          %1602 = sbr.rel (%p1600) target = $region120
        $region119: #{tpu_custom_call.1} parent=87 // pred_region
          %s1604 = ssub.s32 256, 256
          %1605 = vsyncadd %s1580, %s1604
          %s1606 = smul.addr %s40, 4
          %s1607 = smul.addr %s1606, 64
          %s1608 = scalar_lea.hbm %s18, %s1607
          %s1609 = sshll.u32 %s1583, 4
          %s1610 = int_to_ptr.vmem [resolvable:$true] %s1609
          %1615 = dma.vmem_to_hbm [thread:$0]  %s1610, 256, %s1608, %s1580, 64, 64, 4
        $region120: #{tpu_custom_call.1} parent=87 // pred_fallthru
          _
      $region88: #{tpu_custom_call.1} parent=5 // pred_fallthru
        _
      %p1616 = scmp.le.s32.totalorder 2, %s35
      // Predicated region
      $region121: #{tpu_custom_call.1} parent=5 // pred_check
        %p1617 = pneg %p1616
      $region122: #{tpu_custom_call.1} parent=5 // pred_check_branch
        %1619 = sbr.rel (%p1617) target = $region124
      $region123: #{tpu_custom_call.1} parent=5 // pred_region
        %s1620 = ssub.s32 %s35, 2
        // Predicated region
        $region125: #{tpu_custom_call.1} parent=123 // pred_check
          %p1621 = pneg %p446
        $region126: #{tpu_custom_call.1} parent=123 // pred_check_branch
          %1623 = sbr.rel (%p1621) target = $region128
        $region127: #{tpu_custom_call.1} parent=123 // pred_region
          %s1624 = sand.u32 %s431, 1
          %s1625 = scalar_lea.sflag [#allocation5], %s1624
          %s1626 = sand.u32 %s431, 1
          %s1627 = smul.addr %s1626, 16
          %s1628 = scalar_lea.vmem [#allocation14], %s1627
          %1629 = dma.done %s1625, 256
        $region128: #{tpu_custom_call.1} parent=123 // pred_fallthru
          _
        // Predicated region
        $region129: #{tpu_custom_call.1} parent=123 // pred_check
          %p1630 = pneg %p472
        $region130: #{tpu_custom_call.1} parent=123 // pred_check_branch
          %1632 = sbr.rel (%p1630) target = $region132
        $region131: #{tpu_custom_call.1} parent=123 // pred_region
          %s1633 = sand.u32 %s457, 1
          %s1634 = scalar_lea.sflag [#allocation16], %s1633
          %s1635 = sand.u32 %s457, 1
          %s1636 = smul.addr %s1635, 16
          %s1637 = scalar_lea.vmem [#allocation15], %s1636
          %1638 = dma.done %s1634, 256
        $region132: #{tpu_custom_call.1} parent=123 // pred_fallthru
          _
      $region124: #{tpu_custom_call.1} parent=5 // pred_fallthru
        _
    $region6: #{tpu_custom_call.1} parent=1 // loop_footer
      %s39 = sadd.s32 1, %s35
    $region7: #{tpu_custom_call.1} parent=1 // loop_footer_branch
      %34 = sbr.rel target = $region3
    $region8: #{tpu_custom_call.1} parent=1 // loop_exit
      _
    %1639 = vsyncpa [#allocation4], 1
    %s1640 = scalar_lea.sflag [#allocation4], 1
    %1641 = vsyncpa %s1640, 1
    %1642 = vsyncpa [#allocation7], 1
    %1643 = vsyncpa [#allocation10], 1
    %1644 = vsyncpa [#allocation13], 1
    %1645 = vsyncpa [#allocation5], 1
    %s1646 = scalar_lea.sflag [#allocation5], 1
    %1647 = vsyncpa %s1646, 1
    %1648 = vsyncpa [#allocation16], 1
    %s1649 = scalar_lea.sflag [#allocation16], 1
    %1650 = vsyncpa %s1649, 1

// kernel: tpu_custom_call.1
$region0: #{tpu_custom_call.1}
  #allocation0 [shape = 'u32[]', space=smem, size = 0x4, offset = 0x4, fixed_abs, tag = 'smem constant byte address 0x4 - core index']
  #allocation1 [shape = 'u32[144,128]{1,0:T(1,128)}', space=vmem, size = 0x12000, scoped, tag = 'internal scratch']
  #allocation2 [shape = 'f32[18,32]{1,0:T(8,128)}', space=vmem, size = 0x3000, scoped, tag = 'scratch operand']
  %s0 = inlined_call_operand.vmem [shape: f32[2,16,32], index: 0, kind: input, shape index: {}]
  %s1 = inlined_call_operand.vmem [shape: bf16[32,96], index: 1, kind: input, shape index: {}]
  %s2 = inlined_call_operand.hbm [shape: f32[1,96], index: 2, kind: input, shape index: {}]
  %s3 = inlined_call_operand.hbm [shape: bf16[32,32], index: 3, kind: input, shape index: {}]
  %s4 = inlined_call_operand.hbm [shape: f32[1,32], index: 4, kind: input, shape index: {}]
  %s5 = inlined_call_operand.hbm [shape: f32[1,32], index: 5, kind: input, shape index: {}]
  %s6 = inlined_call_operand.hbm [shape: f32[1,32], index: 6, kind: input, shape index: {}]
  %s7 = inlined_call_operand.vmem [shape: bf16[3,32,64], index: 7, kind: input, shape index: {}]
  %s8 = inlined_call_operand.hbm [shape: f32[1,64], index: 8, kind: input, shape index: {}]
  %s9 = inlined_call_operand.vmem [shape: bf16[1,64,32], index: 9, kind: input, shape index: {}]
  %s10 = inlined_call_operand.vmem [shape: f32[1,32], index: 10, kind: input, shape index: {}]
  %s11 = inlined_call_operand.vmem [shape: f32[1,32], index: 11, kind: input, shape index: {}]
  %s12 = inlined_call_operand.vmem [shape: f32[1,32], index: 12, kind: input, shape index: {}]
  %s13 = inlined_call_operand.vmem [shape: f32[2,1,16], index: 13, kind: input, shape index: {}]
  %s14 = inlined_call_operand.vmem [shape: f32[2,16,1], index: 14, kind: input, shape index: {}]
  %s15 = inlined_call_operand.vmem [shape: f32[2,1,32], index: 15, kind: input, shape index: {}]
  %s16 = inlined_call_operand.vmem [shape: f32[2,1,32], index: 16, kind: input, shape index: {}]
  %s17 = inlined_call_operand.hbm [shape: f32[2,16,32], index: 17, kind: output, shape index: {0}]
  %s18 = inlined_call_operand.hbm [shape: bf16[2,2,16,16], index: 18, kind: output, shape index: {1}]
  %19 = xla_tuple %s17, %s18
  %s20 = sld [smem:[#allocation0]]
  $region133: #{tpu_custom_call.1} parent=0
    _
  %s22 = ssub.s32 1, %s20
  %s23 = scalar_select 0, %s22, %s20
  $region1: #{tpu_custom_call.1} parent=0
    #allocation3 [shape = 'u8[512]{0}', space=vmem, size = 0x400, scoped, tag = 'input window, operand 2, single buffered']
    #allocation4 [shape = 's32[2]{0}', space=sflag, size = 0x8, scoped, tag = 'scoped memory for tpu_custom_call.1']
    #allocation5 [shape = 's32[2]{0}', space=sflag, size = 0x8, scoped, tag = 'scoped memory for tpu_custom_call.1']
    #allocation6 [shape = 'u8[8192]{0}', space=vmem, size = 0x2000, scoped, tag = 'input window, operand 3, single buffered']
    #allocation7 [shape = 's32[1]{0}', space=sflag, size = 0x4, scoped, tag = 'scoped memory for tpu_custom_call.1']
    #allocation8 [shape = 'u8[512]{0}', space=vmem, size = 0x400, scoped, tag = 'input window, operand 4, single buffered']
    #allocation9 [shape = 'u8[512]{0}', space=vmem, size = 0x400, scoped, tag = 'input window, operand 5, single buffered']
    #allocation10 [shape = 's32[1]{0}', space=sflag, size = 0x4, scoped, tag = 'scoped memory for tpu_custom_call.1']
    #allocation11 [shape = 'u8[512]{0}', space=vmem, size = 0x400, scoped, tag = 'input window, operand 6, single buffered']
    #allocation12 [shape = 'u8[512]{0}', space=vmem, size = 0x400, scoped, tag = 'input window, operand 8, single buffered']
    #allocation13 [shape = 's32[1]{0}', space=sflag, size = 0x4, scoped, tag = 'scoped memory for tpu_custom_call.1']
    #allocation14 [shape = 'u8[16384]{0}', space=vmem, size = 0x4000, scoped, tag = 'output window, operand 0']
    #allocation15 [shape = 'u8[16384]{0}', space=vmem, size = 0x4000, scoped, tag = 'output window, operand 1']
    #allocation16 [shape = 's32[2]{0}', space=sflag, size = 0x8, scoped, tag = 'scoped memory for tpu_custom_call.1']
    %24 = vsyncpa [#allocation4], 0
    %25 = vsyncpa [#allocation7], 0
    %26 = vsyncpa [#allocation10], 0
    %27 = vsyncpa [#allocation13], 0
    %28 = vsyncpa [#allocation5], 0
    %s29 = scalar_lea.sflag [#allocation5], 1
    %30 = vsyncpa %s29, 0
    %31 = vsyncpa [#allocation16], 0
    %s32 = scalar_lea.sflag [#allocation16], 1
    %33 = vsyncpa %s32, 0
    loop: start=0, step=1, limit=4
    $region2: #{tpu_custom_call.1} parent=1 // loop_pre_header
      _
    $region3: #{tpu_custom_call.1} parent=1 // loop_header
      %s35 = sphi 0, %s39
      %p36 = scmp.ge.s32.totalorder %s35, 4
      %s45 = sphi 0, %s47
      %s48 = sphi 0, %s45
      %s49 = sphi 0, %s48
      %s65 = sphi 0, %s49
      %s69 = sphi 0, %s69
      %s71 = sphi 0, %s69
      %s72 = sphi 0, %s71
      %s86 = sphi 0, %s72
      %s90 = sphi 0, %s90
      %s92 = sphi 0, %s90
      %s93 = sphi 0, %s92
      %s107 = sphi 0, %s93
      %s111 = sphi 0, %s111
      %s113 = sphi 0, %s111
      %s114 = sphi 0, %s113
      %s128 = sphi 0, %s114
      %s132 = sphi 0, %s132
      %s134 = sphi 0, %s132
      %s135 = sphi 0, %s134
      %s149 = sphi 0, %s135
      %s153 = sphi 0, %s153
      %s155 = sphi 0, %s153
      %s156 = sphi 0, %s155
      %s170 = sphi 0, %s156
      %s174 = sphi 0, %s174
      %s176 = sphi 0, %s174
      %s177 = sphi 0, %s176
      %s191 = sphi 0, %s177
      %s195 = sphi 0, %s195
      %s197 = sphi 0, %s195
      %s198 = sphi 0, %s197
      %s212 = sphi 0, %s198
      %s216 = sphi 0, %s216
      %s218 = sphi 0, %s216
      %s219 = sphi 0, %s218
      %s233 = sphi 0, %s219
      %s237 = sphi 0, %s237
      %s239 = sphi 0, %s237
      %s240 = sphi 0, %s239
      %s254 = sphi 0, %s240
      %s258 = sphi 0, %s258
      %s260 = sphi 0, %s258
      %s261 = sphi 0, %s260
      %s275 = sphi 0, %s261
      %s279 = sphi 0, %s279
      %s281 = sphi 0, %s279
      %s282 = sphi 0, %s281
      %s296 = sphi 0, %s282
      %s300 = sphi 0, %s300
      %s302 = sphi 0, %s300
      %s303 = sphi 0, %s302
      %s317 = sphi 0, %s303
      %s323 = sphi 0, %s325
      %s326 = sphi 0, %s323
      %s327 = sphi 0, %s326
      %s343 = sphi 0, %s327
      %s349 = sphi 0, %s351
      %s352 = sphi 0, %s349
      %s353 = sphi 0, %s352
      %s369 = sphi 0, %s353
      %s375 = sphi 0, %s377
      %s378 = sphi 0, %s375
      %s379 = sphi 0, %s378
      %s395 = sphi 0, %s379
      %s401 = sphi 0, %s403
      %s404 = sphi 0, %s401
      %s405 = sphi 0, %s404
      %s421 = sphi 0, %s405
      %s427 = sphi 0, %s429
      %s430 = sphi 0, %s427
      %s431 = sphi 0, %s430
      %s447 = sphi 0, %s431
      %s453 = sphi 0, %s455
      %s456 = sphi 0, %s453
      %s457 = sphi 0, %s456
      %s473 = sphi 0, %s457
    $region4: #{tpu_custom_call.1} parent=1 // loop_header_branch
      %38 = sbr.rel (%p36) target = $region8
    $region5: #{tpu_custom_call.1} parent=1 // loop_body
      %s40 = ssub.s32 %s35, 1
      %s41 = ssub.s32 %s35, 2
      %s42 = sadd.s32 %s35, 1
      %s43 = ssub.s32 %s35, %s42
      %p44 = scmp.eq.s32.totalorder %s43, 0
      %s46 = sadd.s32 %s45, 1
      %s47 = scalar_select %p44, %s45, %s46
      %p50 = pneg %p44
      %p51 = scmp.eq.s32.totalorder %s35, 1
      %p52 = por %p50, %p51
      %p53 = scmp.ne.s32.totalorder %s45, %s48
      %p54 = scmp.eq.s32.totalorder %s35, 0
      %p55 = por %p53, %p54
      %p56 = scmp.ne.s32.totalorder %s45, %s48
      %p57 = scmp.eq.s32.totalorder %s40, 1
      %p58 = por %p56, %p57
      %p59 = scmp.ne.s32.totalorder %s48, %s49
      %p60 = scmp.eq.s32.totalorder %s40, 0
      %p61 = por %p59, %p60
      %p62 = scmp.ne.s32.totalorder %s48, %s49
      %p63 = scmp.eq.s32.totalorder %s41, 1
      %p64 = por %p62, %p63
      %p66 = scmp.ne.s32.totalorder %s49, %s65
      %p67 = scmp.eq.s32.totalorder %s41, 0
      %p68 = por %p66, %p67
      %s70 = sadd.s32 %s69, 1
      %p73 = scmp.eq.s32.totalorder %s35, 1
      %p74 = scmp.ne.s32.totalorder %s69, %s71
      %p75 = scmp.eq.s32.totalorder %s35, 0
      %p76 = por %p74, %p75
      %p77 = scmp.ne.s32.totalorder %s69, %s71
      %p78 = scmp.eq.s32.totalorder %s40, 1
      %p79 = por %p77, %p78
      %p80 = scmp.ne.s32.totalorder %s71, %s72
      %p81 = scmp.eq.s32.totalorder %s40, 0
      %p82 = por %p80, %p81
      %p83 = scmp.ne.s32.totalorder %s71, %s72
      %p84 = scmp.eq.s32.totalorder %s41, 1
      %p85 = por %p83, %p84
      %p87 = scmp.ne.s32.totalorder %s72, %s86
      %p88 = scmp.eq.s32.totalorder %s41, 0
      %p89 = por %p87, %p88
      %s91 = sadd.s32 %s90, 1
      %p94 = scmp.eq.s32.totalorder %s35, 1
      %p95 = scmp.ne.s32.totalorder %s90, %s92
      %p96 = scmp.eq.s32.totalorder %s35, 0
      %p97 = por %p95, %p96
      %p98 = scmp.ne.s32.totalorder %s90, %s92
      %p99 = scmp.eq.s32.totalorder %s40, 1
      %p100 = por %p98, %p99
      %p101 = scmp.ne.s32.totalorder %s92, %s93
      %p102 = scmp.eq.s32.totalorder %s40, 0
      %p103 = por %p101, %p102
      %p104 = scmp.ne.s32.totalorder %s92, %s93
      %p105 = scmp.eq.s32.totalorder %s41, 1
      %p106 = por %p104, %p105
      %p108 = scmp.ne.s32.totalorder %s93, %s107
      %p109 = scmp.eq.s32.totalorder %s41, 0
      %p110 = por %p108, %p109
      %s112 = sadd.s32 %s111, 1
      %p115 = scmp.eq.s32.totalorder %s35, 1
      %p116 = scmp.ne.s32.totalorder %s111, %s113
      %p117 = scmp.eq.s32.totalorder %s35, 0
      %p118 = por %p116, %p117
      %p119 = scmp.ne.s32.totalorder %s111, %s113
      %p120 = scmp.eq.s32.totalorder %s40, 1
      %p121 = por %p119, %p120
      %p122 = scmp.ne.s32.totalorder %s113, %s114
      %p123 = scmp.eq.s32.totalorder %s40, 0
      %p124 = por %p122, %p123
      %p125 = scmp.ne.s32.totalorder %s113, %s114
      %p126 = scmp.eq.s32.totalorder %s41, 1
      %p127 = por %p125, %p126
      %p129 = scmp.ne.s32.totalorder %s114, %s128
      %p130 = scmp.eq.s32.totalorder %s41, 0
      %p131 = por %p129, %p130
      %s133 = sadd.s32 %s132, 1
      %p136 = scmp.eq.s32.totalorder %s35, 1
      %p137 = scmp.ne.s32.totalorder %s132, %s134
      %p138 = scmp.eq.s32.totalorder %s35, 0
      %p139 = por %p137, %p138
      %p140 = scmp.ne.s32.totalorder %s132, %s134
      %p141 = scmp.eq.s32.totalorder %s40, 1
      %p142 = por %p140, %p141
      %p143 = scmp.ne.s32.totalorder %s134, %s135
      %p144 = scmp.eq.s32.totalorder %s40, 0
      %p145 = por %p143, %p144
      %p146 = scmp.ne.s32.totalorder %s134, %s135
      %p147 = scmp.eq.s32.totalorder %s41, 1
      %p148 = por %p146, %p147
      %p150 = scmp.ne.s32.totalorder %s135, %s149
      %p151 = scmp.eq.s32.totalorder %s41, 0
      %p152 = por %p150, %p151
      %s154 = sadd.s32 %s153, 1
      %p157 = scmp.eq.s32.totalorder %s35, 1
      %p158 = scmp.ne.s32.totalorder %s153, %s155
      %p159 = scmp.eq.s32.totalorder %s35, 0
      %p160 = por %p158, %p159
      %p161 = scmp.ne.s32.totalorder %s153, %s155
      %p162 = scmp.eq.s32.totalorder %s40, 1
      %p163 = por %p161, %p162
      %p164 = scmp.ne.s32.totalorder %s155, %s156
      %p165 = scmp.eq.s32.totalorder %s40, 0
      %p166 = por %p164, %p165
      %p167 = scmp.ne.s32.totalorder %s155, %s156
      %p168 = scmp.eq.s32.totalorder %s41, 1
      %p169 = por %p167, %p168
      %p171 = scmp.ne.s32.totalorder %s156, %s170
      %p172 = scmp.eq.s32.totalorder %s41, 0
      %p173 = por %p171, %p172
      %s175 = sadd.s32 %s174, 1
      %p178 = scmp.eq.s32.totalorder %s35, 1
      %p179 = scmp.ne.s32.totalorder %s174, %s176
      %p180 = scmp.eq.s32.totalorder %s35, 0
      %p181 = por %p179, %p180
      %p182 = scmp.ne.s32.totalorder %s174, %s176
      %p183 = scmp.eq.s32.totalorder %s40, 1
      %p184 = por %p182, %p183
      %p185 = scmp.ne.s32.totalorder %s176, %s177
      %p186 = scmp.eq.s32.totalorder %s40, 0
      %p187 = por %p185, %p186
      %p188 = scmp.ne.s32.totalorder %s176, %s177
      %p189 = scmp.eq.s32.totalorder %s41, 1
      %p190 = por %p188, %p189
      %p192 = scmp.ne.s32.totalorder %s177, %s191
      %p193 = scmp.eq.s32.totalorder %s41, 0
      %p194 = por %p192, %p193
      %s196 = sadd.s32 %s195, 1
      %p199 = scmp.eq.s32.totalorder %s35, 1
      %p200 = scmp.ne.s32.totalorder %s195, %s197
      %p201 = scmp.eq.s32.totalorder %s35, 0
      %p202 = por %p200, %p201
      %p203 = scmp.ne.s32.totalorder %s195, %s197
      %p204 = scmp.eq.s32.totalorder %s40, 1
      %p205 = por %p203, %p204
      %p206 = scmp.ne.s32.totalorder %s197, %s198
      %p207 = scmp.eq.s32.totalorder %s40, 0
      %p208 = por %p206, %p207
      %p209 = scmp.ne.s32.totalorder %s197, %s198
      %p210 = scmp.eq.s32.totalorder %s41, 1
      %p211 = por %p209, %p210
      %p213 = scmp.ne.s32.totalorder %s198, %s212
      %p214 = scmp.eq.s32.totalorder %s41, 0
      %p215 = por %p213, %p214
      %s217 = sadd.s32 %s216, 1
      %p220 = scmp.eq.s32.totalorder %s35, 1
      %p221 = scmp.ne.s32.totalorder %s216, %s218
      %p222 = scmp.eq.s32.totalorder %s35, 0
      %p223 = por %p221, %p222
      %p224 = scmp.ne.s32.totalorder %s216, %s218
      %p225 = scmp.eq.s32.totalorder %s40, 1
      %p226 = por %p224, %p225
      %p227 = scmp.ne.s32.totalorder %s218, %s219
      %p228 = scmp.eq.s32.totalorder %s40, 0
      %p229 = por %p227, %p228
      %p230 = scmp.ne.s32.totalorder %s218, %s219
      %p231 = scmp.eq.s32.totalorder %s41, 1
      %p232 = por %p230, %p231
      %p234 = scmp.ne.s32.totalorder %s219, %s233
      %p235 = scmp.eq.s32.totalorder %s41, 0
      %p236 = por %p234, %p235
      %s238 = sadd.s32 %s237, 1
      %p241 = scmp.eq.s32.totalorder %s35, 1
      %p242 = scmp.ne.s32.totalorder %s237, %s239
      %p243 = scmp.eq.s32.totalorder %s35, 0
      %p244 = por %p242, %p243
      %p245 = scmp.ne.s32.totalorder %s237, %s239
      %p246 = scmp.eq.s32.totalorder %s40, 1
      %p247 = por %p245, %p246
      %p248 = scmp.ne.s32.totalorder %s239, %s240
      %p249 = scmp.eq.s32.totalorder %s40, 0
      %p250 = por %p248, %p249
      %p251 = scmp.ne.s32.totalorder %s239, %s240
      %p252 = scmp.eq.s32.totalorder %s41, 1
      %p253 = por %p251, %p252
      %p255 = scmp.ne.s32.totalorder %s240, %s254
      %p256 = scmp.eq.s32.totalorder %s41, 0
      %p257 = por %p255, %p256
      %s259 = sadd.s32 %s258, 1
      %p262 = scmp.eq.s32.totalorder %s35, 1
      %p263 = scmp.ne.s32.totalorder %s258, %s260
      %p264 = scmp.eq.s32.totalorder %s35, 0
      %p265 = por %p263, %p264
      %p266 = scmp.ne.s32.totalorder %s258, %s260
      %p267 = scmp.eq.s32.totalorder %s40, 1
      %p268 = por %p266, %p267
      %p269 = scmp.ne.s32.totalorder %s260, %s261
      %p270 = scmp.eq.s32.totalorder %s40, 0
      %p271 = por %p269, %p270
      %p272 = scmp.ne.s32.totalorder %s260, %s261
      %p273 = scmp.eq.s32.totalorder %s41, 1
      %p274 = por %p272, %p273
      %p276 = scmp.ne.s32.totalorder %s261, %s275
      %p277 = scmp.eq.s32.totalorder %s41, 0
      %p278 = por %p276, %p277
      %s280 = sadd.s32 %s279, 1
      %p283 = scmp.eq.s32.totalorder %s35, 1
      %p284 = scmp.ne.s32.totalorder %s279, %s281
      %p285 = scmp.eq.s32.totalorder %s35, 0
      %p286 = por %p284, %p285
      %p287 = scmp.ne.s32.totalorder %s279, %s281
      %p288 = scmp.eq.s32.totalorder %s40, 1
      %p289 = por %p287, %p288
      %p290 = scmp.ne.s32.totalorder %s281, %s282
      %p291 = scmp.eq.s32.totalorder %s40, 0
      %p292 = por %p290, %p291
      %p293 = scmp.ne.s32.totalorder %s281, %s282
      %p294 = scmp.eq.s32.totalorder %s41, 1
      %p295 = por %p293, %p294
      %p297 = scmp.ne.s32.totalorder %s282, %s296
      %p298 = scmp.eq.s32.totalorder %s41, 0
      %p299 = por %p297, %p298
      %s301 = sadd.s32 %s300, 1
      %p304 = scmp.eq.s32.totalorder %s35, 1
      %p305 = scmp.ne.s32.totalorder %s300, %s302
      %p306 = scmp.eq.s32.totalorder %s35, 0
      %p307 = por %p305, %p306
      %p308 = scmp.ne.s32.totalorder %s300, %s302
      %p309 = scmp.eq.s32.totalorder %s40, 1
      %p310 = por %p308, %p309
      %p311 = scmp.ne.s32.totalorder %s302, %s303
      %p312 = scmp.eq.s32.totalorder %s40, 0
      %p313 = por %p311, %p312
      %p314 = scmp.ne.s32.totalorder %s302, %s303
      %p315 = scmp.eq.s32.totalorder %s41, 1
      %p316 = por %p314, %p315
      %p318 = scmp.ne.s32.totalorder %s303, %s317
      %p319 = scmp.eq.s32.totalorder %s41, 0
      %p320 = por %p318, %p319
      %s321 = ssub.s32 %s35, %s42
      %p322 = scmp.eq.s32.totalorder %s321, 0
      %s324 = sadd.s32 %s323, 1
      %s325 = scalar_select %p322, %s323, %s324
      %p328 = pneg %p322
      %p329 = scmp.eq.s32.totalorder %s35, 1
      %p330 = por %p328, %p329
      %p331 = scmp.ne.s32.totalorder %s323, %s326
      %p332 = scmp.eq.s32.totalorder %s35, 0
      %p333 = por %p331, %p332
      %p334 = scmp.ne.s32.totalorder %s323, %s326
      %p335 = scmp.eq.s32.totalorder %s40, 1
      %p336 = por %p334, %p335
      %p337 = scmp.ne.s32.totalorder %s326, %s327
      %p338 = scmp.eq.s32.totalorder %s40, 0
      %p339 = por %p337, %p338
      %p340 = scmp.ne.s32.totalorder %s326, %s327
      %p341 = scmp.eq.s32.totalorder %s41, 1
      %p342 = por %p340, %p341
      %p344 = scmp.ne.s32.totalorder %s327, %s343
      %p345 = scmp.eq.s32.totalorder %s41, 0
      %p346 = por %p344, %p345
      %s347 = ssub.s32 %s35, %s42
      %p348 = scmp.eq.s32.totalorder %s347, 0
      %s350 = sadd.s32 %s349, 1
      %s351 = scalar_select %p348, %s349, %s350
      %p354 = pneg %p348
      %p355 = scmp.eq.s32.totalorder %s35, 1
      %p356 = por %p354, %p355
      %p357 = scmp.ne.s32.totalorder %s349, %s352
      %p358 = scmp.eq.s32.totalorder %s35, 0
      %p359 = por %p357, %p358
      %p360 = scmp.ne.s32.totalorder %s349, %s352
      %p361 = scmp.eq.s32.totalorder %s40, 1
      %p362 = por %p360, %p361
      %p363 = scmp.ne.s32.totalorder %s352, %s353
      %p364 = scmp.eq.s32.totalorder %s40, 0
      %p365 = por %p363, %p364
      %p366 = scmp.ne.s32.totalorder %s352, %s353
      %p367 = scmp.eq.s32.totalorder %s41, 1
      %p368 = por %p366, %p367
      %p370 = scmp.ne.s32.totalorder %s353, %s369
      %p371 = scmp.eq.s32.totalorder %s41, 0
      %p372 = por %p370, %p371
      %s373 = ssub.s32 %s35, %s42
      %p374 = scmp.eq.s32.totalorder %s373, 0
      %s376 = sadd.s32 %s375, 1
      %s377 = scalar_select %p374, %s375, %s376
      %p380 = pneg %p374
      %p381 = scmp.eq.s32.totalorder %s35, 1
      %p382 = por %p380, %p381
      %p383 = scmp.ne.s32.totalorder %s375, %s378
      %p384 = scmp.eq.s32.totalorder %s35, 0
      %p385 = por %p383, %p384
      %p386 = scmp.ne.s32.totalorder %s375, %s378
      %p387 = scmp.eq.s32.totalorder %s40, 1
      %p388 = por %p386, %p387
      %p389 = scmp.ne.s32.totalorder %s378, %s379
      %p390 = scmp.eq.s32.totalorder %s40, 0
      %p391 = por %p389, %p390
      %p392 = scmp.ne.s32.totalorder %s378, %s379
      %p393 = scmp.eq.s32.totalorder %s41, 1
      %p394 = por %p392, %p393
      %p396 = scmp.ne.s32.totalorder %s379, %s395
      %p397 = scmp.eq.s32.totalorder %s41, 0
      %p398 = por %p396, %p397
      %s399 = ssub.s32 %s35, %s42
      %p400 = scmp.eq.s32.totalorder %s399, 0
      %s402 = sadd.s32 %s401, 1
      %s403 = scalar_select %p400, %s401, %s402
      %p406 = pneg %p400
      %p407 = scmp.eq.s32.totalorder %s35, 1
      %p408 = por %p406, %p407
      %p409 = scmp.ne.s32.totalorder %s401, %s404
      %p410 = scmp.eq.s32.totalorder %s35, 0
      %p411 = por %p409, %p410
      %p412 = scmp.ne.s32.totalorder %s401, %s404
      %p413 = scmp.eq.s32.totalorder %s40, 1
      %p414 = por %p412, %p413
      %p415 = scmp.ne.s32.totalorder %s404, %s405
      %p416 = scmp.eq.s32.totalorder %s40, 0
      %p417 = por %p415, %p416
      %p418 = scmp.ne.s32.totalorder %s404, %s405
      %p419 = scmp.eq.s32.totalorder %s41, 1
      %p420 = por %p418, %p419
      %p422 = scmp.ne.s32.totalorder %s405, %s421
      %p423 = scmp.eq.s32.totalorder %s41, 0
      %p424 = por %p422, %p423
      %s425 = ssub.s32 %s35, %s42
      %p426 = scmp.eq.s32.totalorder %s425, 0
      %s428 = sadd.s32 %s427, 1
      %s429 = scalar_select %p426, %s427, %s428
      %p432 = pneg %p426
      %p433 = scmp.eq.s32.totalorder %s35, 1
      %p434 = por %p432, %p433
      %p435 = scmp.ne.s32.totalorder %s427, %s430
      %p436 = scmp.eq.s32.totalorder %s35, 0
      %p437 = por %p435, %p436
      %p438 = scmp.ne.s32.totalorder %s427, %s430
      %p439 = scmp.eq.s32.totalorder %s40, 1
      %p440 = por %p438, %p439
      %p441 = scmp.ne.s32.totalorder %s430, %s431
      %p442 = scmp.eq.s32.totalorder %s40, 0
      %p443 = por %p441, %p442
      %p444 = scmp.ne.s32.totalorder %s430, %s431
      %p445 = scmp.eq.s32.totalorder %s41, 1
      %p446 = por %p444, %p445
      %p448 = scmp.ne.s32.totalorder %s431, %s447
      %p449 = scmp.eq.s32.totalorder %s41, 0
      %p450 = por %p448, %p449
      %s451 = ssub.s32 %s35, %s42
      %p452 = scmp.eq.s32.totalorder %s451, 0
      %s454 = sadd.s32 %s453, 1
      %s455 = scalar_select %p452, %s453, %s454
      %p458 = pneg %p452
      %p459 = scmp.eq.s32.totalorder %s35, 1
      %p460 = por %p458, %p459
      %p461 = scmp.ne.s32.totalorder %s453, %s456
      %p462 = scmp.eq.s32.totalorder %s35, 0
      %p463 = por %p461, %p462
      %p464 = scmp.ne.s32.totalorder %s453, %s456
      %p465 = scmp.eq.s32.totalorder %s40, 1
      %p466 = por %p464, %p465
      %p467 = scmp.ne.s32.totalorder %s456, %s457
      %p468 = scmp.eq.s32.totalorder %s40, 0
      %p469 = por %p467, %p468
      %p470 = scmp.ne.s32.totalorder %s456, %s457
      %p471 = scmp.eq.s32.totalorder %s41, 1
      %p472 = por %p470, %p471
      %p474 = scmp.ne.s32.totalorder %s457, %s473
      %p475 = scmp.eq.s32.totalorder %s41, 0
      %p476 = por %p474, %p475
      %p477 = scmp.le.s32.totalorder 1, %s35
      %p478 = scmp.lt.s32.totalorder %s35, 3
      %p479 = pnand %p477, %p478
      %p480 = pneg %p479
      // Predicated region
      $region9: #{tpu_custom_call.1} parent=5 // pred_check
        _
      $region10: #{tpu_custom_call.1} parent=5 // pred_check_branch
        %482 = sbr.rel (%p479) target = $region12
      $region11: #{tpu_custom_call.1} parent=5 // pred_region
        %s483 = ssub.s32 %s35, 1
        // Predicated region
        $region13: #{tpu_custom_call.1} parent=11 // pred_check
          %p484 = pneg %p82
        $region14: #{tpu_custom_call.1} parent=11 // pred_check_branch
          %486 = sbr.rel (%p484) target = $region16
        $region15: #{tpu_custom_call.1} parent=11 // pred_region
          _
        $region16: #{tpu_custom_call.1} parent=11 // pred_fallthru
          _
        // Predicated region
        $region17: #{tpu_custom_call.1} parent=11 // pred_check
          %p487 = pneg %p103
        $region18: #{tpu_custom_call.1} parent=11 // pred_check_branch
          %489 = sbr.rel (%p487) target = $region20
        $region19: #{tpu_custom_call.1} parent=11 // pred_region
          %s491 = ssub.s32 16, 16
          %492 = vsyncadd [#allocation4], %s491
          %s494 = sshll.u32 [#allocation3], 4
          %s495 = int_to_ptr.vmem [resolvable:$true] %s494
          %497 = dma.hbm_to_vmem [thread:$0]  %s2, 16, %s495, [#allocation4]
        $region20: #{tpu_custom_call.1} parent=11 // pred_fallthru
          _
        // Predicated region
        $region21: #{tpu_custom_call.1} parent=11 // pred_check
          %p498 = pneg %p124
        $region22: #{tpu_custom_call.1} parent=11 // pred_check_branch
          %500 = sbr.rel (%p498) target = $region24
        $region23: #{tpu_custom_call.1} parent=11 // pred_region
          %s502 = ssub.s32 256, 256
          %503 = vsyncadd [#allocation7], %s502
          %s504 = sshll.u32 [#allocation6], 4
          %s505 = int_to_ptr.vmem [resolvable:$true] %s504
          %510 = dma.hbm_to_vmem [thread:$0]  %s3, 256, %s505, [#allocation7], 64, 64, 4
        $region24: #{tpu_custom_call.1} parent=11 // pred_fallthru
          _
        // Predicated region
        $region25: #{tpu_custom_call.1} parent=11 // pred_check
          %p511 = pneg %p145
        $region26: #{tpu_custom_call.1} parent=11 // pred_check_branch
          %513 = sbr.rel (%p511) target = $region28
        $region27: #{tpu_custom_call.1} parent=11 // pred_region
          %s515 = ssub.s32 16, 16
          %516 = vsyncadd [#allocation7], %s515
          %s518 = sshll.u32 [#allocation8], 4
          %s519 = int_to_ptr.vmem [resolvable:$true] %s518
          %521 = dma.hbm_to_vmem [thread:$0]  %s4, 16, %s519, [#allocation7]
        $region28: #{tpu_custom_call.1} parent=11 // pred_fallthru
          _
        // Predicated region
        $region29: #{tpu_custom_call.1} parent=11 // pred_check
          %p522 = pneg %p166
        $region30: #{tpu_custom_call.1} parent=11 // pred_check_branch
          %524 = sbr.rel (%p522) target = $region32
        $region31: #{tpu_custom_call.1} parent=11 // pred_region
          %s526 = ssub.s32 16, 16
          %527 = vsyncadd [#allocation10], %s526
          %s529 = sshll.u32 [#allocation9], 4
          %s530 = int_to_ptr.vmem [resolvable:$true] %s529
          %532 = dma.hbm_to_vmem [thread:$0]  %s5, 16, %s530, [#allocation10]
        $region32: #{tpu_custom_call.1} parent=11 // pred_fallthru
          _
        // Predicated region
        $region33: #{tpu_custom_call.1} parent=11 // pred_check
          %p533 = pneg %p187
        $region34: #{tpu_custom_call.1} parent=11 // pred_check_branch
          %535 = sbr.rel (%p533) target = $region36
        $region35: #{tpu_custom_call.1} parent=11 // pred_region
          %s537 = ssub.s32 16, 16
          %538 = vsyncadd [#allocation10], %s537
          %s540 = sshll.u32 [#allocation11], 4
          %s541 = int_to_ptr.vmem [resolvable:$true] %s540
          %543 = dma.hbm_to_vmem [thread:$0]  %s6, 16, %s541, [#allocation10]
        $region36: #{tpu_custom_call.1} parent=11 // pred_fallthru
          _
        // Predicated region
        $region37: #{tpu_custom_call.1} parent=11 // pred_check
          %p544 = pneg %p208
        $region38: #{tpu_custom_call.1} parent=11 // pred_check_branch
          %546 = sbr.rel (%p544) target = $region40
        $region39: #{tpu_custom_call.1} parent=11 // pred_region
          _
        $region40: #{tpu_custom_call.1} parent=11 // pred_fallthru
          _
        // Predicated region
        $region41: #{tpu_custom_call.1} parent=11 // pred_check
          %p547 = pneg %p229
        $region42: #{tpu_custom_call.1} parent=11 // pred_check_branch
          %549 = sbr.rel (%p547) target = $region44
        $region43: #{tpu_custom_call.1} parent=11 // pred_region
          %s551 = ssub.s32 16, 16
          %552 = vsyncadd [#allocation13], %s551
          %s554 = sshll.u32 [#allocation12], 4
          %s555 = int_to_ptr.vmem [resolvable:$true] %s554
          %557 = dma.hbm_to_vmem [thread:$0]  %s8, 16, %s555, [#allocation13]
        $region44: #{tpu_custom_call.1} parent=11 // pred_fallthru
          _
        // Predicated region
        $region45: #{tpu_custom_call.1} parent=11 // pred_check
          %p558 = pneg %p250
        $region46: #{tpu_custom_call.1} parent=11 // pred_check_branch
          %560 = sbr.rel (%p558) target = $region48
        $region47: #{tpu_custom_call.1} parent=11 // pred_region
          _
        $region48: #{tpu_custom_call.1} parent=11 // pred_fallthru
          _
        // Predicated region
        $region49: #{tpu_custom_call.1} parent=11 // pred_check
          %p561 = pneg %p271
        $region50: #{tpu_custom_call.1} parent=11 // pred_check_branch
          %563 = sbr.rel (%p561) target = $region52
        $region51: #{tpu_custom_call.1} parent=11 // pred_region
          _
        $region52: #{tpu_custom_call.1} parent=11 // pred_fallthru
          _
        // Predicated region
        $region53: #{tpu_custom_call.1} parent=11 // pred_check
          %p564 = pneg %p292
        $region54: #{tpu_custom_call.1} parent=11 // pred_check_branch
          %566 = sbr.rel (%p564) target = $region56
        $region55: #{tpu_custom_call.1} parent=11 // pred_region
          _
        $region56: #{tpu_custom_call.1} parent=11 // pred_fallthru
          _
        // Predicated region
        $region57: #{tpu_custom_call.1} parent=11 // pred_check
          %p567 = pneg %p313
        $region58: #{tpu_custom_call.1} parent=11 // pred_check_branch
          %569 = sbr.rel (%p567) target = $region60
        $region59: #{tpu_custom_call.1} parent=11 // pred_region
          _
        $region60: #{tpu_custom_call.1} parent=11 // pred_fallthru
          _
      $region12: #{tpu_custom_call.1} parent=5 // pred_fallthru
        _
      %p570 = scmp.lt.s32.totalorder %s35, 2
      // Predicated region
      $region61: #{tpu_custom_call.1} parent=5 // pred_check
        %p571 = pneg %p570
      $region62: #{tpu_custom_call.1} parent=5 // pred_check_branch
        %573 = sbr.rel (%p571) target = $region64
      $region63: #{tpu_custom_call.1} parent=5 // pred_region
        // Predicated region
        $region65: #{tpu_custom_call.1} parent=63 // pred_check
          %p574 = pneg %p55
        $region66: #{tpu_custom_call.1} parent=63 // pred_check_branch
          %576 = sbr.rel (%p574) target = $region68
        $region67: #{tpu_custom_call.1} parent=63 // pred_region
          %p577 = scmp.lt.s32.totalorder %s35, 1
          %s578 = scalar_select %p577, %s35, 1
          %s579 = smul.addr %s578, 2
          %s580 = smul.addr %s579, 8
          %s581 = scalar_lea.vmem %s0, %s580
        $region68: #{tpu_custom_call.1} parent=63 // pred_fallthru
          _
        // Predicated region
        $region69: #{tpu_custom_call.1} parent=63 // pred_check
          %p582 = pneg %p333
        $region70: #{tpu_custom_call.1} parent=63 // pred_check_branch
          %584 = sbr.rel (%p582) target = $region72
        $region71: #{tpu_custom_call.1} parent=63 // pred_region
          %p585 = scmp.lt.s32.totalorder %s35, 1
          %s586 = scalar_select %p585, %s35, 1
          %s587 = scalar_lea.vmem %s13, %s586
        $region72: #{tpu_custom_call.1} parent=63 // pred_fallthru
          _
        // Predicated region
        $region73: #{tpu_custom_call.1} parent=63 // pred_check
          %p588 = pneg %p359
        $region74: #{tpu_custom_call.1} parent=63 // pred_check_branch
          %590 = sbr.rel (%p588) target = $region76
        $region75: #{tpu_custom_call.1} parent=63 // pred_region
          %p591 = scmp.lt.s32.totalorder %s35, 1
          %s592 = scalar_select %p591, %s35, 1
          %s593 = smul.addr %s592, 2
          %s594 = smul.addr %s593, 8
          %s595 = scalar_lea.vmem %s14, %s594
        $region76: #{tpu_custom_call.1} parent=63 // pred_fallthru
          _
        // Predicated region
        $region77: #{tpu_custom_call.1} parent=63 // pred_check
          %p596 = pneg %p385
        $region78: #{tpu_custom_call.1} parent=63 // pred_check_branch
          %598 = sbr.rel (%p596) target = $region80
        $region79: #{tpu_custom_call.1} parent=63 // pred_region
          %p599 = scmp.lt.s32.totalorder %s35, 1
          %s600 = scalar_select %p599, %s35, 1
          %s601 = scalar_lea.vmem %s15, %s600
        $region80: #{tpu_custom_call.1} parent=63 // pred_fallthru
          _
        // Predicated region
        $region81: #{tpu_custom_call.1} parent=63 // pred_check
          %p602 = pneg %p411
        $region82: #{tpu_custom_call.1} parent=63 // pred_check_branch
          %604 = sbr.rel (%p602) target = $region84
        $region83: #{tpu_custom_call.1} parent=63 // pred_region
          %p605 = scmp.lt.s32.totalorder %s35, 1
          %s606 = scalar_select %p605, %s35, 1
          %s607 = scalar_lea.vmem %s16, %s606
        $region84: #{tpu_custom_call.1} parent=63 // pred_fallthru
          _
      $region64: #{tpu_custom_call.1} parent=5 // pred_fallthru
        _
      %p608 = scmp.le.s32.totalorder 1, %s35
      %p609 = scmp.lt.s32.totalorder %s35, 3
      %p610 = pnand %p608, %p609
      %p611 = pneg %p610
      // Predicated region
      $region85: #{tpu_custom_call.1} parent=5 // pred_check
        _
      $region86: #{tpu_custom_call.1} parent=5 // pred_check_branch
        %613 = sbr.rel (%p610) target = $region88
      $region87: #{tpu_custom_call.1} parent=5 // pred_region
        %s614 = ssub.s32 %s35, 1
        // Predicated region
        $region89: #{tpu_custom_call.1} parent=87 // pred_check
          %p615 = pneg %p103
        $region90: #{tpu_custom_call.1} parent=87 // pred_check_branch
          %617 = sbr.rel (%p615) target = $region92
        $region91: #{tpu_custom_call.1} parent=87 // pred_region
          %618 = dma.done [#allocation4], 16
        $region92: #{tpu_custom_call.1} parent=87 // pred_fallthru
          _
        // Predicated region
        $region93: #{tpu_custom_call.1} parent=87 // pred_check
          %p619 = pneg %p124
        $region94: #{tpu_custom_call.1} parent=87 // pred_check_branch
          %621 = sbr.rel (%p619) target = $region96
        $region95: #{tpu_custom_call.1} parent=87 // pred_region
          %622 = dma.done [#allocation7], 256
        $region96: #{tpu_custom_call.1} parent=87 // pred_fallthru
          _
        // Predicated region
        $region97: #{tpu_custom_call.1} parent=87 // pred_check
          %p623 = pneg %p145
        $region98: #{tpu_custom_call.1} parent=87 // pred_check_branch
          %625 = sbr.rel (%p623) target = $region100
        $region99: #{tpu_custom_call.1} parent=87 // pred_region
          %626 = dma.done [#allocation7], 16
        $region100: #{tpu_custom_call.1} parent=87 // pred_fallthru
          _
        // Predicated region
        $region101: #{tpu_custom_call.1} parent=87 // pred_check
          %p627 = pneg %p166
        $region102: #{tpu_custom_call.1} parent=87 // pred_check_branch
          %629 = sbr.rel (%p627) target = $region104
        $region103: #{tpu_custom_call.1} parent=87 // pred_region
          %630 = dma.done [#allocation10], 16
        $region104: #{tpu_custom_call.1} parent=87 // pred_fallthru
          _
        // Predicated region
        $region105: #{tpu_custom_call.1} parent=87 // pred_check
          %p631 = pneg %p187
        $region106: #{tpu_custom_call.1} parent=87 // pred_check_branch
          %633 = sbr.rel (%p631) target = $region108
        $region107: #{tpu_custom_call.1} parent=87 // pred_region
          %634 = dma.done [#allocation10], 16
        $region108: #{tpu_custom_call.1} parent=87 // pred_fallthru
          _
        // Predicated region
        $region109: #{tpu_custom_call.1} parent=87 // pred_check
          %p635 = pneg %p229
        $region110: #{tpu_custom_call.1} parent=87 // pred_check_branch
          %637 = sbr.rel (%p635) target = $region112
        $region111: #{tpu_custom_call.1} parent=87 // pred_region
          %638 = dma.done [#allocation13], 16
        $region112: #{tpu_custom_call.1} parent=87 // pred_fallthru
          _
        %p639 = scmp.lt.s32.totalorder %s40, 1
        %s640 = scalar_select %p639, %s40, 1
        %s641 = smul.addr %s640, 2
        %s642 = smul.addr %s641, 8
        %s643 = scalar_lea.vmem %s0, %s642
        %p644 = pneg %p61
        %p645 = pneg %p58
        %p646 = pneg %p82
        %p647 = pneg %p79
        %p648 = pneg %p103
        %p649 = pneg %p100
        %p650 = pneg %p124
        %p651 = pneg %p121
        %p652 = pneg %p145
        %p653 = pneg %p142
        %p654 = pneg %p166
        %p655 = pneg %p163
        %p656 = pneg %p187
        %p657 = pneg %p184
        %p658 = pneg %p208
        %p659 = pneg %p205
        %p660 = pneg %p229
        %p661 = pneg %p226
        %p662 = pneg %p250
        %p663 = pneg %p247
        %p664 = pneg %p271
        %p665 = pneg %p268
        %p666 = pneg %p292
        %p667 = pneg %p289
        %p668 = pneg %p313
        %p669 = pneg %p310
        %p670 = scmp.lt.s32.totalorder %s40, 1
        %s671 = scalar_select %p670, %s40, 1
        %s672 = scalar_lea.vmem %s13, %s671
        %p673 = pneg %p339
        %p674 = pneg %p336
        %p675 = scmp.lt.s32.totalorder %s40, 1
        %s676 = scalar_select %p675, %s40, 1
        %s677 = smul.addr %s676, 2
        %s678 = smul.addr %s677, 8
        %s679 = scalar_lea.vmem %s14, %s678
        %p680 = pneg %p365
        %p681 = pneg %p362
        %p682 = scmp.lt.s32.totalorder %s40, 1
        %s683 = scalar_select %p682, %s40, 1
        %s684 = scalar_lea.vmem %s15, %s683
        %p685 = pneg %p391
        %p686 = pneg %p388
        %p687 = scmp.lt.s32.totalorder %s40, 1
        %s688 = scalar_select %p687, %s40, 1
        %s689 = scalar_lea.vmem %s16, %s688
        %p690 = pneg %p417
        %p691 = pneg %p414
        %p692 = pneg %p443
        %p693 = pneg %p440
        %s694 = sand.u32 %s430, 1
        %s695 = scalar_lea.sflag [#allocation5], %s694
        %s696 = sand.u32 %s430, 1
        %s697 = smul.addr %s696, 16
        %s698 = scalar_lea.vmem [#allocation14], %s697
        %p699 = pneg %p469
        %p700 = pneg %p466
        %s701 = sand.u32 %s456, 1
        %s702 = scalar_lea.sflag [#allocation16], %s701
        %s703 = sand.u32 %s456, 1
        %s704 = smul.addr %s703, 16
        %s705 = scalar_lea.vmem [#allocation15], %s704
        %p706 = scmp.lt.s32.totalorder %s40, 1
        %s707 = scalar_select %p706, %s40, 1
        %s708 = smul.addr %s707, 2
        %s709 = smul.addr %s708, 8
        %s710 = scalar_lea.vmem %s0, %s709
        %p711 = scmp.lt.s32.totalorder %s40, 1
        %s712 = scalar_select %p711, %s40, 1
        %s713 = scalar_lea.vmem %s13, %s712
        %p714 = scmp.lt.s32.totalorder %s40, 1
        %s715 = scalar_select %p714, %s40, 1
        %s716 = smul.addr %s715, 2
        %s717 = smul.addr %s716, 8
        %s718 = scalar_lea.vmem %s14, %s717
        %p719 = scmp.lt.s32.totalorder %s40, 1
        %s720 = scalar_select %p719, %s40, 1
        %s721 = scalar_lea.vmem %s15, %s720
        %p722 = scmp.lt.s32.totalorder %s40, 1
        %s723 = scalar_select %p722, %s40, 1
        %s724 = scalar_lea.vmem %s16, %s723
        %v726 = vld [vmem:[%s710] sm:$0xff]
        %v727 = vld [vmem:[%s710 + $0x8] sm:$0xff]
        %v728 = vld [vmem:[%s713] sm:$0x1]
        %v729 = vld [vmem:[%s718] sm:$0xff]
        %v730 = vld [vmem:[%s718 + $0x8] sm:$0xff]
        %v731 = vld [vmem:[%s1] sm:$0xf]
        %v732 = vld [vmem:[%s1 + $0x4] sm:$0xf]
        %v733 = vld [vmem:[%s1 + $0x8] sm:$0xf]
        %v734 = vld [vmem:[%s1 + $0xc] sm:$0xf]
        %v735 = vpack.c.bf16 %v727, %v726
        %v736 = vld [vmem:[#allocation3] sm:$0x1]
        %v738 = vlaneseq
        %v739 = vshrl.u32 %v738, 7
        %v740 = vsub.s32 0, %v739
        %v741 = vrot.slane %v736, %v740
        %v747 = vunpack.c.l.b16 %v731
        %v748 = vunpack.c.l.b16 %v732
        %v749 = vunpack.c.l.b16 %v733
        %v750 = vunpack.c.l.b16 %v734
        %v751 = vpack.c.b16 %v748, %v747
        %v752 = vpack.c.b16 %v750, %v749
        %vm755 = vcmask 261120
        %v757 = vsel %vm755, %v735, 0
        %759 = vmatprep.subr.bf16.mxu0 0
        %760 = vmatpush1.bf16.msra.mxu0 %v751
        %761 = vmatprep.subr.bf16.mxu0 0
        %762 = vmatpush1.bf16.msra.mxu0 %v752
        %763 = vmatprep.subr.bf16.mxu0 0
        %764 = vmatpush1.bf16.msra.mxu0 0
        %765 = vmatprep.subr.bf16.mxu0 0
        %766 = vmatpush1.bf16.msra.mxu0 0
        %767 = vmatprep.subr.bf16.mxu0 0
        %768 = vmatpush1.bf16.msra.mxu0 0
        %769 = vmatprep.subr.bf16.mxu0 0
        %770 = vmatpush1.bf16.msra.mxu0 0
        %771 = vmatprep.subr.bf16.mxu0 0
        %772 = vmatpush1.bf16.msra.mxu0 0
        %773 = vmatprep.subr.bf16.mxu0 0
        %774 = vmatpush1.bf16.msra.mxu0 0
        %775 = vmatprep.subr.bf16.mxu0 0
        %776 = vmatpush1.bf16.msra.mxu0 0
        %777 = vmatprep.subr.bf16.mxu0 0
        %778 = vmatpush1.bf16.msra.mxu0 0
        %779 = vmatprep.subr.bf16.mxu0 0
        %780 = vmatpush1.bf16.msra.mxu0 0
        %781 = vmatprep.subr.bf16.mxu0 0
        %782 = vmatpush1.bf16.msra.mxu0 0
        %783 = vmatprep.subr.bf16.mxu0 0
        %784 = vmatpush1.bf16.msra.mxu0 0
        %785 = vmatprep.subr.bf16.mxu0 0
        %786 = vmatpush1.bf16.msra.mxu0 0
        %787 = vmatprep.subr.bf16.mxu0 0
        %788 = vmatpush1.bf16.msra.mxu0 0
        %789 = vmatprep.subr.bf16.mxu0 0
        %790 = vmatpush1.bf16.msra.mxu0 0
        %791 = vmatprep.mubr.bf16.mxu0 0
        %792 = vmatmul.mubr.bf16.gmra.mrb[0].mxu0 %v757
        %v793 = vpop.f32.mrb[0].mxu0
        %v794 = vadd.f32 %v741, %v793
        %v795 = vpop.f32.mrb[0].mxu0
        %v796 = vpop.f32.mrb[0].mxu0
        %v797 = vadd.f32 %v741, %v796
        %v798 = vpop.f32.mrb[0].mxu0
        %799 = vdwg.mxu0
        %v800 = vpack.c.bf16 %v797, %v794
        %802 = vrot.lane.b32.xlu0 %v800, 96
        %v803 = vpop.permute.xlu0 %802
        %vm804 = vcmask 130048
        %v806 = vsel %vm804, %v800, 0
        %v809 = vsel %vm804, %v803, 0
        %811 = vmatprep.subr.bf16.mxu0 0
        %812 = vmatpush1.bf16.xpose.msra.mxu0 %v809
        %813 = vmatprep.subr.bf16.mxu0 0
        %814 = vmatpush1.bf16.xpose.msra.mxu0 0
        %815 = vmatprep.subr.bf16.mxu0 0
        %816 = vmatpush1.bf16.xpose.msra.mxu0 0
        %817 = vmatprep.subr.bf16.mxu0 0
        %818 = vmatpush1.bf16.xpose.msra.mxu0 0
        %819 = vmatprep.subr.bf16.mxu0 0
        %820 = vmatpush1.bf16.xpose.msra.mxu0 0
        %821 = vmatprep.subr.bf16.mxu0 0
        %822 = vmatpush1.bf16.xpose.msra.mxu0 0
        %823 = vmatprep.subr.bf16.mxu0 0
        %824 = vmatpush1.bf16.xpose.msra.mxu0 0
        %825 = vmatprep.subr.bf16.mxu0 0
        %826 = vmatpush1.bf16.xpose.msra.mxu0 0
        %827 = vmatprep.subr.bf16.mxu0 0
        %828 = vmatpush1.bf16.xpose.msra.mxu0 0
        %829 = vmatprep.subr.bf16.mxu0 0
        %830 = vmatpush1.bf16.xpose.msra.mxu0 0
        %831 = vmatprep.subr.bf16.mxu0 0
        %832 = vmatpush1.bf16.xpose.msra.mxu0 0
        %833 = vmatprep.subr.bf16.mxu0 0
        %834 = vmatpush1.bf16.xpose.msra.mxu0 0
        %835 = vmatprep.subr.bf16.mxu0 0
        %836 = vmatpush1.bf16.xpose.msra.mxu0 0
        %837 = vmatprep.subr.bf16.mxu0 0
        %838 = vmatpush1.bf16.xpose.msra.mxu0 0
        %839 = vmatprep.subr.bf16.mxu0 0
        %840 = vmatpush1.bf16.xpose.msra.mxu0 0
        %841 = vmatprep.subr.bf16.mxu0 0
        %842 = vmatpush1.bf16.xpose.msra.mxu0 0
        %843 = vmatprep.mubr.bf16.mxu0 0
        %844 = vmatmul.mubr.bf16.gmra.mrb[0].mxu0 %v806
        %v845 = vpop.f32.mrb[0].mxu0
        %v846 = vadd.f32 0.0, %v845
        %v847 = vpop.f32.mrb[0].mxu0
        %v848 = vpop.f32.mrb[0].mxu0
        %v849 = vadd.f32 0.0, %v848
        %v850 = vpop.f32.mrb[0].mxu0
        %851 = vdwg.mxu0
        %vm852 = vcmp.gt.f32.partialorder %v728, 0.5
        %v853 = vsel %vm852, 1, 0
        %v854 = vlaneseq
        %v855 = vshrl.u32 %v854, 7
        %v856 = vsub.s32 0, %v855
        %v857 = vrot.slane %v853, %v856
        %vm858 = vcmp.eq.s32.totalorder %v857, 1
        %v859 = vsel %vm858, -1e+30, %v846
        %v860 = vsel %vm858, -1e+30, %v849
        %v861 = vsel %vm804, %v859, -inf
        %862 = vmax.xlane.f32.xlu0 %v861
        %v863 = vpop.xlane.xlu0 %862
        %v864 = vsel %vm804, %v860, -inf
        %865 = vmax.xlane.f32.xlu0 %v864
        %v866 = vpop.xlane.xlu0 %865
        %v867 = vsub.f32 %v859, %v863
        %v868 = vsub.f32 %v860, %v866
        %v869 = vmul.f32 %v867, 1.442695
        %v870 = vpow.pop %v869
        %v871 = vmul.f32 %v868, 1.442695
        %v872 = vpow.pop %v871
        %v873 = vsel %vm804, %v870, 0.0
        %874 = vadd.xlane.f32.xlu0 %v873
        %v875 = vpop.xlane.xlu0 %874
        %v876 = vsel %vm804, %v872, 0.0
        %877 = vadd.xlane.f32.xlu0 %v876
        %v878 = vpop.xlane.xlu0 %877
        %v879 = vrcp.pop %v875
        %v880 = vrcp.pop %v878
        %v881 = vmul.f32 %v870, %v879
        %v882 = vmul.f32 %v872, %v880
        %v883 = vpack.c.bf16 %v882, %v881
        %v885 = vunpack.c.l.b16 %v883
        %v886 = vunpack.c.h.b16 %v883
        %v887 = vpack.c.b16 %v885, %v885
        %v888 = vpack.c.b16 %v886, %v886
        %vm891 = vcmask 125952
        %892 = vst.msk [vmem:[%s705] sm:$0xf] %vm891, %v887
        %893 = vst.msk [vmem:[%s705 + $0x4] sm:$0xf] %vm891, %v888
        %894 = vrot.lane.b32.xlu0 %v800, 64
        %v895 = vpop.permute.xlu0 %894
        %v898 = vsel %vm804, %v883, 0
        %900 = vmatprep.subr.bf16.mxu0 0
        %901 = vmatpush1.bf16.msra.mxu0 %v895
        %902 = vmatprep.subr.bf16.mxu0 0
        %903 = vmatpush1.bf16.msra.mxu0 0
        %904 = vmatprep.subr.bf16.mxu0 0
        %905 = vmatpush1.bf16.msra.mxu0 0
        %906 = vmatprep.subr.bf16.mxu0 0
        %907 = vmatpush1.bf16.msra.mxu0 0
        %908 = vmatprep.subr.bf16.mxu0 0
        %909 = vmatpush1.bf16.msra.mxu0 0
        %910 = vmatprep.subr.bf16.mxu0 0
        %911 = vmatpush1.bf16.msra.mxu0 0
        %912 = vmatprep.subr.bf16.mxu0 0
        %913 = vmatpush1.bf16.msra.mxu0 0
        %914 = vmatprep.subr.bf16.mxu0 0
        %915 = vmatpush1.bf16.msra.mxu0 0
        %916 = vmatprep.subr.bf16.mxu0 0
        %917 = vmatpush1.bf16.msra.mxu0 0
        %918 = vmatprep.subr.bf16.mxu0 0
        %919 = vmatpush1.bf16.msra.mxu0 0
        %920 = vmatprep.subr.bf16.mxu0 0
        %921 = vmatpush1.bf16.msra.mxu0 0
        %922 = vmatprep.subr.bf16.mxu0 0
        %923 = vmatpush1.bf16.msra.mxu0 0
        %924 = vmatprep.subr.bf16.mxu0 0
        %925 = vmatpush1.bf16.msra.mxu0 0
        %926 = vmatprep.subr.bf16.mxu0 0
        %927 = vmatpush1.bf16.msra.mxu0 0
        %928 = vmatprep.subr.bf16.mxu0 0
        %929 = vmatpush1.bf16.msra.mxu0 0
        %930 = vmatprep.subr.bf16.mxu0 0
        %931 = vmatpush1.bf16.msra.mxu0 0
        %932 = vmatprep.mubr.bf16.mxu0 0
        %933 = vmatmul.mubr.bf16.gmra.mrb[0].mxu0 %v898
        %v934 = vpop.f32.mrb[0].mxu0
        %v935 = vadd.f32 0.0, %v934
        %v936 = vpop.f32.mrb[0].mxu0
        %v937 = vpop.f32.mrb[0].mxu0
        %v938 = vadd.f32 0.0, %v937
        %v939 = vpop.f32.mrb[0].mxu0
        %940 = vdwg.mxu0
        %941 = vrot.lane.b32.xlu0 %v800, 112
        %v942 = vpop.permute.xlu0 %941
        %943 = vrot.lane.b32.xlu0 %v800, 80
        %v944 = vpop.permute.xlu0 %943
        %v946 = vsel %vm804, %v942, 0
        %v949 = vsel %vm804, %v944, 0
        %951 = vmatprep.subr.bf16.mxu0 0
        %952 = vmatpush1.bf16.xpose.msra.mxu0 %v949
        %953 = vmatprep.subr.bf16.mxu0 0
        %954 = vmatpush1.bf16.xpose.msra.mxu0 0
        %955 = vmatprep.subr.bf16.mxu0 0
        %956 = vmatpush1.bf16.xpose.msra.mxu0 0
        %957 = vmatprep.subr.bf16.mxu0 0
        %958 = vmatpush1.bf16.xpose.msra.mxu0 0
        %959 = vmatprep.subr.bf16.mxu0 0
        %960 = vmatpush1.bf16.xpose.msra.mxu0 0
        %961 = vmatprep.subr.bf16.mxu0 0
        %962 = vmatpush1.bf16.xpose.msra.mxu0 0
        %963 = vmatprep.subr.bf16.mxu0 0
        %964 = vmatpush1.bf16.xpose.msra.mxu0 0
        %965 = vmatprep.subr.bf16.mxu0 0
        %966 = vmatpush1.bf16.xpose.msra.mxu0 0
        %967 = vmatprep.subr.bf16.mxu0 0
        %968 = vmatpush1.bf16.xpose.msra.mxu0 0
        %969 = vmatprep.subr.bf16.mxu0 0
        %970 = vmatpush1.bf16.xpose.msra.mxu0 0
        %971 = vmatprep.subr.bf16.mxu0 0
        %972 = vmatpush1.bf16.xpose.msra.mxu0 0
        %973 = vmatprep.subr.bf16.mxu0 0
        %974 = vmatpush1.bf16.xpose.msra.mxu0 0
        %975 = vmatprep.subr.bf16.mxu0 0
        %976 = vmatpush1.bf16.xpose.msra.mxu0 0
        %977 = vmatprep.subr.bf16.mxu0 0
        %978 = vmatpush1.bf16.xpose.msra.mxu0 0
        %979 = vmatprep.subr.bf16.mxu0 0
        %980 = vmatpush1.bf16.xpose.msra.mxu0 0
        %981 = vmatprep.subr.bf16.mxu0 0
        %982 = vmatpush1.bf16.xpose.msra.mxu0 0
        %983 = vmatprep.mubr.bf16.mxu0 0
        %984 = vmatmul.mubr.bf16.gmra.mrb[0].mxu0 %v946
        %v985 = vpop.f32.mrb[0].mxu0
        %v986 = vadd.f32 0.0, %v985
        %v987 = vpop.f32.mrb[0].mxu0
        %v988 = vpop.f32.mrb[0].mxu0
        %v989 = vadd.f32 0.0, %v988
        %v990 = vpop.f32.mrb[0].mxu0
        %991 = vdwg.mxu0
        %v992 = vsel %vm858, -1e+30, %v986
        %v993 = vsel %vm858, -1e+30, %v989
        %v994 = vsel %vm804, %v992, -inf
        %995 = vmax.xlane.f32.xlu0 %v994
        %v996 = vpop.xlane.xlu0 %995
        %v997 = vsel %vm804, %v993, -inf
        %998 = vmax.xlane.f32.xlu0 %v997
        %v999 = vpop.xlane.xlu0 %998
        %v1000 = vsub.f32 %v992, %v996
        %v1001 = vsub.f32 %v993, %v999
        %v1002 = vmul.f32 %v1000, 1.442695
        %v1003 = vpow.pop %v1002
        %v1004 = vmul.f32 %v1001, 1.442695
        %v1005 = vpow.pop %v1004
        %v1006 = vsel %vm804, %v1003, 0.0
        %1007 = vadd.xlane.f32.xlu0 %v1006
        %v1008 = vpop.xlane.xlu0 %1007
        %v1009 = vsel %vm804, %v1005, 0.0
        %1010 = vadd.xlane.f32.xlu0 %v1009
        %v1011 = vpop.xlane.xlu0 %1010
        %v1012 = vrcp.pop %v1008
        %v1013 = vrcp.pop %v1011
        %v1014 = vmul.f32 %v1003, %v1012
        %v1015 = vmul.f32 %v1005, %v1013
        %v1016 = vpack.c.bf16 %v1015, %v1014
        %v1018 = vunpack.c.l.b16 %v1016
        %v1019 = vunpack.c.h.b16 %v1016
        %v1020 = vpack.c.b16 %v1018, %v1018
        %v1021 = vpack.c.b16 %v1019, %v1019
        %s1024 = scalar_lea.vmem %s705, 8 [#allocation15]
        %1025 = vst.msk [vmem:[%s1024] sm:$0xf] %vm891, %v1020
        %1026 = vst.msk [vmem:[%s1024 + $0x4] sm:$0xf] %vm891, %v1021
        %1027 = vrot.lane.b32.xlu0 %v800, 48
        %v1028 = vpop.permute.xlu0 %1027
        %v1031 = vsel %vm804, %v1016, 0
        %1033 = vmatprep.subr.bf16.mxu0 0
        %1034 = vmatpush1.bf16.msra.mxu0 %v1028
        %1035 = vmatprep.subr.bf16.mxu0 0
        %1036 = vmatpush1.bf16.msra.mxu0 0
        %1037 = vmatprep.subr.bf16.mxu0 0
        %1038 = vmatpush1.bf16.msra.mxu0 0
        %1039 = vmatprep.subr.bf16.mxu0 0
        %1040 = vmatpush1.bf16.msra.mxu0 0
        %1041 = vmatprep.subr.bf16.mxu0 0
        %1042 = vmatpush1.bf16.msra.mxu0 0
        %1043 = vmatprep.subr.bf16.mxu0 0
        %1044 = vmatpush1.bf16.msra.mxu0 0
        %1045 = vmatprep.subr.bf16.mxu0 0
        %1046 = vmatpush1.bf16.msra.mxu0 0
        %1047 = vmatprep.subr.bf16.mxu0 0
        %1048 = vmatpush1.bf16.msra.mxu0 0
        %1049 = vmatprep.subr.bf16.mxu0 0
        %1050 = vmatpush1.bf16.msra.mxu0 0
        %1051 = vmatprep.subr.bf16.mxu0 0
        %1052 = vmatpush1.bf16.msra.mxu0 0
        %1053 = vmatprep.subr.bf16.mxu0 0
        %1054 = vmatpush1.bf16.msra.mxu0 0
        %1055 = vmatprep.subr.bf16.mxu0 0
        %1056 = vmatpush1.bf16.msra.mxu0 0
        %1057 = vmatprep.subr.bf16.mxu0 0
        %1058 = vmatpush1.bf16.msra.mxu0 0
        %1059 = vmatprep.subr.bf16.mxu0 0
        %1060 = vmatpush1.bf16.msra.mxu0 0
        %1061 = vmatprep.subr.bf16.mxu0 0
        %1062 = vmatpush1.bf16.msra.mxu0 0
        %1063 = vmatprep.subr.bf16.mxu0 0
        %1064 = vmatpush1.bf16.msra.mxu0 0
        %1065 = vmatprep.mubr.bf16.mxu0 0
        %1066 = vmatmul.mubr.bf16.gmra.mrb[0].mxu0 %v1031
        %v1067 = vpop.f32.mrb[0].mxu0
        %v1068 = vadd.f32 0.0, %v1067
        %v1069 = vpop.f32.mrb[0].mxu0
        %v1070 = vpop.f32.mrb[0].mxu0
        %v1071 = vadd.f32 0.0, %v1070
        %v1072 = vpop.f32.mrb[0].mxu0
        %1073 = vdwg.mxu0
        %1076 = vrot.lane.b32.xlu0 %v1068, 16
        %v1077 = vpop.permute.xlu0 %1076
        %1078 = vrot.lane.b32.xlu0 %v1071, 16
        %v1079 = vpop.permute.xlu0 %1078
        %v1082 = vsel %vm804, %v935, %v1077
        %v1083 = vsel %vm804, %v938, %v1079
        %v1084 = vld [vmem:[#allocation6] sm:$0xf]
        %v1085 = vld [vmem:[#allocation6 + $0x4] sm:$0xf]
        %v1086 = vld [vmem:[#allocation6 + $0x8] sm:$0xf]
        %v1087 = vld [vmem:[#allocation6 + $0xc] sm:$0xf]
        %v1088 = vpack.c.bf16 %v1083, %v1082
        %v1089 = vld [vmem:[#allocation8] sm:$0x1]
        %v1091 = vlaneseq
        %v1092 = vshrl.u32 %v1091, 7
        %v1093 = vsub.s32 0, %v1092
        %v1094 = vrot.slane %v1089, %v1093
        %v1100 = vunpack.c.l.b16 %v1084
        %v1101 = vunpack.c.l.b16 %v1085
        %v1102 = vunpack.c.l.b16 %v1086
        %v1103 = vunpack.c.l.b16 %v1087
        %v1104 = vpack.c.b16 %v1101, %v1100
        %v1105 = vpack.c.b16 %v1103, %v1102
        %v1109 = vsel %vm755, %v1088, 0
        %1111 = vmatprep.subr.bf16.mxu0 0
        %1112 = vmatpush1.bf16.msra.mxu0 %v1104
        %1113 = vmatprep.subr.bf16.mxu0 0
        %1114 = vmatpush1.bf16.msra.mxu0 %v1105
        %1115 = vmatprep.subr.bf16.mxu0 0
        %1116 = vmatpush1.bf16.msra.mxu0 0
        %1117 = vmatprep.subr.bf16.mxu0 0
        %1118 = vmatpush1.bf16.msra.mxu0 0
        %1119 = vmatprep.subr.bf16.mxu0 0
        %1120 = vmatpush1.bf16.msra.mxu0 0
        %1121 = vmatprep.subr.bf16.mxu0 0
        %1122 = vmatpush1.bf16.msra.mxu0 0
        %1123 = vmatprep.subr.bf16.mxu0 0
        %1124 = vmatpush1.bf16.msra.mxu0 0
        %1125 = vmatprep.subr.bf16.mxu0 0
        %1126 = vmatpush1.bf16.msra.mxu0 0
        %1127 = vmatprep.subr.bf16.mxu0 0
        %1128 = vmatpush1.bf16.msra.mxu0 0
        %1129 = vmatprep.subr.bf16.mxu0 0
        %1130 = vmatpush1.bf16.msra.mxu0 0
        %1131 = vmatprep.subr.bf16.mxu0 0
        %1132 = vmatpush1.bf16.msra.mxu0 0
        %1133 = vmatprep.subr.bf16.mxu0 0
        %1134 = vmatpush1.bf16.msra.mxu0 0
        %1135 = vmatprep.subr.bf16.mxu0 0
        %1136 = vmatpush1.bf16.msra.mxu0 0
        %1137 = vmatprep.subr.bf16.mxu0 0
        %1138 = vmatpush1.bf16.msra.mxu0 0
        %1139 = vmatprep.subr.bf16.mxu0 0
        %1140 = vmatpush1.bf16.msra.mxu0 0
        %1141 = vmatprep.subr.bf16.mxu0 0
        %1142 = vmatpush1.bf16.msra.mxu0 0
        %1143 = vmatprep.mubr.bf16.mxu0 0
        %1144 = vmatmul.mubr.bf16.gmra.mrb[0].mxu0 %v1109
        %v1145 = vpop.f32.mrb[0].mxu0
        %v1146 = vadd.f32 %v1094, %v1145
        %v1147 = vpop.f32.mrb[0].mxu0
        %v1148 = vpop.f32.mrb[0].mxu0
        %v1149 = vadd.f32 %v1094, %v1148
        %v1150 = vpop.f32.mrb[0].mxu0
        %1151 = vdwg.mxu0
        %v1152 = vadd.f32 %v1146, %v726
        %v1153 = vadd.f32 %v1149, %v727
        %v1154 = vsel %vm755, %v1152, 0.0
        %1155 = vadd.xlane.f32.xlu0 %v1154
        %v1156 = vpop.xlane.xlu0 %1155
        %v1157 = vsel %vm755, %v1153, 0.0
        %1158 = vadd.xlane.f32.xlu0 %v1157
        %v1159 = vpop.xlane.xlu0 %1158
        %v1160 = vmul.f32 %v1156, 0.03125
        %v1161 = vmul.f32 %v1159, 0.03125
        %v1162 = vsub.f32 %v1152, %v1160
        %v1163 = vsub.f32 %v1153, %v1161
        %v1164 = vmul.f32 %v1162, %v1162
        %v1165 = vmul.f32 %v1163, %v1163
        %v1166 = vsel %vm755, %v1164, 0.0
        %1167 = vadd.xlane.f32.xlu0 %v1166
        %v1168 = vpop.xlane.xlu0 %1167
        %v1169 = vsel %vm755, %v1165, 0.0
        %1170 = vadd.xlane.f32.xlu0 %v1169
        %v1171 = vpop.xlane.xlu0 %1170
        %v1172 = vmul.f32 %v1168, 0.03125
        %v1173 = vmul.f32 %v1171, 0.03125
        %v1174 = vadd.f32 %v1172, 1e-05
        %v1175 = vadd.f32 %v1173, 1e-05
        %v1176 = vrsqrt.pop %v1174
        %v1177 = vrsqrt.pop %v1175
        %v1178 = vmul.f32 %v1162, %v1176
        %v1179 = vmul.f32 %v1163, %v1177
        %v1180 = vld [vmem:[#allocation9] sm:$0x1]
        %v1182 = vlaneseq
        %v1183 = vshrl.u32 %v1182, 7
        %v1184 = vsub.s32 0, %v1183
        %v1185 = vrot.slane %v1180, %v1184
        %v1187 = vmul.f32 %v1178, %v1185
        %v1188 = vmul.f32 %v1179, %v1185
        %v1189 = vld [vmem:[#allocation11] sm:$0x1]
        %v1191 = vlaneseq
        %v1192 = vshrl.u32 %v1191, 7
        %v1193 = vsub.s32 0, %v1192
        %v1194 = vrot.slane %v1189, %v1193
        %v1196 = vadd.f32 %v1187, %v1194
        %v1197 = vadd.f32 %v1188, %v1194
        %vm1198 = vcmp.gt.f32.partialorder %v729, 0.5
        %vm1199 = vcmp.gt.f32.partialorder %v730, 0.5
        %v1200 = vsel %vm1198, 1, 0
        %v1201 = vsel %vm1199, 1, 0
        %1202 = vset.pattern.permute.xlu0 0
        %1203 = vperm.xlu0 %1202, %v1200
        %v1204 = vpop.permute.xlu0 %1203
        %1205 = vset.pattern.permute.xlu0 0
        %1206 = vperm.xlu0 %1205, %v1201
        %v1207 = vpop.permute.xlu0 %1206
        %vm1208 = vcmp.eq.s32.totalorder %v1204, 1
        %vm1209 = vcmp.eq.s32.totalorder %v1207, 1
        %v1210 = vsel %vm1208, 0.0, %v1196
        %v1211 = vsel %vm1209, 0.0, %v1197
        %vm1212 = vcmask 253952
        %1213 = vst.msk [vmem:[#allocation2] sm:$0x1] %vm1212, 0.0
        %1214 = vst.msk [vmem:[#allocation2 + $0x11] sm:$0x1] %vm1212, 0.0
        %1215 = vst.msk [vmem:[#allocation2 + $0x1] sm:$0xff] %vm755, %v1210
        %1216 = vst.msk [vmem:[#allocation2 + $0x9] sm:$0xff] %vm755, %v1211
        %v1217 = vld [vmem:[#allocation2] sm:$0xff]
        %v1218 = vld [vmem:[#allocation2 + $0x8] sm:$0xff]
        %v1219 = vld [vmem:[%s7] sm:$0xf]
        %v1220 = vld [vmem:[%s7 + $0x4] sm:$0xf]
        %v1221 = vld [vmem:[%s7 + $0x8] sm:$0xf]
        %v1222 = vld [vmem:[%s7 + $0xc] sm:$0xf]
        %v1223 = vpack.c.bf16 %v1218, %v1217
        %v1224 = vld [vmem:[#allocation2 + $0x1] sm:$0xff]
        %v1225 = vld [vmem:[#allocation2 + $0x9] sm:$0xff]
        %s1226 = scalar_lea.vmem %s7, 16
        %v1227 = vld [vmem:[%s1226] sm:$0xf]
        %v1228 = vld [vmem:[%s1226 + $0x4] sm:$0xf]
        %v1229 = vld [vmem:[%s1226 + $0x8] sm:$0xf]
        %v1230 = vld [vmem:[%s1226 + $0xc] sm:$0xf]
        %v1231 = vpack.c.bf16 %v1225, %v1224
        %v1236 = vunpack.c.l.b16 %v1227
        %v1237 = vunpack.c.l.b16 %v1228
        %v1238 = vunpack.c.l.b16 %v1229
        %v1239 = vunpack.c.l.b16 %v1230
        %v1240 = vpack.c.b16 %v1237, %v1236
        %v1241 = vpack.c.b16 %v1239, %v1238
        %v1245 = vsel %vm755, %v1231, 0
        %1247 = vmatprep.subr.bf16.mxu0 0
        %1248 = vmatpush1.bf16.msra.mxu0 %v1240
        %1249 = vmatprep.subr.bf16.mxu0 0
        %1250 = vmatpush1.bf16.msra.mxu0 %v1241
        %1251 = vmatprep.subr.bf16.mxu0 0
        %1252 = vmatpush1.bf16.msra.mxu0 0
        %1253 = vmatprep.subr.bf16.mxu0 0
        %1254 = vmatpush1.bf16.msra.mxu0 0
        %1255 = vmatprep.subr.bf16.mxu0 0
        %1256 = vmatpush1.bf16.msra.mxu0 0
        %1257 = vmatprep.subr.bf16.mxu0 0
        %1258 = vmatpush1.bf16.msra.mxu0 0
        %1259 = vmatprep.subr.bf16.mxu0 0
        %1260 = vmatpush1.bf16.msra.mxu0 0
        %1261 = vmatprep.subr.bf16.mxu0 0
        %1262 = vmatpush1.bf16.msra.mxu0 0
        %1263 = vmatprep.subr.bf16.mxu0 0
        %1264 = vmatpush1.bf16.msra.mxu0 0
        %1265 = vmatprep.subr.bf16.mxu0 0
        %1266 = vmatpush1.bf16.msra.mxu0 0
        %1267 = vmatprep.subr.bf16.mxu0 0
        %1268 = vmatpush1.bf16.msra.mxu0 0
        %1269 = vmatprep.subr.bf16.mxu0 0
        %1270 = vmatpush1.bf16.msra.mxu0 0
        %1271 = vmatprep.subr.bf16.mxu0 0
        %1272 = vmatpush1.bf16.msra.mxu0 0
        %1273 = vmatprep.subr.bf16.mxu0 0
        %1274 = vmatpush1.bf16.msra.mxu0 0
        %1275 = vmatprep.subr.bf16.mxu0 0
        %1276 = vmatpush1.bf16.msra.mxu0 0
        %1277 = vmatprep.subr.bf16.mxu0 0
        %1278 = vmatpush1.bf16.msra.mxu0 0
        %1279 = vmatprep.mubr.bf16.mxu0 0
        %1280 = vmatmul.mubr.bf16.gmra.mrb[0].mxu0 %v1245
        %v1281 = vpop.f32.mrb[0].mxu0
        %v1282 = vadd.f32 0.0, %v1281
        %v1283 = vpop.f32.mrb[0].mxu0
        %v1284 = vpop.f32.mrb[0].mxu0
        %v1285 = vadd.f32 0.0, %v1284
        %v1286 = vpop.f32.mrb[0].mxu0
        %1287 = vdwg.mxu0
        %v1292 = vunpack.c.l.b16 %v1219
        %v1293 = vunpack.c.l.b16 %v1220
        %v1294 = vunpack.c.l.b16 %v1221
        %v1295 = vunpack.c.l.b16 %v1222
        %v1296 = vpack.c.b16 %v1293, %v1292
        %v1297 = vpack.c.b16 %v1295, %v1294
        %v1301 = vsel %vm755, %v1223, 0
        %1303 = vmatprep.subr.bf16.mxu0 0
        %1304 = vmatpush1.bf16.msra.mxu0 %v1296
        %1305 = vmatprep.subr.bf16.mxu0 0
        %1306 = vmatpush1.bf16.msra.mxu0 %v1297
        %1307 = vmatprep.subr.bf16.mxu0 0
        %1308 = vmatpush1.bf16.msra.mxu0 0
        %1309 = vmatprep.subr.bf16.mxu0 0
        %1310 = vmatpush1.bf16.msra.mxu0 0
        %1311 = vmatprep.subr.bf16.mxu0 0
        %1312 = vmatpush1.bf16.msra.mxu0 0
        %1313 = vmatprep.subr.bf16.mxu0 0
        %1314 = vmatpush1.bf16.msra.mxu0 0
        %1315 = vmatprep.subr.bf16.mxu0 0
        %1316 = vmatpush1.bf16.msra.mxu0 0
        %1317 = vmatprep.subr.bf16.mxu0 0
        %1318 = vmatpush1.bf16.msra.mxu0 0
        %1319 = vmatprep.subr.bf16.mxu0 0
        %1320 = vmatpush1.bf16.msra.mxu0 0
        %1321 = vmatprep.subr.bf16.mxu0 0
        %1322 = vmatpush1.bf16.msra.mxu0 0
        %1323 = vmatprep.subr.bf16.mxu0 0
        %1324 = vmatpush1.bf16.msra.mxu0 0
        %1325 = vmatprep.subr.bf16.mxu0 0
        %1326 = vmatpush1.bf16.msra.mxu0 0
        %1327 = vmatprep.subr.bf16.mxu0 0
        %1328 = vmatpush1.bf16.msra.mxu0 0
        %1329 = vmatprep.subr.bf16.mxu0 0
        %1330 = vmatpush1.bf16.msra.mxu0 0
        %1331 = vmatprep.subr.bf16.mxu0 0
        %1332 = vmatpush1.bf16.msra.mxu0 0
        %1333 = vmatprep.subr.bf16.mxu0 0
        %1334 = vmatpush1.bf16.msra.mxu0 0
        %1335 = vmatprep.mubr.bf16.mxu0 0
        %1336 = vmatmul.mubr.bf16.gmra.mrb[0].mxu0 %v1301
        %v1337 = vpop.f32.mrb[0].mxu0
        %v1338 = vadd.f32 %v1282, %v1337
        %v1339 = vpop.f32.mrb[0].mxu0
        %v1340 = vpop.f32.mrb[0].mxu0
        %v1341 = vadd.f32 %v1285, %v1340
        %v1342 = vpop.f32.mrb[0].mxu0
        %1343 = vdwg.mxu0
        %v1344 = vld [vmem:[#allocation2 + $0x2] sm:$0xff]
        %v1345 = vld [vmem:[#allocation2 + $0xa] sm:$0xff]
        %s1346 = scalar_lea.vmem %s7, 32
        %v1347 = vld [vmem:[%s1346] sm:$0xf]
        %v1348 = vld [vmem:[%s1346 + $0x4] sm:$0xf]
        %v1349 = vld [vmem:[%s1346 + $0x8] sm:$0xf]
        %v1350 = vld [vmem:[%s1346 + $0xc] sm:$0xf]
        %v1351 = vpack.c.bf16 %v1345, %v1344
        %v1356 = vunpack.c.l.b16 %v1347
        %v1357 = vunpack.c.l.b16 %v1348
        %v1358 = vunpack.c.l.b16 %v1349
        %v1359 = vunpack.c.l.b16 %v1350
        %v1360 = vpack.c.b16 %v1357, %v1356
        %v1361 = vpack.c.b16 %v1359, %v1358
        %v1365 = vsel %vm755, %v1351, 0
        %1367 = vmatprep.subr.bf16.mxu0 0
        %1368 = vmatpush1.bf16.msra.mxu0 %v1360
        %1369 = vmatprep.subr.bf16.mxu0 0
        %1370 = vmatpush1.bf16.msra.mxu0 %v1361
        %1371 = vmatprep.subr.bf16.mxu0 0
        %1372 = vmatpush1.bf16.msra.mxu0 0
        %1373 = vmatprep.subr.bf16.mxu0 0
        %1374 = vmatpush1.bf16.msra.mxu0 0
        %1375 = vmatprep.subr.bf16.mxu0 0
        %1376 = vmatpush1.bf16.msra.mxu0 0
        %1377 = vmatprep.subr.bf16.mxu0 0
        %1378 = vmatpush1.bf16.msra.mxu0 0
        %1379 = vmatprep.subr.bf16.mxu0 0
        %1380 = vmatpush1.bf16.msra.mxu0 0
        %1381 = vmatprep.subr.bf16.mxu0 0
        %1382 = vmatpush1.bf16.msra.mxu0 0
        %1383 = vmatprep.subr.bf16.mxu0 0
        %1384 = vmatpush1.bf16.msra.mxu0 0
        %1385 = vmatprep.subr.bf16.mxu0 0
        %1386 = vmatpush1.bf16.msra.mxu0 0
        %1387 = vmatprep.subr.bf16.mxu0 0
        %1388 = vmatpush1.bf16.msra.mxu0 0
        %1389 = vmatprep.subr.bf16.mxu0 0
        %1390 = vmatpush1.bf16.msra.mxu0 0
        %1391 = vmatprep.subr.bf16.mxu0 0
        %1392 = vmatpush1.bf16.msra.mxu0 0
        %1393 = vmatprep.subr.bf16.mxu0 0
        %1394 = vmatpush1.bf16.msra.mxu0 0
        %1395 = vmatprep.subr.bf16.mxu0 0
        %1396 = vmatpush1.bf16.msra.mxu0 0
        %1397 = vmatprep.subr.bf16.mxu0 0
        %1398 = vmatpush1.bf16.msra.mxu0 0
        %1399 = vmatprep.mubr.bf16.mxu0 0
        %1400 = vmatmul.mubr.bf16.gmra.mrb[0].mxu0 %v1365
        %v1401 = vpop.f32.mrb[0].mxu0
        %v1402 = vadd.f32 0.0, %v1401
        %v1403 = vpop.f32.mrb[0].mxu0
        %v1404 = vpop.f32.mrb[0].mxu0
        %v1405 = vadd.f32 0.0, %v1404
        %v1406 = vpop.f32.mrb[0].mxu0
        %1407 = vdwg.mxu0
        %v1408 = vadd.f32 %v1338, %v1402
        %v1409 = vadd.f32 %v1341, %v1405
        %v1410 = vld [vmem:[#allocation12] sm:$0x1]
        %v1412 = vlaneseq
        %v1413 = vshrl.u32 %v1412, 7
        %v1414 = vsub.s32 0, %v1413
        %v1415 = vrot.slane %v1410, %v1414
        %v1417 = vadd.f32 %v1408, %v1415
        %v1418 = vadd.f32 %v1409, %v1415
        %v1419 = vmax.f32 %v1417, 0.0
        %v1420 = vmax.f32 %v1418, 0.0
        %v1421 = vld [vmem:[%s9] sm:$0xf]
        %v1422 = vld [vmem:[%s9 + $0x4] sm:$0xf]
        %v1423 = vld [vmem:[%s9 + $0x8] sm:$0xf]
        %v1424 = vld [vmem:[%s9 + $0xc] sm:$0xf]
        %v1425 = vld [vmem:[%s9 + $0x10] sm:$0xf]
        %v1426 = vld [vmem:[%s9 + $0x14] sm:$0xf]
        %v1427 = vld [vmem:[%s9 + $0x18] sm:$0xf]
        %v1428 = vld [vmem:[%s9 + $0x1c] sm:$0xf]
        %v1429 = vpack.c.bf16 %v1420, %v1419
        %v1430 = vld [vmem:[%s10] sm:$0x1]
        %v1432 = vlaneseq
        %v1433 = vshrl.u32 %v1432, 7
        %v1434 = vsub.s32 0, %v1433
        %v1435 = vrot.slane %v1430, %v1434
        %v1445 = vunpack.c.l.b16 %v1421
        %v1446 = vunpack.c.l.b16 %v1422
        %v1447 = vunpack.c.l.b16 %v1423
        %v1448 = vunpack.c.l.b16 %v1424
        %v1449 = vunpack.c.l.b16 %v1425
        %v1450 = vunpack.c.l.b16 %v1426
        %v1451 = vunpack.c.l.b16 %v1427
        %v1452 = vunpack.c.l.b16 %v1428
        %v1453 = vpack.c.b16 %v1446, %v1445
        %v1454 = vpack.c.b16 %v1448, %v1447
        %v1455 = vpack.c.b16 %v1450, %v1449
        %v1456 = vpack.c.b16 %v1452, %v1451
        %vm1461 = vcmask 523264
        %v1463 = vsel %vm1461, %v1429, 0
        %1465 = vmatprep.subr.bf16.mxu0 0
        %1466 = vmatpush1.bf16.msra.mxu0 %v1453
        %1467 = vmatprep.subr.bf16.mxu0 0
        %1468 = vmatpush1.bf16.msra.mxu0 %v1454
        %1469 = vmatprep.subr.bf16.mxu0 0
        %1470 = vmatpush1.bf16.msra.mxu0 %v1455
        %1471 = vmatprep.subr.bf16.mxu0 0
        %1472 = vmatpush1.bf16.msra.mxu0 %v1456
        %1473 = vmatprep.subr.bf16.mxu0 0
        %1474 = vmatpush1.bf16.msra.mxu0 0
        %1475 = vmatprep.subr.bf16.mxu0 0
        %1476 = vmatpush1.bf16.msra.mxu0 0
        %1477 = vmatprep.subr.bf16.mxu0 0
        %1478 = vmatpush1.bf16.msra.mxu0 0
        %1479 = vmatprep.subr.bf16.mxu0 0
        %1480 = vmatpush1.bf16.msra.mxu0 0
        %1481 = vmatprep.subr.bf16.mxu0 0
        %1482 = vmatpush1.bf16.msra.mxu0 0
        %1483 = vmatprep.subr.bf16.mxu0 0
        %1484 = vmatpush1.bf16.msra.mxu0 0
        %1485 = vmatprep.subr.bf16.mxu0 0
        %1486 = vmatpush1.bf16.msra.mxu0 0
        %1487 = vmatprep.subr.bf16.mxu0 0
        %1488 = vmatpush1.bf16.msra.mxu0 0
        %1489 = vmatprep.subr.bf16.mxu0 0
        %1490 = vmatpush1.bf16.msra.mxu0 0
        %1491 = vmatprep.subr.bf16.mxu0 0
        %1492 = vmatpush1.bf16.msra.mxu0 0
        %1493 = vmatprep.subr.bf16.mxu0 0
        %1494 = vmatpush1.bf16.msra.mxu0 0
        %1495 = vmatprep.subr.bf16.mxu0 0
        %1496 = vmatpush1.bf16.msra.mxu0 0
        %1497 = vmatprep.mubr.bf16.mxu0 0
        %1498 = vmatmul.mubr.bf16.gmra.mrb[0].mxu0 %v1463
        %v1499 = vpop.f32.mrb[0].mxu0
        %v1500 = vadd.f32 %v1435, %v1499
        %v1501 = vpop.f32.mrb[0].mxu0
        %v1502 = vpop.f32.mrb[0].mxu0
        %v1503 = vadd.f32 %v1435, %v1502
        %v1504 = vpop.f32.mrb[0].mxu0
        %1505 = vdwg.mxu0
        %v1506 = vadd.f32 %v1500, %v1210
        %v1507 = vadd.f32 %v1503, %v1211
        %v1508 = vsel %vm755, %v1506, 0.0
        %1509 = vadd.xlane.f32.xlu0 %v1508
        %v1510 = vpop.xlane.xlu0 %1509
        %v1511 = vsel %vm755, %v1507, 0.0
        %1512 = vadd.xlane.f32.xlu0 %v1511
        %v1513 = vpop.xlane.xlu0 %1512
        %v1514 = vmul.f32 %v1510, 0.03125
        %v1515 = vmul.f32 %v1513, 0.03125
        %v1516 = vsub.f32 %v1506, %v1514
        %v1517 = vsub.f32 %v1507, %v1515
        %v1518 = vmul.f32 %v1516, %v1516
        %v1519 = vmul.f32 %v1517, %v1517
        %v1520 = vsel %vm755, %v1518, 0.0
        %1521 = vadd.xlane.f32.xlu0 %v1520
        %v1522 = vpop.xlane.xlu0 %1521
        %v1523 = vsel %vm755, %v1519, 0.0
        %1524 = vadd.xlane.f32.xlu0 %v1523
        %v1525 = vpop.xlane.xlu0 %1524
        %v1526 = vmul.f32 %v1522, 0.03125
        %v1527 = vmul.f32 %v1525, 0.03125
        %v1528 = vadd.f32 %v1526, 1e-05
        %v1529 = vadd.f32 %v1527, 1e-05
        %v1530 = vrsqrt.pop %v1528
        %v1531 = vrsqrt.pop %v1529
        %v1532 = vmul.f32 %v1516, %v1530
        %v1533 = vmul.f32 %v1517, %v1531
        %v1534 = vld [vmem:[%s11] sm:$0x1]
        %v1536 = vlaneseq
        %v1537 = vshrl.u32 %v1536, 7
        %v1538 = vsub.s32 0, %v1537
        %v1539 = vrot.slane %v1534, %v1538
        %v1541 = vmul.f32 %v1532, %v1539
        %v1542 = vmul.f32 %v1533, %v1539
        %v1543 = vld [vmem:[%s12] sm:$0x1]
        %v1545 = vlaneseq
        %v1546 = vshrl.u32 %v1545, 7
        %v1547 = vsub.s32 0, %v1546
        %v1548 = vrot.slane %v1543, %v1547
        %v1550 = vadd.f32 %v1541, %v1548
        %v1551 = vadd.f32 %v1542, %v1548
        %v1552 = vld [vmem:[%s721] sm:$0x1]
        %v1554 = vlaneseq
        %v1555 = vshrl.u32 %v1554, 7
        %v1556 = vsub.s32 0, %v1555
        %v1557 = vrot.slane %v1552, %v1556
        %v1559 = vmul.f32 %v1557, %v1550
        %v1560 = vmul.f32 %v1557, %v1551
        %v1561 = vld [vmem:[%s724] sm:$0x1]
        %v1563 = vlaneseq
        %v1564 = vshrl.u32 %v1563, 7
        %v1565 = vsub.s32 0, %v1564
        %v1566 = vrot.slane %v1561, %v1565
        %v1568 = vadd.f32 %v1559, %v1566
        %v1569 = vadd.f32 %v1560, %v1566
        %v1570 = vsel %vm1208, 0.0, %v1568
        %v1571 = vsel %vm1209, 0.0, %v1569
        %1572 = vst.msk [vmem:[%s698] sm:$0xff] %vm755, %v1570
        %1573 = vst.msk [vmem:[%s698 + $0x8] sm:$0xff] %vm755, %v1571
        %s1574 = sand.u32 %s430, 1
        %s1575 = scalar_lea.sflag [#allocation5], %s1574
        %s1576 = sand.u32 %s430, 1
        %s1577 = smul.addr %s1576, 16
        %s1578 = scalar_lea.vmem [#allocation14], %s1577
        %s1579 = sand.u32 %s456, 1
        %s1580 = scalar_lea.sflag [#allocation16], %s1579
        %s1581 = sand.u32 %s456, 1
        %s1582 = smul.addr %s1581, 16
        %s1583 = scalar_lea.vmem [#allocation15], %s1582
        // Predicated region
        $region113: #{tpu_custom_call.1} parent=87 // pred_check
          %p1584 = pneg %p440
        $region114: #{tpu_custom_call.1} parent=87 // pred_check_branch
          %1586 = sbr.rel (%p1584) target = $region116
        $region115: #{tpu_custom_call.1} parent=87 // pred_region
          %s1588 = ssub.s32 256, 256
          %1589 = vsyncadd %s1575, %s1588
          %s1590 = smul.addr %s40, 2
          %s1591 = smul.addr %s1590, 128
          %s1592 = scalar_lea.hbm %s17, %s1591
          %s1593 = sshll.u32 %s1578, 4
          %s1594 = int_to_ptr.vmem [resolvable:$true] %s1593
          %1599 = dma.vmem_to_hbm [thread:$0]  %s1594, 256, %s1592, %s1575, 128, 128, 8
        $region116: #{tpu_custom_call.1} parent=87 // pred_fallthru
          _
        // Predicated region
        $region117: #{tpu_custom_call.1} parent=87 // pred_check
          %p1600 = pneg %p466
        $region118: #{tpu_custom_call.1} parent=87 // pred_check_branch
          %1602 = sbr.rel (%p1600) target = $region120
        $region119: #{tpu_custom_call.1} parent=87 // pred_region
          %s1604 = ssub.s32 256, 256
          %1605 = vsyncadd %s1580, %s1604
          %s1606 = smul.addr %s40, 4
          %s1607 = smul.addr %s1606, 64
          %s1608 = scalar_lea.hbm %s18, %s1607
          %s1609 = sshll.u32 %s1583, 4
          %s1610 = int_to_ptr.vmem [resolvable:$true] %s1609
          %1615 = dma.vmem_to_hbm [thread:$0]  %s1610, 256, %s1608, %s1580, 64, 64, 4
        $region120: #{tpu_custom_call.1} parent=87 // pred_fallthru
          _
      $region88: #{tpu_custom_call.1} parent=5 // pred_fallthru
        _
      %p1616 = scmp.le.s32.totalorder 2, %s35
      // Predicated region
      $region121: #{tpu_custom_call.1} parent=5 // pred_check
        %p1617 = pneg %p1616
      $region122: #{tpu_custom_call.1} parent=5 // pred_check_branch
        %1619 = sbr.rel (%p1617) target = $region124
      $region123: #{tpu_custom_call.1} parent=5 // pred_region
        %s1620 = ssub.s32 %s35, 2
        // Predicated region
        $region125: #{tpu_custom_call.1} parent=123 // pred_check
          %p1621 = pneg %p446
        $region126: #{tpu_custom_call.1} parent=123 // pred_check_branch
          %1623 = sbr.rel (%p1621) target = $region128
        $region127: #{tpu_custom_call.1} parent=123 // pred_region
          %s1624 = sand.u32 %s431, 1
          %s1625 = scalar_lea.sflag [#allocation5], %s1624
          %s1626 = sand.u32 %s431, 1
          %s1627 = smul.addr %s1626, 16
          %s1628 = scalar_lea.vmem [#allocation14], %s1627
          %1629 = dma.done %s1625, 256
        $region128: #{tpu_custom_call.1} parent=123 // pred_fallthru
          _
        // Predicated region
        $region129: #{tpu_custom_call.1} parent=123 // pred_check
          %p1630 = pneg %p472
        $region130: #{tpu_custom_call.1} parent=123 // pred_check_branch
          %1632 = sbr.rel (%p1630) target = $region132
        $region131: #{tpu_custom_call.1} parent=123 // pred_region
          %s1633 = sand.u32 %s457, 1
          %s1634 = scalar_lea.sflag [#allocation16], %s1633
          %s1635 = sand.u32 %s457, 1
          %s1636 = smul.addr %s1635, 16
          %s1637 = scalar_lea.vmem [#allocation15], %s1636
          %1638 = dma.done %s1634, 256
        $region132: #{tpu_custom_call.1} parent=123 // pred_fallthru
          _
      $region124: #{tpu_custom_call.1} parent=5 // pred_fallthru
        _
    $region6: #{tpu_custom_call.1} parent=1 // loop_footer
      %s39 = sadd.s32 1, %s35
    $region7: #{tpu_custom_call.1} parent=1 // loop_footer_branch
      %34 = sbr.rel target = $region3
    $region8: #{tpu_custom_call.1} parent=1 // loop_exit
      _
    %1639 = vsyncpa [#allocation4], 1
    %s1640 = scalar_lea.sflag [#allocation4], 1
    %1641 = vsyncpa %s1640, 1
    %1642 = vsyncpa [#allocation7], 1
    %1643 = vsyncpa [#allocation10], 1
    %1644 = vsyncpa [#allocation13], 1
    %1645 = vsyncpa [#allocation5], 1
    %s1646 = scalar_lea.sflag [#allocation5], 1
    %1647 = vsyncpa %s1646, 1
    %1648 = vsyncpa [#allocation16], 1
    %s1649 = scalar_lea.sflag [#allocation16], 1
    %1650 = vsyncpa %s1649, 1

</llo_original>
